<compile_context>
chip_gen: v7x
topology: tpu7x:2x2x1
jax: 0.10.0
libtpu: 0.0.40
codegen_flags: <defaults>
</compile_context>

<pallas_src>
import functools
import math
import random

import jax
import jax.numpy as jnp
from jax import lax
from jax.experimental import pallas as pl
from jax.experimental.pallas import tpu as pltpu

HUGE_INT = 1e31

# VMEM sizing: budget pipeline buffers for the smallest-VMEM generation
# (v7x: 64 MiB per TensorCore); raise the scoped limit above the 32 MiB default.
_VMEM_LIMIT_BYTES = 48 * 1024 * 1024
_VMEM_BUDGET_BYTES = 36 * 1024 * 1024


# ----------------------------------------------------------------------------
# Pallas kernel: one (batch block, layer) step per grid point
# ----------------------------------------------------------------------------
def graph_transformer_kernel(
    # batched inputs (tiled over batch axis, resident across the layer axis)
    q_ref, h0_ref, r_ref, e_ref, mask_ref,
    # constant head pooling / expansion matrices
    hp_ref, he_ref,
    # per-layer weights (streamed along the layer grid axis, leading L squeezed)
    wq_ref, bq_ref, wk_ref, bk_ref,
    wvh_ref, wvr_ref, wve_ref, bv_ref,
    w1_ref, b1_ref, w2_ref, b2_ref,
    g1_ref, beta1_ref, g2_ref, beta2_ref,
    # output + carried residual stream
    h_out_ref, h_carry,
    *, num_heads, eps=1e-5):
    BB, E = q_ref.shape
    N = r_ref.shape[1]
    H = num_heads
    l = pl.program_id(1)

    @pl.when(l == 0)
    def _init():                       # new batch block: residual stream <- emb_e1
        h_carry[...] = h0_ref[...]

    h = h_carry[...]                   # [BB, E] f32 residual stream
    wdt = wq_ref.dtype                 # matmul (MXU) dtype, bf16 by default

    emb_q = q_ref[...]                             # [BB, E]    (w_dtype)
    r_flat = r_ref[...].reshape(BB * N, E)         # [BB*N, E]  (w_dtype)
    e_flat = e_ref[...].reshape(BB * N, E)         # [BB*N, E]  (w_dtype)
    neg = (HUGE_INT * (1.0 - mask_ref[...]))[:, :, None]          # [BB, N, 1]

    def mxu(a, w):                     # MXU matmul, f32 accumulation
        return jnp.dot(a, w, preferred_element_type=jnp.float32)

    def layernorm(x, g, b):
        mu = jnp.mean(x, axis=-1, keepdims=True)
        var = jnp.mean((x - mu) ** 2, axis=-1, keepdims=True)
        return (x - mu) * lax.rsqrt(var + eps) * g + b            # rsqrt -> EUP

    # ---- fused all-head projections: one MXU matmul per weight block ----
    q_all = mxu(emb_q, wq_ref[...]) + bq_ref[...]                 # [BB, E]
    k_all = mxu(r_flat, wk_ref[...]) + bk_ref[...]                # [BB*N, E]
    v_r = mxu(r_flat, wvr_ref[...])                               # [BB*N, E]
    v_e = mxu(e_flat, wve_ref[...])                               # [BB*N, E]
    v_h = mxu(h.astype(wdt), wvh_ref[...])                        # [BB, E]
    # value = cat([h_, r, e], -1) @ Wv + bv  (the 3E weight is split host-side)
    v_pre = (v_r + v_e).reshape(BB, N, E) + v_h[:, None, :] + bv_ref[...]
    v = jnp.where(v_pre >= 0.0, v_pre, 0.01 * v_pre)              # LeakyReLU (f32)

    # ---- per-head scores pooled on the MXU (1/sqrt(hd) folded into hp) ----
    qk = q_all[:, None, :] * k_all.reshape(BB, N, E)              # [BB, N, E] f32
    s = mxu(qk.reshape(BB * N, E), hp_ref[...]).reshape(BB, N, H) # [BB, N, H]
    s = s - neg                                                   # neighbor mask
    m = jnp.max(s, axis=1, keepdims=True)
    p = jnp.exp(s - m)
    p = p * pl.reciprocal(jnp.sum(p, axis=1, keepdims=True), approx=True)

    # ---- expand head weights to embed lanes, weighted sum over neighbors ----
    p_full = mxu(p.reshape(BB * N, H), he_ref[...]).reshape(BB, N, E)
    x = jnp.sum(p_full * v, axis=1)                               # [BB, E]

    # ---- residual + LN + FFN + residual + LN (dropout is identity in eval) ----
    h = layernorm(h + x, g1_ref[...], beta1_ref[...])
    ff = jnp.maximum(mxu(h.astype(wdt), w1_ref[...]) + b1_ref[...], 0.0)
    ff = mxu(ff.astype(wdt), w2_ref[...]) + b2_ref[...]
    h = layernorm(h + ff, g2_ref[...], beta2_ref[...])

    h_carry[...] = h

    @pl.when(l == pl.num_programs(1) - 1)
    def _finalize():
        h_out_ref[...] = h


# ----------------------------------------------------------------------------
# Host-side weight repacking (per-head PyTorch layout -> fused per-layer blocks)
# ----------------------------------------------------------------------------
def pack_params(params, w_dtype=jnp.bfloat16):
    L, H, E, hd = params['wq'].shape

    def fuse_w(w):   # [L, H, E_in, hd] -> [L, E_in, H*hd]; head i -> cols i*hd:(i+1)*hd
        return jnp.transpose(w, (0, 2, 1, 3)).reshape(L, w.shape[2], H * hd).astype(w_dtype)

    def fuse_b(b):   # [L, H, 1, hd] -> [L, 1, H*hd]; biases / LN params stay f32
        return jnp.transpose(b, (0, 2, 1, 3)).reshape(L, 1, H * hd).astype(jnp.float32)

    wv = params['wv']                         # [L, H, 3E, hd]; value input = cat([h, r, e])
    head_ids = jnp.arange(E, dtype=jnp.int32) // hd
    head_sum = (head_ids[:, None] == jnp.arange(H, dtype=jnp.int32)[None, :]
                ).astype(jnp.float32)         # [E, H]: 1 where lane e belongs to head h
    f32 = lambda a: a.astype(jnp.float32)

    return dict(
        wq=fuse_w(params['wq']), bq=fuse_b(params['bq']),
        wk=fuse_w(params['wk']), bk=fuse_b(params['bk']),
        wvh=fuse_w(wv[:, :, :E, :]),            # value weight split: h | r | e
        wvr=fuse_w(wv[:, :, E:2 * E, :]),
        wve=fuse_w(wv[:, :, 2 * E:, :]),
        bv=fuse_b(params['bv']),
        w1=params['w1'].astype(w_dtype), b1=f32(params['b1']),
        w2=params['w2'].astype(w_dtype), b2=f32(params['b2']),
        g1=f32(params['g1']), beta1=f32(params['beta1']),
        g2=f32(params['g2']), beta2=f32(params['beta2']),
        head_pool=head_sum / math.sqrt(hd),     # fold 1/sqrt(hd) into the pooling
        head_expand=head_sum.T,                 # [H, E]
    )


# ----------------------------------------------------------------------------
# Block-size selection from a VMEM budget
# ----------------------------------------------------------------------------
def _estimate_vmem_bytes(block_b, N, E, HID, H, w_bytes):
    f32 = 4
    # double-buffered batched inputs (emb_q/r/e in the matmul dtype, h0/masks f32)
    batched = 2 * (block_b * E * w_bytes
                   + block_b * E * f32
                   + 2 * block_b * N * E * w_bytes
                   + block_b * N * f32)
    out = 2 * block_b * E * f32 + block_b * E * f32           # output + h-carry scratch
    # one layer of weights, double-buffered (streamed along the layer grid axis)
    weights = 2 * ((5 * E * E + 2 * E * HID) * w_bytes + (8 * E + HID) * f32)
    consts = 2 * 2 * E * H * f32                              # head pool / expand
    # rough allowance for in-kernel f32 intermediates (k/v/qk/p_full ~ [BB*N, E])
    work = 8 * block_b * N * E * f32 + 6 * block_b * E * f32
    return batched + out + weights + consts + work


def _pick_block_b(B, N, E, HID, H, w_bytes, budget=_VMEM_BUDGET_BYTES):
    cands = [c for c in range(B, 0, -1) if B % c == 0 and (c == B or c % 8 == 0)]
    fitting = [c for c in cands
               if _estimate_vmem_bytes(c, N, E, HID, H, w_bytes) <= budget]
    if not fitting:
        return cands[-1]
    # Prefer >=2 batch grid blocks (v7x megacore, r/e DMA overlap) only when the
    # smaller block still fills the MXU M dimension (block_b*N >= 256 rows).
    for c in fitting:
        if B // c >= 2 and c * N >= 256:
            return c
    return fitting[0]


# ----------------------------------------------------------------------------
# Wrapper
# ----------------------------------------------------------------------------
def graph_transformer_forward(emb_q, emb_e1, r, e, masks, params, *,
                              block_b=None, w_dtype=jnp.bfloat16,
                              vmem_limit_bytes=_VMEM_LIMIT_BYTES):
    B, E = emb_q.shape
    N = r.shape[1]
    L, H, _, hd = params['wq'].shape
    HID = params['w1'].shape[-1]
    p = pack_params(params, w_dtype)
    w_bytes = jnp.dtype(w_dtype).itemsize

    if block_b is None:
        block_b = _pick_block_b(B, N, E, HID, H, w_bytes)
    assert B % block_b == 0 and (block_b == B or block_b % 8 == 0)

    kernel = functools.partial(graph_transformer_kernel, num_heads=H)

    def bspec(*shape):   # batched tensors: tiled along b, resident across l
        return pl.BlockSpec(shape, lambda b, l: (b,) + (0,) * (len(shape) - 1))

    def cspec(*shape):   # grid-constant tensors (same block every step)
        return pl.BlockSpec(shape, lambda b, l: (0,) * len(shape))

    def wspec(*shape):   # per-layer weights: leading L axis indexed by l, squeezed
        return pl.BlockSpec((None,) + shape, lambda b, l: (l,) + (0,) * len(shape))

    grid_spec = pltpu.PrefetchScalarGridSpec(
        num_scalar_prefetch=0,
        grid=(B // block_b, L),          # batch (parallel) x layers (arbitrary, inner)
        in_specs=[
            bspec(block_b, E),           # emb_q   (w_dtype)
            bspec(block_b, E),           # h0 = emb_e1 (f32)
            bspec(block_b, N, E),        # r       (w_dtype)
            bspec(block_b, N, E),        # e       (w_dtype)
            bspec(block_b, N),           # masks   (f32)
            cspec(E, H),                 # head_pool
            cspec(H, E),                 # head_expand
            wspec(E, E), wspec(1, E),    # wq, bq
            wspec(E, E), wspec(1, E),    # wk, bk
            wspec(E, E), wspec(E, E), wspec(E, E), wspec(1, E),   # wvh, wvr, wve, bv
            wspec(E, HID), wspec(1, HID),                         # w1, b1
            wspec(HID, E), wspec(1, E),                           # w2, b2
            wspec(1, E), wspec(1, E), wspec(1, E), wspec(1, E),   # g1, beta1, g2, beta2
        ],
        out_specs=pl.BlockSpec((block_b, E), lambda b, l: (b, 0)),
        scratch_shapes=[pltpu.VMEM((block_b, E), jnp.float32)],   # residual-stream carry
    )

    h = pl.pallas_call(
        kernel,
        out_shape=jax.ShapeDtypeStruct((B, E), jnp.float32),
        grid_spec=grid_spec,
        compiler_params=pltpu.CompilerParams(
            dimension_semantics=("parallel", "arbitrary"),
            vmem_limit_bytes=int(vmem_limit_bytes)),
    )(emb_q.astype(w_dtype), emb_e1.astype(jnp.float32),
      r.astype(w_dtype), e.astype(w_dtype), masks.astype(jnp.float32),
      p['head_pool'], p['head_expand'],
      p['wq'], p['bq'], p['wk'], p['bk'],
      p['wvh'], p['wvr'], p['wve'], p['bv'],
      p['w1'], p['b1'], p['w2'], p['b2'],
      p['g1'], p['beta1'], p['g2'], p['beta2'])
    return h, emb_q


# ----------------------------------------------------------------------------
# Parameter construction (per-head, PyTorch-like layout) and pure-JAX reference
# ----------------------------------------------------------------------------
def make_params(key, L, H, E, HID):
    hd = E // H
    keys = jax.random.split(key, 10)

    def unif(k, shape, fan_in):
        bound = 1.0 / math.sqrt(fan_in)
        return jax.random.uniform(k, shape, jnp.float32, -bound, bound)

    return dict(
        wq=unif(keys[0], (L, H, E, hd), E),     bq=unif(keys[1], (L, H, 1, hd), E),
        wk=unif(keys[2], (L, H, E, hd), E),     bk=unif(keys[3], (L, H, 1, hd), E),
        wv=unif(keys[4], (L, H, 3 * E, hd), 3 * E),
        bv=unif(keys[5], (L, H, 1, hd), 3 * E),
        w1=unif(keys[6], (L, E, HID), E),       b1=unif(keys[7], (L, 1, HID), E),
        w2=unif(keys[8], (L, HID, E), HID),     b2=unif(keys[9], (L, 1, E), HID),
        g1=jnp.ones((L, 1, E), jnp.float32),    beta1=jnp.zeros((L, 1, E), jnp.float32),
        g2=jnp.ones((L, 1, E), jnp.float32),    beta2=jnp.zeros((L, 1, E), jnp.float32),
    )


def reference_forward(emb_q, emb_e1, r, e, masks, params, eps=1e-5):
    """Pure-JAX f32 mirror of the PyTorch forward (per-head loops) for a sanity check."""
    L, H, E, hd = params['wq'].shape
    B, N, _ = r.shape

    def ln(x, g, b):
        mu = jnp.mean(x, axis=-1, keepdims=True)
        var = jnp.mean((x - mu) ** 2, axis=-1, keepdims=True)
        return (x - mu) / jnp.sqrt(var + eps) * g + b

    with jax.default_matmul_precision('float32'):
        h = emb_e1
        neg = HUGE_INT * (1.0 - masks)
        for l in range(L):
            value = jnp.concatenate(
                [jnp.broadcast_to(h[:, None, :], (B, N, E)), r, e], axis=-1)
            heads = []
            for i in range(H):
                q_i = emb_q @ params['wq'][l, i] + params['bq'][l, i]
                k_i = jnp.einsum('bne,ed->bnd', r, params['wk'][l, i]) + params['bk'][l, i]
                v_i = jnp.einsum('bnf,fd->bnd', value, params['wv'][l, i]) + params['bv'][l, i]
                v_i = jnp.where(v_i >= 0.0, v_i, 0.01 * v_i)
                s = jnp.einsum('bd,bnd->bn', q_i, k_i) / math.sqrt(hd) - neg
                p = jax.nn.softmax(s, axis=-1)
                heads.append(jnp.einsum('bn,bnd->bd', p, v_i))
            x = jnp.concatenate(heads, axis=-1)
            h = ln(h + x, params['g1'][l], params['beta1'][l])
            ff = jnp.maximum(h @ params['w1'][l] + params['b1'][l], 0.0)
            ff = ff @ params['w2'][l] + params['b2'][l]
            h = ln(h + ff, params['g2'][l], params['beta2'][l])
    return h


# ----------------------------------------------------------------------------
# Demo / self-test
# ----------------------------------------------------------------------------
if __name__ == "__main__":
    B, N, E, HID, L, H = 16, 8, 128, 256, 2, 4
    num_entities, num_relations = 16, 12

    key = jax.random.PRNGKey(0)
    k_e, k_r, k_p = jax.random.split(key, 3)
    emb_e = (jax.random.normal(k_e, (num_entities, E), jnp.float32) * 0.1).at[0].set(0.0)
    emb_r = (jax.random.normal(k_r, (num_relations, E), jnp.float32) * 0.1).at[0].set(0.0)
    params = make_params(k_p, L, H, E, HID)

    # synthetic KG: graph[e1] = list of (relation, tail_entity)
    rng = random.Random(0)
    graph = {0: []}
    for ent in range(1, num_entities):
        deg = rng.randint(1, N)
        graph[ent] = [(rng.randint(1, num_relations - 1), rng.randint(1, num_entities - 1))
                      for _ in range(deg)]

    batch_e1 = [(i % (num_entities - 1)) + 1 for i in range(B)]
    batch_q = [(i % (num_relations - 2)) + 1 for i in range(B)]
    seen_entities = set(range(num_entities))

    # ---- host-side glue: test-mode entity remap + vectorize_neighbors ----
    # As in the PyTorch reference, neighbors/masks come from the ORIGINAL batch_e1
    # while the residual stream h uses the (test-mode augmented) entity embedding.
    batch_e1_aug = [e1 if e1 in seen_entities else 0 for e1 in batch_e1]
    neighbors, masks = [], []
    for e1, q in zip(batch_e1, batch_q):
        n_i = [[rr, e2] for rr, e2 in graph[e1] if rr != q and rr != q + 1]
        if len(n_i) > N:
            n_i = rng.sample(n_i, N)
            mask = [1.0] * N
        else:
            mask = [1.0] * len(n_i) + [0.0] * (N - len(n_i))
            n_i = n_i + [[0, 0]] * (N - len(n_i))
        neighbors.append(n_i)
        masks.append(mask)
    neighbors = jnp.asarray(neighbors, jnp.int32)    # [B, N, 2]
    masks = jnp.asarray(masks, jnp.float32)          # [B, N]

    emb_e1 = emb_e[jnp.asarray(batch_e1_aug, jnp.int32)]   # [B, E]
    emb_q = emb_r[jnp.asarray(batch_q, jnp.int32)]         # [B, E]
    r = emb_r[neighbors[:, :, 0]]                          # [B, N, E]
    e = emb_e[neighbors[:, :, 1]]                          # [B, N, E]

    h, q_out = graph_transformer_forward(emb_q, emb_e1, r, e, masks, params)
    jax.block_until_ready((h, q_out))
    assert h.shape == (B, E) and q_out.shape == (B, E)

    h_ref = reference_forward(emb_q, emb_e1, r, e, masks, params)
    # bf16 matmul operands (vs. the f32 reference) loosen the tolerance slightly.
    max_err = float(jnp.max(jnp.abs(h - h_ref)))
    assert max_err < 7.5e-2, f"kernel/reference mismatch: max abs err {max_err}"
    print("KERNEL_OK")
</pallas_src>

<mosaic_0001>
module attributes {stable_mosaic.version = 11 : i64} {
  func.func @graph_transformer_kernel(%arg0: i32, %arg1: i32, %arg2: memref<16x128xbf16, #tpu.memory_space<vmem>>, %arg3: memref<16x128xf32, #tpu.memory_space<vmem>>, %arg4: memref<16x8x128xbf16, #tpu.memory_space<vmem>>, %arg5: memref<16x8x128xbf16, #tpu.memory_space<vmem>>, %arg6: memref<16x8xf32, #tpu.memory_space<vmem>>, %arg7: memref<128x4xf32, #tpu.memory_space<vmem>>, %arg8: memref<4x128xf32, #tpu.memory_space<vmem>>, %arg9: memref<1x128x128xbf16, #tpu.memory_space<vmem>>, %arg10: memref<1x1x128xf32, #tpu.memory_space<vmem>>, %arg11: memref<1x128x128xbf16, #tpu.memory_space<vmem>>, %arg12: memref<1x1x128xf32, #tpu.memory_space<vmem>>, %arg13: memref<1x128x128xbf16, #tpu.memory_space<vmem>>, %arg14: memref<1x128x128xbf16, #tpu.memory_space<vmem>>, %arg15: memref<1x128x128xbf16, #tpu.memory_space<vmem>>, %arg16: memref<1x1x128xf32, #tpu.memory_space<vmem>>, %arg17: memref<1x128x256xbf16, #tpu.memory_space<vmem>>, %arg18: memref<1x1x256xf32, #tpu.memory_space<vmem>>, %arg19: memref<1x256x128xbf16, #tpu.memory_space<vmem>>, %arg20: memref<1x1x128xf32, #tpu.memory_space<vmem>>, %arg21: memref<1x1x128xf32, #tpu.memory_space<vmem>>, %arg22: memref<1x1x128xf32, #tpu.memory_space<vmem>>, %arg23: memref<1x1x128xf32, #tpu.memory_space<vmem>>, %arg24: memref<1x1x128xf32, #tpu.memory_space<vmem>>, %arg25: memref<16x128xf32, #tpu.memory_space<vmem>>, %arg26: memref<16x128xf32, #tpu.memory_space<vmem>>) attributes {dimension_semantics = [#tpu.dimension_semantics<parallel>, #tpu.dimension_semantics<arbitrary>], iteration_bounds = array<i64: 1, 2>, scalar_prefetch = 0 : i64, scratch_operands = 1 : i64, tpu.core_type = #tpu.core_type<tc>, window_params = [{transform_indices = @transform_0, window_bounds = array<i64: 16, 128>}, {transform_indices = @transform_1, window_bounds = array<i64: 16, 128>}, {transform_indices = @transform_2, window_bounds = array<i64: 16, 8, 128>}, {transform_indices = @transform_3, window_bounds = array<i64: 16, 8, 128>}, {transform_indices = @transform_4, window_bounds = array<i64: 16, 8>}, {pipeline_mode = #tpu.pipeline_mode<synchronous>, transform_indices = @transform_5, window_bounds = array<i64: 128, 4>}, {pipeline_mode = #tpu.pipeline_mode<synchronous>, transform_indices = @transform_6, window_bounds = array<i64: 4, 128>}, {transform_indices = @transform_7, window_bounds = array<i64: 1, 128, 128>}, {transform_indices = @transform_8, window_bounds = array<i64: 1, 1, 128>}, {transform_indices = @transform_9, window_bounds = array<i64: 1, 128, 128>}, {transform_indices = @transform_10, window_bounds = array<i64: 1, 1, 128>}, {transform_indices = @transform_11, window_bounds = array<i64: 1, 128, 128>}, {transform_indices = @transform_12, window_bounds = array<i64: 1, 128, 128>}, {transform_indices = @transform_13, window_bounds = array<i64: 1, 128, 128>}, {transform_indices = @transform_14, window_bounds = array<i64: 1, 1, 128>}, {transform_indices = @transform_15, window_bounds = array<i64: 1, 128, 256>}, {transform_indices = @transform_16, window_bounds = array<i64: 1, 1, 256>}, {transform_indices = @transform_17, window_bounds = array<i64: 1, 256, 128>}, {transform_indices = @transform_18, window_bounds = array<i64: 1, 1, 128>}, {transform_indices = @transform_19, window_bounds = array<i64: 1, 1, 128>}, {transform_indices = @transform_20, window_bounds = array<i64: 1, 1, 128>}, {transform_indices = @transform_21, window_bounds = array<i64: 1, 1, 128>}, {transform_indices = @transform_22, window_bounds = array<i64: 1, 1, 128>}, {transform_indices = @transform_23, window_bounds = array<i64: 16, 128>}]} {
    %c0_i32 = arith.constant 0 : i32
    %0 = arith.cmpi eq, %arg1, %c0_i32 : i32
    %1 = arith.extui %0 : i1 to i32
    %c0_i32_0 = arith.constant 0 : i32
    %2 = arith.cmpi ne, %1, %c0_i32_0 : i32
    scf.if %2 {
      %c0_93 = arith.constant 0 : index
      %c0_94 = arith.constant 0 : index
      %156 = vector.load %arg3[%c0_93, %c0_94] : memref<16x128xf32, #tpu.memory_space<vmem>>, vector<16x128xf32>
      %c0_95 = arith.constant 0 : index
      %c0_96 = arith.constant 0 : index
      %157 = vector.load %arg26[%c0_95, %c0_96] : memref<16x128xf32, #tpu.memory_space<vmem>>, vector<16x128xf32>
      tpu.vector_store %arg26[%c0_95, %c0_96], %156 {strides = array<i32>} : memref<16x128xf32, #tpu.memory_space<vmem>>, vector<16x128xf32>,
    } else {
    }
    %c0 = arith.constant 0 : index
    %c0_1 = arith.constant 0 : index
    %3 = vector.load %arg26[%c0, %c0_1] : memref<16x128xf32, #tpu.memory_space<vmem>>, vector<16x128xf32>
    %c0_2 = arith.constant 0 : index
    %c0_3 = arith.constant 0 : index
    %4 = vector.load %arg2[%c0_2, %c0_3] : memref<16x128xbf16, #tpu.memory_space<vmem>>, vector<16x128xbf16>
    %c0_4 = arith.constant 0 : index
    %c0_5 = arith.constant 0 : index
    %c0_6 = arith.constant 0 : index
    %5 = vector.load %arg4[%c0_4, %c0_5, %c0_6] : memref<16x8x128xbf16, #tpu.memory_space<vmem>>, vector<16x8x128xbf16>
    %6 = vector.shape_cast %5 : vector<16x8x128xbf16> to vector<128x128xbf16>
    %c0_7 = arith.constant 0 : index
    %c0_8 = arith.constant 0 : index
    %c0_9 = arith.constant 0 : index
    %7 = vector.load %arg5[%c0_7, %c0_8, %c0_9] : memref<16x8x128xbf16, #tpu.memory_space<vmem>>, vector<16x8x128xbf16>
    %8 = vector.shape_cast %7 : vector<16x8x128xbf16> to vector<128x128xbf16>
    %c0_10 = arith.constant 0 : index
    %c0_11 = arith.constant 0 : index
    %9 = vector.load %arg6[%c0_10, %c0_11] : memref<16x8xf32, #tpu.memory_space<vmem>>, vector<16x8xf32>
    %cst = arith.constant 1.000000e+00 : f32
    %10 = vector.broadcast %cst : f32 to vector<16x8xf32>
    %11 = arith.subf %10, %9 : vector<16x8xf32>
    %cst_12 = arith.constant 1.000000e+31 : f32
    %12 = vector.broadcast %cst_12 : f32 to vector<16x8xf32>
    %13 = arith.mulf %12, %11 : vector<16x8xf32>
    %14 = vector.shape_cast %13 : vector<16x8xf32> to vector<16x8x1xf32>
    %c0_13 = arith.constant 0 : index
    %c0_14 = arith.constant 0 : index
    %c0_15 = arith.constant 0 : index
    %15 = vector.load %arg9[%c0_13, %c0_14, %c0_15] : memref<1x128x128xbf16, #tpu.memory_space<vmem>>, vector<1x128x128xbf16>
    %16 = vector.shape_cast %15 : vector<1x128x128xbf16> to vector<128x128xbf16>
    %cst_16 = arith.constant dense<0.000000e+00> : vector<16x128xf32>
    %17 = tpu.matmul %4, %16, %cst_16 {dimension_numbers = #tpu.dot_dimension_numbers<[1], [0], [0], [1], [0, 0, 1, 1], [], []>} : vector<16x128xbf16>, vector<128x128xbf16>, vector<16x128xf32> -> vector<16x128xf32>
    %c0_17 = arith.constant 0 : index
    %c0_18 = arith.constant 0 : index
    %c0_19 = arith.constant 0 : index
    %18 = vector.load %arg10[%c0_17, %c0_18, %c0_19] : memref<1x1x128xf32, #tpu.memory_space<vmem>>, vector<1x1x128xf32>
    %19 = vector.shape_cast %18 : vector<1x1x128xf32> to vector<1x128xf32>
    %20 = vector.broadcast %19 : vector<1x128xf32> to vector<16x128xf32>
    %21 = arith.addf %17, %20 : vector<16x128xf32>
    %c0_20 = arith.constant 0 : index
    %c0_21 = arith.constant 0 : index
    %c0_22 = arith.constant 0 : index
    %22 = vector.load %arg11[%c0_20, %c0_21, %c0_22] : memref<1x128x128xbf16, #tpu.memory_space<vmem>>, vector<1x128x128xbf16>
    %23 = vector.shape_cast %22 : vector<1x128x128xbf16> to vector<128x128xbf16>
    %cst_23 = arith.constant dense<0.000000e+00> : vector<128x128xf32>
    %24 = tpu.matmul %6, %23, %cst_23 {dimension_numbers = #tpu.dot_dimension_numbers<[1], [0], [0], [1], [0, 0, 1, 1], [], []>} : vector<128x128xbf16>, vector<128x128xbf16>, vector<128x128xf32> -> vector<128x128xf32>
    %c0_24 = arith.constant 0 : index
    %c0_25 = arith.constant 0 : index
    %c0_26 = arith.constant 0 : index
    %25 = vector.load %arg12[%c0_24, %c0_25, %c0_26] : memref<1x1x128xf32, #tpu.memory_space<vmem>>, vector<1x1x128xf32>
    %26 = vector.shape_cast %25 : vector<1x1x128xf32> to vector<1x128xf32>
    %27 = vector.broadcast %26 : vector<1x128xf32> to vector<128x128xf32>
    %28 = arith.addf %24, %27 : vector<128x128xf32>
    %c0_27 = arith.constant 0 : index
    %c0_28 = arith.constant 0 : index
    %c0_29 = arith.constant 0 : index
    %29 = vector.load %arg14[%c0_27, %c0_28, %c0_29] : memref<1x128x128xbf16, #tpu.memory_space<vmem>>, vector<1x128x128xbf16>
    %30 = vector.shape_cast %29 : vector<1x128x128xbf16> to vector<128x128xbf16>
    %cst_30 = arith.constant dense<0.000000e+00> : vector<128x128xf32>
    %31 = tpu.matmul %6, %30, %cst_30 {dimension_numbers = #tpu.dot_dimension_numbers<[1], [0], [0], [1], [0, 0, 1, 1], [], []>} : vector<128x128xbf16>, vector<128x128xbf16>, vector<128x128xf32> -> vector<128x128xf32>
    %c0_31 = arith.constant 0 : index
    %c0_32 = arith.constant 0 : index
    %c0_33 = arith.constant 0 : index
    %32 = vector.load %arg15[%c0_31, %c0_32, %c0_33] : memref<1x128x128xbf16, #tpu.memory_space<vmem>>, vector<1x128x128xbf16>
    %33 = vector.shape_cast %32 : vector<1x128x128xbf16> to vector<128x128xbf16>
    %cst_34 = arith.constant dense<0.000000e+00> : vector<128x128xf32>
    %34 = tpu.matmul %8, %33, %cst_34 {dimension_numbers = #tpu.dot_dimension_numbers<[1], [0], [0], [1], [0, 0, 1, 1], [], []>} : vector<128x128xbf16>, vector<128x128xbf16>, vector<128x128xf32> -> vector<128x128xf32>
    %35 = arith.truncf %3 : vector<16x128xf32> to vector<16x128xbf16>
    %c0_35 = arith.constant 0 : index
    %c0_36 = arith.constant 0 : index
    %c0_37 = arith.constant 0 : index
    %36 = vector.load %arg13[%c0_35, %c0_36, %c0_37] : memref<1x128x128xbf16, #tpu.memory_space<vmem>>, vector<1x128x128xbf16>
    %37 = vector.shape_cast %36 : vector<1x128x128xbf16> to vector<128x128xbf16>
    %cst_38 = arith.constant dense<0.000000e+00> : vector<16x128xf32>
    %38 = tpu.matmul %35, %37, %cst_38 {dimension_numbers = #tpu.dot_dimension_numbers<[1], [0], [0], [1], [0, 0, 1, 1], [], []>} : vector<16x128xbf16>, vector<128x128xbf16>, vector<16x128xf32> -> vector<16x128xf32>
    %39 = arith.addf %31, %34 : vector<128x128xf32>
    %40 = vector.shape_cast %39 : vector<128x128xf32> to vector<16x8x128xf32>
    %41 = vector.shape_cast %38 : vector<16x128xf32> to vector<16x1x128xf32>
    %42 = vector.broadcast %41 : vector<16x1x128xf32> to vector<16x8x128xf32>
    %43 = arith.addf %40, %42 : vector<16x8x128xf32>
    %c0_39 = arith.constant 0 : index
    %c0_40 = arith.constant 0 : index
    %c0_41 = arith.constant 0 : index
    %44 = vector.load %arg16[%c0_39, %c0_40, %c0_41] : memref<1x1x128xf32, #tpu.memory_space<vmem>>, vector<1x1x128xf32>
    %45 = vector.shape_cast %44 : vector<1x1x128xf32> to vector<1x128xf32>
    %46 = vector.shape_cast %45 : vector<1x128xf32> to vector<1x1x128xf32>
    %47 = vector.broadcast %46 : vector<1x1x128xf32> to vector<16x8x128xf32>
    %48 = arith.addf %43, %47 : vector<16x8x128xf32>
    %cst_42 = arith.constant 0.000000e+00 : f32
    %49 = vector.broadcast %cst_42 : f32 to vector<16x8x128xf32>
    %50 = arith.cmpf oge, %48, %49 : vector<16x8x128xf32>
    %cst_43 = arith.constant 0.00999999977 : f32
    %51 = vector.broadcast %cst_43 : f32 to vector<16x8x128xf32>
    %52 = arith.mulf %51, %48 : vector<16x8x128xf32>
    %53 = arith.select %50, %48, %52 : vector<16x8x128xi1>, vector<16x8x128xf32>
    %54 = vector.shape_cast %21 : vector<16x128xf32> to vector<16x1x128xf32>
    %55 = vector.shape_cast %28 : vector<128x128xf32> to vector<16x8x128xf32>
    %56 = vector.broadcast %54 : vector<16x1x128xf32> to vector<16x8x128xf32>
    %57 = arith.mulf %56, %55 : vector<16x8x128xf32>
    %58 = vector.shape_cast %57 : vector<16x8x128xf32> to vector<128x128xf32>
    %c0_44 = arith.constant 0 : index
    %c0_45 = arith.constant 0 : index
    %59 = vector.load %arg7[%c0_44, %c0_45] : memref<128x4xf32, #tpu.memory_space<vmem>>, vector<128x4xf32>
    %cst_46 = arith.constant dense<0.000000e+00> : vector<128x4xf32>
    %60 = tpu.matmul %58, %59, %cst_46 {dimension_numbers = #tpu.dot_dimension_numbers<[1], [0], [0], [1], [0, 0, 1, 1], [], []>} : vector<128x128xf32>, vector<128x4xf32>, vector<128x4xf32> -> vector<128x4xf32>
    %61 = vector.shape_cast %60 : vector<128x4xf32> to vector<16x8x4xf32>
    %62 = vector.broadcast %14 : vector<16x8x1xf32> to vector<16x8x4xf32>
    %63 = arith.subf %61, %62 : vector<16x8x4xf32>
    %cst_47 = arith.constant dense<0xFF800000> : vector<16x4xf32>
    %64 = vector.multi_reduction <maximumf>, %63, %cst_47 [1] : vector<16x8x4xf32> to vector<16x4xf32>
    %65 = vector.shape_cast %64 : vector<16x4xf32> to vector<16x1x4xf32>
    %66 = vector.broadcast %65 : vector<16x1x4xf32> to vector<16x8x4xf32>
    %67 = arith.subf %63, %66 : vector<16x8x4xf32>
    %68 = math.exp %67 : vector<16x8x4xf32>
    %cst_48 = arith.constant dense<0.000000e+00> : vector<16x4xf32>
    %69 = vector.multi_reduction <add>, %68, %cst_48 [1] : vector<16x8x4xf32> to vector<16x4xf32>
    %70 = vector.shape_cast %69 : vector<16x4xf32> to vector<16x1x4xf32>
    %71 = tpu.reciprocal %70 {approx = true} : vector<16x1x4xf32> -> vector<16x1x4xf32>
    %72 = vector.broadcast %71 : vector<16x1x4xf32> to vector<16x8x4xf32>
    %73 = arith.mulf %68, %72 : vector<16x8x4xf32>
    %74 = vector.shape_cast %73 : vector<16x8x4xf32> to vector<128x4xf32>
    %c0_49 = arith.constant 0 : index
    %c0_50 = arith.constant 0 : index
    %75 = vector.load %arg8[%c0_49, %c0_50] : memref<4x128xf32, #tpu.memory_space<vmem>>, vector<4x128xf32>
    %cst_51 = arith.constant dense<0.000000e+00> : vector<128x128xf32>
    %76 = tpu.matmul %74, %75, %cst_51 {dimension_numbers = #tpu.dot_dimension_numbers<[1], [0], [0], [1], [0, 0, 1, 1], [], []>} : vector<128x4xf32>, vector<4x128xf32>, vector<128x128xf32> -> vector<128x128xf32>
    %77 = vector.shape_cast %76 : vector<128x128xf32> to vector<16x8x128xf32>
    %78 = arith.mulf %77, %53 : vector<16x8x128xf32>
    %cst_52 = arith.constant dense<0.000000e+00> : vector<16x128xf32>
    %79 = vector.multi_reduction <add>, %78, %cst_52 [1] : vector<16x8x128xf32> to vector<16x128xf32>
    %80 = arith.addf %3, %79 : vector<16x128xf32>
    %c0_53 = arith.constant 0 : index
    %c0_54 = arith.constant 0 : index
    %c0_55 = arith.constant 0 : index
    %81 = vector.load %arg21[%c0_53, %c0_54, %c0_55] : memref<1x1x128xf32, #tpu.memory_space<vmem>>, vector<1x1x128xf32>
    %82 = vector.shape_cast %81 : vector<1x1x128xf32> to vector<1x128xf32>
    %c0_56 = arith.constant 0 : index
    %c0_57 = arith.constant 0 : index
    %c0_58 = arith.constant 0 : index
    %83 = vector.load %arg22[%c0_56, %c0_57, %c0_58] : memref<1x1x128xf32, #tpu.memory_space<vmem>>, vector<1x1x128xf32>
    %84 = vector.shape_cast %83 : vector<1x1x128xf32> to vector<1x128xf32>
    %cst_59 = arith.constant dense<0.000000e+00> : vector<16xf32>
    %85 = vector.multi_reduction <add>, %80, %cst_59 [1] : vector<16x128xf32> to vector<16xf32>
    %86 = vector.shape_cast %85 : vector<16xf32> to vector<16x1xf32>
    %cst_60 = arith.constant 1.280000e+02 : f32
    %87 = vector.broadcast %cst_60 : f32 to vector<16x1xf32>
    %88 = arith.divf %86, %87 : vector<16x1xf32>
    %89 = vector.broadcast %88 : vector<16x1xf32> to vector<16x128xf32>
    %90 = arith.subf %80, %89 : vector<16x128xf32>
    %91 = arith.mulf %90, %90 : vector<16x128xf32>
    %cst_61 = arith.constant dense<0.000000e+00> : vector<16xf32>
    %92 = vector.multi_reduction <add>, %91, %cst_61 [1] : vector<16x128xf32> to vector<16xf32>
    %93 = vector.shape_cast %92 : vector<16xf32> to vector<16x1xf32>
    %cst_62 = arith.constant 1.280000e+02 : f32
    %94 = vector.broadcast %cst_62 : f32 to vector<16x1xf32>
    %95 = arith.divf %93, %94 : vector<16x1xf32>
    %96 = vector.broadcast %88 : vector<16x1xf32> to vector<16x128xf32>
    %97 = arith.subf %80, %96 : vector<16x128xf32>
    %cst_63 = arith.constant 9.99999974E-6 : f32
    %98 = vector.broadcast %cst_63 : f32 to vector<16x1xf32>
    %99 = arith.addf %95, %98 : vector<16x1xf32>
    %100 = math.rsqrt %99 : vector<16x1xf32>
    %101 = vector.broadcast %100 : vector<16x1xf32> to vector<16x128xf32>
    %102 = arith.mulf %97, %101 : vector<16x128xf32>
    %103 = vector.broadcast %82 : vector<1x128xf32> to vector<16x128xf32>
    %104 = arith.mulf %102, %103 : vector<16x128xf32>
    %105 = vector.broadcast %84 : vector<1x128xf32> to vector<16x128xf32>
    %106 = arith.addf %104, %105 : vector<16x128xf32>
    %107 = arith.truncf %106 : vector<16x128xf32> to vector<16x128xbf16>
    %c0_64 = arith.constant 0 : index
    %c0_65 = arith.constant 0 : index
    %c0_66 = arith.constant 0 : index
    %108 = vector.load %arg17[%c0_64, %c0_65, %c0_66] : memref<1x128x256xbf16, #tpu.memory_space<vmem>>, vector<1x128x256xbf16>
    %109 = vector.shape_cast %108 : vector<1x128x256xbf16> to vector<128x256xbf16>
    %cst_67 = arith.constant dense<0.000000e+00> : vector<16x256xf32>
    %110 = tpu.matmul %107, %109, %cst_67 {dimension_numbers = #tpu.dot_dimension_numbers<[1], [0], [0], [1], [0, 0, 1, 1], [], []>} : vector<16x128xbf16>, vector<128x256xbf16>, vector<16x256xf32> -> vector<16x256xf32>
    %c0_68 = arith.constant 0 : index
    %c0_69 = arith.constant 0 : index
    %c0_70 = arith.constant 0 : index
    %111 = vector.load %arg18[%c0_68, %c0_69, %c0_70] : memref<1x1x256xf32, #tpu.memory_space<vmem>>, vector<1x1x256xf32>
    %112 = vector.shape_cast %111 : vector<1x1x256xf32> to vector<1x256xf32>
    %113 = vector.broadcast %112 : vector<1x256xf32> to vector<16x256xf32>
    %114 = arith.addf %110, %113 : vector<16x256xf32>
    %cst_71 = arith.constant 0.000000e+00 : f32
    %115 = vector.broadcast %cst_71 : f32 to vector<16x256xf32>
    %116 = arith.maximumf %114, %115 : vector<16x256xf32>
    %117 = arith.truncf %116 : vector<16x256xf32> to vector<16x256xbf16>
    %c0_72 = arith.constant 0 : index
    %c0_73 = arith.constant 0 : index
    %c0_74 = arith.constant 0 : index
    %118 = vector.load %arg19[%c0_72, %c0_73, %c0_74] : memref<1x256x128xbf16, #tpu.memory_space<vmem>>, vector<1x256x128xbf16>
    %119 = vector.shape_cast %118 : vector<1x256x128xbf16> to vector<256x128xbf16>
    %cst_75 = arith.constant dense<0.000000e+00> : vector<16x128xf32>
    %120 = tpu.matmul %117, %119, %cst_75 {dimension_numbers = #tpu.dot_dimension_numbers<[1], [0], [0], [1], [0, 0, 1, 1], [], []>} : vector<16x256xbf16>, vector<256x128xbf16>, vector<16x128xf32> -> vector<16x128xf32>
    %c0_76 = arith.constant 0 : index
    %c0_77 = arith.constant 0 : index
    %c0_78 = arith.constant 0 : index
    %121 = vector.load %arg20[%c0_76, %c0_77, %c0_78] : memref<1x1x128xf32, #tpu.memory_space<vmem>>, vector<1x1x128xf32>
    %122 = vector.shape_cast %121 : vector<1x1x128xf32> to vector<1x128xf32>
    %123 = vector.broadcast %122 : vector<1x128xf32> to vector<16x128xf32>
    %124 = arith.addf %120, %123 : vector<16x128xf32>
    %125 = arith.addf %106, %124 : vector<16x128xf32>
    %c0_79 = arith.constant 0 : index
    %c0_80 = arith.constant 0 : index
    %c0_81 = arith.constant 0 : index
    %126 = vector.load %arg23[%c0_79, %c0_80, %c0_81] : memref<1x1x128xf32, #tpu.memory_space<vmem>>, vector<1x1x128xf32>
    %127 = vector.shape_cast %126 : vector<1x1x128xf32> to vector<1x128xf32>
    %c0_82 = arith.constant 0 : index
    %c0_83 = arith.constant 0 : index
    %c0_84 = arith.constant 0 : index
    %128 = vector.load %arg24[%c0_82, %c0_83, %c0_84] : memref<1x1x128xf32, #tpu.memory_space<vmem>>, vector<1x1x128xf32>
    %129 = vector.shape_cast %128 : vector<1x1x128xf32> to vector<1x128xf32>
    %cst_85 = arith.constant dense<0.000000e+00> : vector<16xf32>
    %130 = vector.multi_reduction <add>, %125, %cst_85 [1] : vector<16x128xf32> to vector<16xf32>
    %131 = vector.shape_cast %130 : vector<16xf32> to vector<16x1xf32>
    %cst_86 = arith.constant 1.280000e+02 : f32
    %132 = vector.broadcast %cst_86 : f32 to vector<16x1xf32>
    %133 = arith.divf %131, %132 : vector<16x1xf32>
    %134 = vector.broadcast %133 : vector<16x1xf32> to vector<16x128xf32>
    %135 = arith.subf %125, %134 : vector<16x128xf32>
    %136 = arith.mulf %135, %135 : vector<16x128xf32>
    %cst_87 = arith.constant dense<0.000000e+00> : vector<16xf32>
    %137 = vector.multi_reduction <add>, %136, %cst_87 [1] : vector<16x128xf32> to vector<16xf32>
    %138 = vector.shape_cast %137 : vector<16xf32> to vector<16x1xf32>
    %cst_88 = arith.constant 1.280000e+02 : f32
    %139 = vector.broadcast %cst_88 : f32 to vector<16x1xf32>
    %140 = arith.divf %138, %139 : vector<16x1xf32>
    %141 = vector.broadcast %133 : vector<16x1xf32> to vector<16x128xf32>
    %142 = arith.subf %125, %141 : vector<16x128xf32>
    %cst_89 = arith.constant 9.99999974E-6 : f32
    %143 = vector.broadcast %cst_89 : f32 to vector<16x1xf32>
    %144 = arith.addf %140, %143 : vector<16x1xf32>
    %145 = math.rsqrt %144 : vector<16x1xf32>
    %146 = vector.broadcast %145 : vector<16x1xf32> to vector<16x128xf32>
    %147 = arith.mulf %142, %146 : vector<16x128xf32>
    %148 = vector.broadcast %127 : vector<1x128xf32> to vector<16x128xf32>
    %149 = arith.mulf %147, %148 : vector<16x128xf32>
    %150 = vector.broadcast %129 : vector<1x128xf32> to vector<16x128xf32>
    %151 = arith.addf %149, %150 : vector<16x128xf32>
    %c0_90 = arith.constant 0 : index
    %c0_91 = arith.constant 0 : index
    %152 = vector.load %arg26[%c0_90, %c0_91] : memref<16x128xf32, #tpu.memory_space<vmem>>, vector<16x128xf32>
    tpu.vector_store %arg26[%c0_90, %c0_91], %151 {strides = array<i32>} : memref<16x128xf32, #tpu.memory_space<vmem>>, vector<16x128xf32>,
    %c1_i32 = arith.constant 1 : i32
    %153 = arith.cmpi eq, %arg1, %c1_i32 : i32
    %154 = arith.extui %153 : i1 to i32
    %c0_i32_92 = arith.constant 0 : i32
    %155 = arith.cmpi ne, %154, %c0_i32_92 : i32
    scf.if %155 {
      %c0_93 = arith.constant 0 : index
      %c0_94 = arith.constant 0 : index
      %156 = vector.load %arg25[%c0_93, %c0_94] : memref<16x128xf32, #tpu.memory_space<vmem>>, vector<16x128xf32>
      tpu.vector_store %arg25[%c0_93, %c0_94], %151 {strides = array<i32>} : memref<16x128xf32, #tpu.memory_space<vmem>>, vector<16x128xf32>,
    } else {
    }
    return
  }
  func.func @transform_0(%arg0: i32, %arg1: i32) -> (i32, i32) {
    %c0_i32 = arith.constant 0 : i32
    %c0_i32_0 = arith.constant 0 : i32
    return %arg0, %c0_i32 : i32, i32
  }
  func.func @transform_1(%arg0: i32, %arg1: i32) -> (i32, i32) {
    %c0_i32 = arith.constant 0 : i32
    %c0_i32_0 = arith.constant 0 : i32
    return %arg0, %c0_i32 : i32, i32
  }
  func.func @transform_2(%arg0: i32, %arg1: i32) -> (i32, i32, i32) {
    %c0_i32 = arith.constant 0 : i32
    %c0_i32_0 = arith.constant 0 : i32
    %c0_i32_1 = arith.constant 0 : i32
    return %arg0, %c0_i32, %c0_i32_0 : i32, i32, i32
  }
  func.func @transform_3(%arg0: i32, %arg1: i32) -> (i32, i32, i32) {
    %c0_i32 = arith.constant 0 : i32
    %c0_i32_0 = arith.constant 0 : i32
    %c0_i32_1 = arith.constant 0 : i32
    return %arg0, %c0_i32, %c0_i32_0 : i32, i32, i32
  }
  func.func @transform_4(%arg0: i32, %arg1: i32) -> (i32, i32) {
    %c0_i32 = arith.constant 0 : i32
    %c0_i32_0 = arith.constant 0 : i32
    return %arg0, %c0_i32 : i32, i32
  }
  func.func @transform_5(%arg0: i32, %arg1: i32) -> (i32, i32) {
    %c0_i32 = arith.constant 0 : i32
    %c0_i32_0 = arith.constant 0 : i32
    %c0_i32_1 = arith.constant 0 : i32
    return %c0_i32, %c0_i32_0 : i32, i32
  }
  func.func @transform_6(%arg0: i32, %arg1: i32) -> (i32, i32) {
    %c0_i32 = arith.constant 0 : i32
    %c0_i32_0 = arith.constant 0 : i32
    %c0_i32_1 = arith.constant 0 : i32
    return %c0_i32, %c0_i32_0 : i32, i32
  }
  func.func @transform_7(%arg0: i32, %arg1: i32) -> (i32, i32, i32) {
    %c0_i32 = arith.constant 0 : i32
    %c0_i32_0 = arith.constant 0 : i32
    %c0_i32_1 = arith.constant 0 : i32
    return %arg1, %c0_i32, %c0_i32_0 : i32, i32, i32
  }
  func.func @transform_8(%arg0: i32, %arg1: i32) -> (i32, i32, i32) {
    %c0_i32 = arith.constant 0 : i32
    %c0_i32_0 = arith.constant 0 : i32
    %c0_i32_1 = arith.constant 0 : i32
    return %arg1, %c0_i32, %c0_i32_0 : i32, i32, i32
  }
  func.func @transform_9(%arg0: i32, %arg1: i32) -> (i32, i32, i32) {
    %c0_i32 = arith.constant 0 : i32
    %c0_i32_0 = arith.constant 0 : i32
    %c0_i32_1 = arith.constant 0 : i32
    return %arg1, %c0_i32, %c0_i32_0 : i32, i32, i32
  }
  func.func @transform_10(%arg0: i32, %arg1: i32) -> (i32, i32, i32) {
    %c0_i32 = arith.constant 0 : i32
    %c0_i32_0 = arith.constant 0 : i32
    %c0_i32_1 = arith.constant 0 : i32
    return %arg1, %c0_i32, %c0_i32_0 : i32, i32, i32
  }
  func.func @transform_11(%arg0: i32, %arg1: i32) -> (i32, i32, i32) {
    %c0_i32 = arith.constant 0 : i32
    %c0_i32_0 = arith.constant 0 : i32
    %c0_i32_1 = arith.constant 0 : i32
    return %arg1, %c0_i32, %c0_i32_0 : i32, i32, i32
  }
  func.func @transform_12(%arg0: i32, %arg1: i32) -> (i32, i32, i32) {
    %c0_i32 = arith.constant 0 : i32
    %c0_i32_0 = arith.constant 0 : i32
    %c0_i32_1 = arith.constant 0 : i32
    return %arg1, %c0_i32, %c0_i32_0 : i32, i32, i32
  }
  func.func @transform_13(%arg0: i32, %arg1: i32) -> (i32, i32, i32) {
    %c0_i32 = arith.constant 0 : i32
    %c0_i32_0 = arith.constant 0 : i32
    %c0_i32_1 = arith.constant 0 : i32
    return %arg1, %c0_i32, %c0_i32_0 : i32, i32, i32
  }
  func.func @transform_14(%arg0: i32, %arg1: i32) -> (i32, i32, i32) {
    %c0_i32 = arith.constant 0 : i32
    %c0_i32_0 = arith.constant 0 : i32
    %c0_i32_1 = arith.constant 0 : i32
    return %arg1, %c0_i32, %c0_i32_0 : i32, i32, i32
  }
  func.func @transform_15(%arg0: i32, %arg1: i32) -> (i32, i32, i32) {
    %c0_i32 = arith.constant 0 : i32
    %c0_i32_0 = arith.constant 0 : i32
    %c0_i32_1 = arith.constant 0 : i32
    return %arg1, %c0_i32, %c0_i32_0 : i32, i32, i32
  }
  func.func @transform_16(%arg0: i32, %arg1: i32) -> (i32, i32, i32) {
    %c0_i32 = arith.constant 0 : i32
    %c0_i32_0 = arith.constant 0 : i32
    %c0_i32_1 = arith.constant 0 : i32
    return %arg1, %c0_i32, %c0_i32_0 : i32, i32, i32
  }
  func.func @transform_17(%arg0: i32, %arg1: i32) -> (i32, i32, i32) {
    %c0_i32 = arith.constant 0 : i32
    %c0_i32_0 = arith.constant 0 : i32
    %c0_i32_1 = arith.constant 0 : i32
    return %arg1, %c0_i32, %c0_i32_0 : i32, i32, i32
  }
  func.func @transform_18(%arg0: i32, %arg1: i32) -> (i32, i32, i32) {
    %c0_i32 = arith.constant 0 : i32
    %c0_i32_0 = arith.constant 0 : i32
    %c0_i32_1 = arith.constant 0 : i32
    return %arg1, %c0_i32, %c0_i32_0 : i32, i32, i32
  }
  func.func @transform_19(%arg0: i32, %arg1: i32) -> (i32, i32, i32) {
    %c0_i32 = arith.constant 0 : i32
    %c0_i32_0 = arith.constant 0 : i32
    %c0_i32_1 = arith.constant 0 : i32
    return %arg1, %c0_i32, %c0_i32_0 : i32, i32, i32
  }
  func.func @transform_20(%arg0: i32, %arg1: i32) -> (i32, i32, i32) {
    %c0_i32 = arith.constant 0 : i32
    %c0_i32_0 = arith.constant 0 : i32
    %c0_i32_1 = arith.constant 0 : i32
    return %arg1, %c0_i32, %c0_i32_0 : i32, i32, i32
  }
  func.func @transform_21(%arg0: i32, %arg1: i32) -> (i32, i32, i32) {
    %c0_i32 = arith.constant 0 : i32
    %c0_i32_0 = arith.constant 0 : i32
    %c0_i32_1 = arith.constant 0 : i32
    return %arg1, %c0_i32, %c0_i32_0 : i32, i32, i32
  }
  func.func @transform_22(%arg0: i32, %arg1: i32) -> (i32, i32, i32) {
    %c0_i32 = arith.constant 0 : i32
    %c0_i32_0 = arith.constant 0 : i32
    %c0_i32_1 = arith.constant 0 : i32
    return %arg1, %c0_i32, %c0_i32_0 : i32, i32, i32
  }
  func.func @transform_23(%arg0: i32, %arg1: i32) -> (i32, i32) {
    %c0_i32 = arith.constant 0 : i32
    %c0_i32_0 = arith.constant 0 : i32
    return %arg0, %c0_i32 : i32, i32
  }
}

</mosaic_0001>

<llo_original>
// kernel: tpu_custom_call.1
$region0: #{tpu_custom_call.1}
  #allocation0 [shape = 'u32[]', space=smem, size = 0x4, offset = 0x4, fixed_abs, tag = 'smem constant byte address 0x4 - core index']
  #allocation1 [shape = 'u32[144,128]{1,0:T(1,128)}', space=vmem, size = 0x12000, scoped, tag = 'internal scratch']
  #allocation2 [shape = 'f32[16,128]{1,0:T(8,128)}', space=vmem, size = 0x2000, scoped, tag = 'scratch operand']
  %s0 = inlined_call_operand.vmem [shape: bf16[16,128], index: 0, kind: input, shape index: {}]
  %s1 = inlined_call_operand.vmem [shape: f32[16,128], index: 1, kind: input, shape index: {}]
  %s2 = inlined_call_operand.hbm [shape: bf16[16,8,128], index: 2, kind: input, shape index: {}]
  %s3 = inlined_call_operand.hbm [shape: bf16[16,8,128], index: 3, kind: input, shape index: {}]
  %s4 = inlined_call_operand.vmem [shape: f32[16,8], index: 4, kind: input, shape index: {}]
  %s5 = inlined_call_operand.vmem [shape: f32[128,4], index: 5, kind: input, shape index: {}]
  %s6 = inlined_call_operand.vmem [shape: f32[4,128], index: 6, kind: input, shape index: {}]
  %s7 = inlined_call_operand.vmem [shape: bf16[2,128,128], index: 7, kind: input, shape index: {}]
  %s8 = inlined_call_operand.vmem [shape: f32[2,1,128], index: 8, kind: input, shape index: {}]
  %s9 = inlined_call_operand.hbm [shape: bf16[2,128,128], index: 9, kind: input, shape index: {}]
  %s10 = inlined_call_operand.vmem [shape: f32[2,1,128], index: 10, kind: input, shape index: {}]
  %s11 = inlined_call_operand.hbm [shape: bf16[2,128,128], index: 11, kind: input, shape index: {}]
  %s12 = inlined_call_operand.hbm [shape: bf16[2,128,128], index: 12, kind: input, shape index: {}]
  %s13 = inlined_call_operand.hbm [shape: bf16[2,128,128], index: 13, kind: input, shape index: {}]
  %s14 = inlined_call_operand.vmem [shape: f32[2,1,128], index: 14, kind: input, shape index: {}]
  %s15 = inlined_call_operand.hbm [shape: bf16[2,128,256], index: 15, kind: input, shape index: {}]
  %s16 = inlined_call_operand.vmem [shape: f32[2,1,256], index: 16, kind: input, shape index: {}]
  %s17 = inlined_call_operand.hbm [shape: bf16[2,256,128], index: 17, kind: input, shape index: {}]
  %s18 = inlined_call_operand.vmem [shape: f32[2,1,128], index: 18, kind: input, shape index: {}]
  %s19 = inlined_call_operand.vmem [shape: f32[2,1,128], index: 19, kind: input, shape index: {}]
  %s20 = inlined_call_operand.vmem [shape: f32[2,1,128], index: 20, kind: input, shape index: {}]
  %s21 = inlined_call_operand.vmem [shape: f32[2,1,128], index: 21, kind: input, shape index: {}]
  %s22 = inlined_call_operand.vmem [shape: f32[2,1,128], index: 22, kind: input, shape index: {}]
  %s23 = inlined_call_operand.hbm [shape: f32[16,128], index: 23, kind: output, shape index: {}]
  %s24 = sld [smem:[#allocation0]]
  $region165: #{tpu_custom_call.1} parent=0
    _
  %s26 = ssub.s32 1, %s24
  %s27 = scalar_select 0, %s26, %s24
  $region1: #{tpu_custom_call.1} parent=0
    #allocation3 [shape = 'u8[32768]{0}', space=vmem, size = 0x8000, scoped, tag = 'input window, operand 2, single buffered']
    #allocation4 [shape = 's32[2]{0}', space=sflag, size = 0x8, scoped, tag = 'scoped memory for tpu_custom_call.1']
    #allocation5 [shape = 's32[2]{0}', space=sflag, size = 0x8, scoped, tag = 'scoped memory for tpu_custom_call.1']
    #allocation6 [shape = 'u8[32768]{0}', space=vmem, size = 0x8000, scoped, tag = 'input window, operand 3, single buffered']
    #allocation7 [shape = 's32[1]{0}', space=sflag, size = 0x4, scoped, tag = 'scoped memory for tpu_custom_call.1']
    #allocation8 [shape = 'u8[65536]{0}', space=vmem, size = 0x10000, scoped, tag = 'input window, operand 9']
    #allocation9 [shape = 'u8[65536]{0}', space=vmem, size = 0x10000, scoped, tag = 'input window, operand 11']
    #allocation10 [shape = 'u8[65536]{0}', space=vmem, size = 0x10000, scoped, tag = 'input window, operand 12']
    #allocation11 [shape = 'u8[65536]{0}', space=vmem, size = 0x10000, scoped, tag = 'input window, operand 13']
    #allocation12 [shape = 'u8[131072]{0}', space=vmem, size = 0x20000, scoped, tag = 'input window, operand 15']
    #allocation13 [shape = 'u8[131072]{0}', space=vmem, size = 0x20000, scoped, tag = 'input window, operand 17']
    #allocation14 [shape = 'u8[8192]{0}', space=vmem, size = 0x2000, scoped, tag = 'output window, operand 0, single buffered']
    %28 = vsyncpa [#allocation4], 0
    %29 = vsyncpa [#allocation7], 0
    %30 = vsyncpa [#allocation5], 0
    loop: start=0, step=1, limit=4
    $region2: #{tpu_custom_call.1} parent=1 // loop_pre_header
      _
    $region3: #{tpu_custom_call.1} parent=1 // loop_header
      %s32 = sphi 0, %s36
      %p33 = scmp.ge.s32.totalorder %s32, 4
      %s39 = sphi 0, %s51
      %s40 = sphi 0, %s47
      %s41 = sphi 0, %s39
      %s42 = sphi 0, %s40
      %s43 = sphi 0, %s41
      %s44 = sphi 0, %s42
      %s54 = sphi 0, %s56
      %s57 = sphi 0, %s54
      %s58 = sphi 0, %s57
      %s74 = sphi 0, %s58
      %s80 = sphi 0, %s82
      %s83 = sphi 0, %s80
      %s84 = sphi 0, %s83
      %s100 = sphi 0, %s84
      %s106 = sphi 0, %s108
      %s109 = sphi 0, %s106
      %s110 = sphi 0, %s109
      %s126 = sphi 0, %s110
      %s132 = sphi 0, %s134
      %s135 = sphi 0, %s132
      %s136 = sphi 0, %s135
      %s152 = sphi 0, %s136
      %s158 = sphi 0, %s160
      %s161 = sphi 0, %s158
      %s162 = sphi 0, %s161
      %s178 = sphi 0, %s162
      %s182 = sphi 0, %s182
      %s184 = sphi 0, %s182
      %s185 = sphi 0, %s184
      %s199 = sphi 0, %s185
      %s203 = sphi 0, %s203
      %s205 = sphi 0, %s203
      %s206 = sphi 0, %s205
      %s220 = sphi 0, %s206
      %s226 = sphi 0, %s228
      %s229 = sphi 0, %s226
      %s230 = sphi 0, %s229
      %s246 = sphi 0, %s230
      %s252 = sphi 0, %s254
      %s255 = sphi 0, %s252
      %s256 = sphi 0, %s255
      %s272 = sphi 0, %s256
      %s278 = sphi 0, %s280
      %s281 = sphi 0, %s278
      %s282 = sphi 0, %s281
      %s298 = sphi 0, %s282
      %s304 = sphi 0, %s306
      %s307 = sphi 0, %s304
      %s308 = sphi 0, %s307
      %s324 = sphi 0, %s308
      %s330 = sphi 0, %s332
      %s333 = sphi 0, %s330
      %s334 = sphi 0, %s333
      %s350 = sphi 0, %s334
      %s356 = sphi 0, %s358
      %s359 = sphi 0, %s356
      %s360 = sphi 0, %s359
      %s376 = sphi 0, %s360
      %s382 = sphi 0, %s384
      %s385 = sphi 0, %s382
      %s386 = sphi 0, %s385
      %s402 = sphi 0, %s386
      %s408 = sphi 0, %s410
      %s411 = sphi 0, %s408
      %s412 = sphi 0, %s411
      %s428 = sphi 0, %s412
      %s434 = sphi 0, %s436
      %s437 = sphi 0, %s434
      %s438 = sphi 0, %s437
      %s454 = sphi 0, %s438
      %s460 = sphi 0, %s462
      %s463 = sphi 0, %s460
      %s464 = sphi 0, %s463
      %s480 = sphi 0, %s464
      %s486 = sphi 0, %s488
      %s489 = sphi 0, %s486
      %s490 = sphi 0, %s489
      %s506 = sphi 0, %s490
      %s512 = sphi 0, %s514
      %s515 = sphi 0, %s512
      %s516 = sphi 0, %s515
      %s532 = sphi 0, %s516
      %s538 = sphi 0, %s540
      %s541 = sphi 0, %s538
      %s542 = sphi 0, %s541
      %s558 = sphi 0, %s542
      %s564 = sphi 0, %s566
      %s567 = sphi 0, %s564
      %s568 = sphi 0, %s567
      %s584 = sphi 0, %s568
      %s590 = sphi 0, %s592
      %s593 = sphi 0, %s590
      %s594 = sphi 0, %s593
      %s610 = sphi 0, %s594
      %s616 = sphi 0, %s618
      %s619 = sphi 0, %s616
      %s620 = sphi 0, %s619
      %s636 = sphi 0, %s620
      %s642 = sphi 0, %s644
      %s645 = sphi 0, %s642
      %s646 = sphi 0, %s645
      %s662 = sphi 0, %s646
    $region4: #{tpu_custom_call.1} parent=1 // loop_header_branch
      %35 = sbr.rel (%p33) target = $region8
    $region5: #{tpu_custom_call.1} parent=1 // loop_body
      %s37 = ssub.s32 %s32, 1
      %s38 = ssub.s32 %s32, 2
      %s45 = sadd.s32 1, %s40
      %p46 = scmp.ge.s32.totalorder %s45, 2
      %s47 = scalar_select %p46, 0, %s45
      %s48 = sadd.s32 1, %s39
      %s49 = scalar_select %p46, %s48, %s39
      %p50 = scmp.ge.s32.totalorder %s49, 1
      %s51 = scalar_select %p50, 0, %s49
      %s52 = ssub.s32 %s39, %s51
      %p53 = scmp.eq.s32.totalorder %s52, 0
      %s55 = sadd.s32 %s54, 1
      %s56 = scalar_select %p53, %s54, %s55
      %p59 = pneg %p53
      %p60 = scmp.eq.s32.totalorder %s32, 1
      %p61 = por %p59, %p60
      %p62 = scmp.ne.s32.totalorder %s54, %s57
      %p63 = scmp.eq.s32.totalorder %s32, 0
      %p64 = por %p62, %p63
      %p65 = scmp.ne.s32.totalorder %s54, %s57
      %p66 = scmp.eq.s32.totalorder %s37, 1
      %p67 = por %p65, %p66
      %p68 = scmp.ne.s32.totalorder %s57, %s58
      %p69 = scmp.eq.s32.totalorder %s37, 0
      %p70 = por %p68, %p69
      %p71 = scmp.ne.s32.totalorder %s57, %s58
      %p72 = scmp.eq.s32.totalorder %s38, 1
      %p73 = por %p71, %p72
      %p75 = scmp.ne.s32.totalorder %s58, %s74
      %p76 = scmp.eq.s32.totalorder %s38, 0
      %p77 = por %p75, %p76
      %s78 = ssub.s32 %s39, %s51
      %p79 = scmp.eq.s32.totalorder %s78, 0
      %s81 = sadd.s32 %s80, 1
      %s82 = scalar_select %p79, %s80, %s81
      %p85 = pneg %p79
      %p86 = scmp.eq.s32.totalorder %s32, 1
      %p87 = por %p85, %p86
      %p88 = scmp.ne.s32.totalorder %s80, %s83
      %p89 = scmp.eq.s32.totalorder %s32, 0
      %p90 = por %p88, %p89
      %p91 = scmp.ne.s32.totalorder %s80, %s83
      %p92 = scmp.eq.s32.totalorder %s37, 1
      %p93 = por %p91, %p92
      %p94 = scmp.ne.s32.totalorder %s83, %s84
      %p95 = scmp.eq.s32.totalorder %s37, 0
      %p96 = por %p94, %p95
      %p97 = scmp.ne.s32.totalorder %s83, %s84
      %p98 = scmp.eq.s32.totalorder %s38, 1
      %p99 = por %p97, %p98
      %p101 = scmp.ne.s32.totalorder %s84, %s100
      %p102 = scmp.eq.s32.totalorder %s38, 0
      %p103 = por %p101, %p102
      %s104 = ssub.s32 %s39, %s51
      %p105 = scmp.eq.s32.totalorder %s104, 0
      %s107 = sadd.s32 %s106, 1
      %s108 = scalar_select %p105, %s106, %s107
      %p111 = pneg %p105
      %p112 = scmp.eq.s32.totalorder %s32, 1
      %p113 = por %p111, %p112
      %p114 = scmp.ne.s32.totalorder %s106, %s109
      %p115 = scmp.eq.s32.totalorder %s32, 0
      %p116 = por %p114, %p115
      %p117 = scmp.ne.s32.totalorder %s106, %s109
      %p118 = scmp.eq.s32.totalorder %s37, 1
      %p119 = por %p117, %p118
      %p120 = scmp.ne.s32.totalorder %s109, %s110
      %p121 = scmp.eq.s32.totalorder %s37, 0
      %p122 = por %p120, %p121
      %p123 = scmp.ne.s32.totalorder %s109, %s110
      %p124 = scmp.eq.s32.totalorder %s38, 1
      %p125 = por %p123, %p124
      %p127 = scmp.ne.s32.totalorder %s110, %s126
      %p128 = scmp.eq.s32.totalorder %s38, 0
      %p129 = por %p127, %p128
      %s130 = ssub.s32 %s39, %s51
      %p131 = scmp.eq.s32.totalorder %s130, 0
      %s133 = sadd.s32 %s132, 1
      %s134 = scalar_select %p131, %s132, %s133
      %p137 = pneg %p131
      %p138 = scmp.eq.s32.totalorder %s32, 1
      %p139 = por %p137, %p138
      %p140 = scmp.ne.s32.totalorder %s132, %s135
      %p141 = scmp.eq.s32.totalorder %s32, 0
      %p142 = por %p140, %p141
      %p143 = scmp.ne.s32.totalorder %s132, %s135
      %p144 = scmp.eq.s32.totalorder %s37, 1
      %p145 = por %p143, %p144
      %p146 = scmp.ne.s32.totalorder %s135, %s136
      %p147 = scmp.eq.s32.totalorder %s37, 0
      %p148 = por %p146, %p147
      %p149 = scmp.ne.s32.totalorder %s135, %s136
      %p150 = scmp.eq.s32.totalorder %s38, 1
      %p151 = por %p149, %p150
      %p153 = scmp.ne.s32.totalorder %s136, %s152
      %p154 = scmp.eq.s32.totalorder %s38, 0
      %p155 = por %p153, %p154
      %s156 = ssub.s32 %s39, %s51
      %p157 = scmp.eq.s32.totalorder %s156, 0
      %s159 = sadd.s32 %s158, 1
      %s160 = scalar_select %p157, %s158, %s159
      %p163 = pneg %p157
      %p164 = scmp.eq.s32.totalorder %s32, 1
      %p165 = por %p163, %p164
      %p166 = scmp.ne.s32.totalorder %s158, %s161
      %p167 = scmp.eq.s32.totalorder %s32, 0
      %p168 = por %p166, %p167
      %p169 = scmp.ne.s32.totalorder %s158, %s161
      %p170 = scmp.eq.s32.totalorder %s37, 1
      %p171 = por %p169, %p170
      %p172 = scmp.ne.s32.totalorder %s161, %s162
      %p173 = scmp.eq.s32.totalorder %s37, 0
      %p174 = por %p172, %p173
      %p175 = scmp.ne.s32.totalorder %s161, %s162
      %p176 = scmp.eq.s32.totalorder %s38, 1
      %p177 = por %p175, %p176
      %p179 = scmp.ne.s32.totalorder %s162, %s178
      %p180 = scmp.eq.s32.totalorder %s38, 0
      %p181 = por %p179, %p180
      %s183 = sadd.s32 %s182, 1
      %p186 = scmp.eq.s32.totalorder %s32, 1
      %p187 = scmp.ne.s32.totalorder %s182, %s184
      %p188 = scmp.eq.s32.totalorder %s32, 0
      %p189 = por %p187, %p188
      %p190 = scmp.ne.s32.totalorder %s182, %s184
      %p191 = scmp.eq.s32.totalorder %s37, 1
      %p192 = por %p190, %p191
      %p193 = scmp.ne.s32.totalorder %s184, %s185
      %p194 = scmp.eq.s32.totalorder %s37, 0
      %p195 = por %p193, %p194
      %p196 = scmp.ne.s32.totalorder %s184, %s185
      %p197 = scmp.eq.s32.totalorder %s38, 1
      %p198 = por %p196, %p197
      %p200 = scmp.ne.s32.totalorder %s185, %s199
      %p201 = scmp.eq.s32.totalorder %s38, 0
      %p202 = por %p200, %p201
      %s204 = sadd.s32 %s203, 1
      %p207 = scmp.eq.s32.totalorder %s32, 1
      %p208 = scmp.ne.s32.totalorder %s203, %s205
      %p209 = scmp.eq.s32.totalorder %s32, 0
      %p210 = por %p208, %p209
      %p211 = scmp.ne.s32.totalorder %s203, %s205
      %p212 = scmp.eq.s32.totalorder %s37, 1
      %p213 = por %p211, %p212
      %p214 = scmp.ne.s32.totalorder %s205, %s206
      %p215 = scmp.eq.s32.totalorder %s37, 0
      %p216 = por %p214, %p215
      %p217 = scmp.ne.s32.totalorder %s205, %s206
      %p218 = scmp.eq.s32.totalorder %s38, 1
      %p219 = por %p217, %p218
      %p221 = scmp.ne.s32.totalorder %s206, %s220
      %p222 = scmp.eq.s32.totalorder %s38, 0
      %p223 = por %p221, %p222
      %s224 = ssub.s32 %s40, %s47
      %p225 = scmp.eq.s32.totalorder %s224, 0
      %s227 = sadd.s32 %s226, 1
      %s228 = scalar_select %p225, %s226, %s227
      %p231 = pneg %p225
      %p232 = scmp.eq.s32.totalorder %s32, 1
      %p233 = por %p231, %p232
      %p234 = scmp.ne.s32.totalorder %s226, %s229
      %p235 = scmp.eq.s32.totalorder %s32, 0
      %p236 = por %p234, %p235
      %p237 = scmp.ne.s32.totalorder %s226, %s229
      %p238 = scmp.eq.s32.totalorder %s37, 1
      %p239 = por %p237, %p238
      %p240 = scmp.ne.s32.totalorder %s229, %s230
      %p241 = scmp.eq.s32.totalorder %s37, 0
      %p242 = por %p240, %p241
      %p243 = scmp.ne.s32.totalorder %s229, %s230
      %p244 = scmp.eq.s32.totalorder %s38, 1
      %p245 = por %p243, %p244
      %p247 = scmp.ne.s32.totalorder %s230, %s246
      %p248 = scmp.eq.s32.totalorder %s38, 0
      %p249 = por %p247, %p248
      %s250 = ssub.s32 %s40, %s47
      %p251 = scmp.eq.s32.totalorder %s250, 0
      %s253 = sadd.s32 %s252, 1
      %s254 = scalar_select %p251, %s252, %s253
      %p257 = pneg %p251
      %p258 = scmp.eq.s32.totalorder %s32, 1
      %p259 = por %p257, %p258
      %p260 = scmp.ne.s32.totalorder %s252, %s255
      %p261 = scmp.eq.s32.totalorder %s32, 0
      %p262 = por %p260, %p261
      %p263 = scmp.ne.s32.totalorder %s252, %s255
      %p264 = scmp.eq.s32.totalorder %s37, 1
      %p265 = por %p263, %p264
      %p266 = scmp.ne.s32.totalorder %s255, %s256
      %p267 = scmp.eq.s32.totalorder %s37, 0
      %p268 = por %p266, %p267
      %p269 = scmp.ne.s32.totalorder %s255, %s256
      %p270 = scmp.eq.s32.totalorder %s38, 1
      %p271 = por %p269, %p270
      %p273 = scmp.ne.s32.totalorder %s256, %s272
      %p274 = scmp.eq.s32.totalorder %s38, 0
      %p275 = por %p273, %p274
      %s276 = ssub.s32 %s40, %s47
      %p277 = scmp.eq.s32.totalorder %s276, 0
      %s279 = sadd.s32 %s278, 1
      %s280 = scalar_select %p277, %s278, %s279
      %p283 = pneg %p277
      %p284 = scmp.eq.s32.totalorder %s32, 1
      %p285 = por %p283, %p284
      %p286 = scmp.ne.s32.totalorder %s278, %s281
      %p287 = scmp.eq.s32.totalorder %s32, 0
      %p288 = por %p286, %p287
      %p289 = scmp.ne.s32.totalorder %s278, %s281
      %p290 = scmp.eq.s32.totalorder %s37, 1
      %p291 = por %p289, %p290
      %p292 = scmp.ne.s32.totalorder %s281, %s282
      %p293 = scmp.eq.s32.totalorder %s37, 0
      %p294 = por %p292, %p293
      %p295 = scmp.ne.s32.totalorder %s281, %s282
      %p296 = scmp.eq.s32.totalorder %s38, 1
      %p297 = por %p295, %p296
      %p299 = scmp.ne.s32.totalorder %s282, %s298
      %p300 = scmp.eq.s32.totalorder %s38, 0
      %p301 = por %p299, %p300
      %s302 = ssub.s32 %s40, %s47
      %p303 = scmp.eq.s32.totalorder %s302, 0
      %s305 = sadd.s32 %s304, 1
      %s306 = scalar_select %p303, %s304, %s305
      %p309 = pneg %p303
      %p310 = scmp.eq.s32.totalorder %s32, 1
      %p311 = por %p309, %p310
      %p312 = scmp.ne.s32.totalorder %s304, %s307
      %p313 = scmp.eq.s32.totalorder %s32, 0
      %p314 = por %p312, %p313
      %p315 = scmp.ne.s32.totalorder %s304, %s307
      %p316 = scmp.eq.s32.totalorder %s37, 1
      %p317 = por %p315, %p316
      %p318 = scmp.ne.s32.totalorder %s307, %s308
      %p319 = scmp.eq.s32.totalorder %s37, 0
      %p320 = por %p318, %p319
      %p321 = scmp.ne.s32.totalorder %s307, %s308
      %p322 = scmp.eq.s32.totalorder %s38, 1
      %p323 = por %p321, %p322
      %p325 = scmp.ne.s32.totalorder %s308, %s324
      %p326 = scmp.eq.s32.totalorder %s38, 0
      %p327 = por %p325, %p326
      %s328 = ssub.s32 %s40, %s47
      %p329 = scmp.eq.s32.totalorder %s328, 0
      %s331 = sadd.s32 %s330, 1
      %s332 = scalar_select %p329, %s330, %s331
      %p335 = pneg %p329
      %p336 = scmp.eq.s32.totalorder %s32, 1
      %p337 = por %p335, %p336
      %p338 = scmp.ne.s32.totalorder %s330, %s333
      %p339 = scmp.eq.s32.totalorder %s32, 0
      %p340 = por %p338, %p339
      %p341 = scmp.ne.s32.totalorder %s330, %s333
      %p342 = scmp.eq.s32.totalorder %s37, 1
      %p343 = por %p341, %p342
      %p344 = scmp.ne.s32.totalorder %s333, %s334
      %p345 = scmp.eq.s32.totalorder %s37, 0
      %p346 = por %p344, %p345
      %p347 = scmp.ne.s32.totalorder %s333, %s334
      %p348 = scmp.eq.s32.totalorder %s38, 1
      %p349 = por %p347, %p348
      %p351 = scmp.ne.s32.totalorder %s334, %s350
      %p352 = scmp.eq.s32.totalorder %s38, 0
      %p353 = por %p351, %p352
      %s354 = ssub.s32 %s40, %s47
      %p355 = scmp.eq.s32.totalorder %s354, 0
      %s357 = sadd.s32 %s356, 1
      %s358 = scalar_select %p355, %s356, %s357
      %p361 = pneg %p355
      %p362 = scmp.eq.s32.totalorder %s32, 1
      %p363 = por %p361, %p362
      %p364 = scmp.ne.s32.totalorder %s356, %s359
      %p365 = scmp.eq.s32.totalorder %s32, 0
      %p366 = por %p364, %p365
      %p367 = scmp.ne.s32.totalorder %s356, %s359
      %p368 = scmp.eq.s32.totalorder %s37, 1
      %p369 = por %p367, %p368
      %p370 = scmp.ne.s32.totalorder %s359, %s360
      %p371 = scmp.eq.s32.totalorder %s37, 0
      %p372 = por %p370, %p371
      %p373 = scmp.ne.s32.totalorder %s359, %s360
      %p374 = scmp.eq.s32.totalorder %s38, 1
      %p375 = por %p373, %p374
      %p377 = scmp.ne.s32.totalorder %s360, %s376
      %p378 = scmp.eq.s32.totalorder %s38, 0
      %p379 = por %p377, %p378
      %s380 = ssub.s32 %s40, %s47
      %p381 = scmp.eq.s32.totalorder %s380, 0
      %s383 = sadd.s32 %s382, 1
      %s384 = scalar_select %p381, %s382, %s383
      %p387 = pneg %p381
      %p388 = scmp.eq.s32.totalorder %s32, 1
      %p389 = por %p387, %p388
      %p390 = scmp.ne.s32.totalorder %s382, %s385
      %p391 = scmp.eq.s32.totalorder %s32, 0
      %p392 = por %p390, %p391
      %p393 = scmp.ne.s32.totalorder %s382, %s385
      %p394 = scmp.eq.s32.totalorder %s37, 1
      %p395 = por %p393, %p394
      %p396 = scmp.ne.s32.totalorder %s385, %s386
      %p397 = scmp.eq.s32.totalorder %s37, 0
      %p398 = por %p396, %p397
      %p399 = scmp.ne.s32.totalorder %s385, %s386
      %p400 = scmp.eq.s32.totalorder %s38, 1
      %p401 = por %p399, %p400
      %p403 = scmp.ne.s32.totalorder %s386, %s402
      %p404 = scmp.eq.s32.totalorder %s38, 0
      %p405 = por %p403, %p404
      %s406 = ssub.s32 %s40, %s47
      %p407 = scmp.eq.s32.totalorder %s406, 0
      %s409 = sadd.s32 %s408, 1
      %s410 = scalar_select %p407, %s408, %s409
      %p413 = pneg %p407
      %p414 = scmp.eq.s32.totalorder %s32, 1
      %p415 = por %p413, %p414
      %p416 = scmp.ne.s32.totalorder %s408, %s411
      %p417 = scmp.eq.s32.totalorder %s32, 0
      %p418 = por %p416, %p417
      %p419 = scmp.ne.s32.totalorder %s408, %s411
      %p420 = scmp.eq.s32.totalorder %s37, 1
      %p421 = por %p419, %p420
      %p422 = scmp.ne.s32.totalorder %s411, %s412
      %p423 = scmp.eq.s32.totalorder %s37, 0
      %p424 = por %p422, %p423
      %p425 = scmp.ne.s32.totalorder %s411, %s412
      %p426 = scmp.eq.s32.totalorder %s38, 1
      %p427 = por %p425, %p426
      %p429 = scmp.ne.s32.totalorder %s412, %s428
      %p430 = scmp.eq.s32.totalorder %s38, 0
      %p431 = por %p429, %p430
      %s432 = ssub.s32 %s40, %s47
      %p433 = scmp.eq.s32.totalorder %s432, 0
      %s435 = sadd.s32 %s434, 1
      %s436 = scalar_select %p433, %s434, %s435
      %p439 = pneg %p433
      %p440 = scmp.eq.s32.totalorder %s32, 1
      %p441 = por %p439, %p440
      %p442 = scmp.ne.s32.totalorder %s434, %s437
      %p443 = scmp.eq.s32.totalorder %s32, 0
      %p444 = por %p442, %p443
      %p445 = scmp.ne.s32.totalorder %s434, %s437
      %p446 = scmp.eq.s32.totalorder %s37, 1
      %p447 = por %p445, %p446
      %p448 = scmp.ne.s32.totalorder %s437, %s438
      %p449 = scmp.eq.s32.totalorder %s37, 0
      %p450 = por %p448, %p449
      %p451 = scmp.ne.s32.totalorder %s437, %s438
      %p452 = scmp.eq.s32.totalorder %s38, 1
      %p453 = por %p451, %p452
      %p455 = scmp.ne.s32.totalorder %s438, %s454
      %p456 = scmp.eq.s32.totalorder %s38, 0
      %p457 = por %p455, %p456
      %s458 = ssub.s32 %s40, %s47
      %p459 = scmp.eq.s32.totalorder %s458, 0
      %s461 = sadd.s32 %s460, 1
      %s462 = scalar_select %p459, %s460, %s461
      %p465 = pneg %p459
      %p466 = scmp.eq.s32.totalorder %s32, 1
      %p467 = por %p465, %p466
      %p468 = scmp.ne.s32.totalorder %s460, %s463
      %p469 = scmp.eq.s32.totalorder %s32, 0
      %p470 = por %p468, %p469
      %p471 = scmp.ne.s32.totalorder %s460, %s463
      %p472 = scmp.eq.s32.totalorder %s37, 1
      %p473 = por %p471, %p472
      %p474 = scmp.ne.s32.totalorder %s463, %s464
      %p475 = scmp.eq.s32.totalorder %s37, 0
      %p476 = por %p474, %p475
      %p477 = scmp.ne.s32.totalorder %s463, %s464
      %p478 = scmp.eq.s32.totalorder %s38, 1
      %p479 = por %p477, %p478
      %p481 = scmp.ne.s32.totalorder %s464, %s480
      %p482 = scmp.eq.s32.totalorder %s38, 0
      %p483 = por %p481, %p482
      %s484 = ssub.s32 %s40, %s47
      %p485 = scmp.eq.s32.totalorder %s484, 0
      %s487 = sadd.s32 %s486, 1
      %s488 = scalar_select %p485, %s486, %s487
      %p491 = pneg %p485
      %p492 = scmp.eq.s32.totalorder %s32, 1
      %p493 = por %p491, %p492
      %p494 = scmp.ne.s32.totalorder %s486, %s489
      %p495 = scmp.eq.s32.totalorder %s32, 0
      %p496 = por %p494, %p495
      %p497 = scmp.ne.s32.totalorder %s486, %s489
      %p498 = scmp.eq.s32.totalorder %s37, 1
      %p499 = por %p497, %p498
      %p500 = scmp.ne.s32.totalorder %s489, %s490
      %p501 = scmp.eq.s32.totalorder %s37, 0
      %p502 = por %p500, %p501
      %p503 = scmp.ne.s32.totalorder %s489, %s490
      %p504 = scmp.eq.s32.totalorder %s38, 1
      %p505 = por %p503, %p504
      %p507 = scmp.ne.s32.totalorder %s490, %s506
      %p508 = scmp.eq.s32.totalorder %s38, 0
      %p509 = por %p507, %p508
      %s510 = ssub.s32 %s40, %s47
      %p511 = scmp.eq.s32.totalorder %s510, 0
      %s513 = sadd.s32 %s512, 1
      %s514 = scalar_select %p511, %s512, %s513
      %p517 = pneg %p511
      %p518 = scmp.eq.s32.totalorder %s32, 1
      %p519 = por %p517, %p518
      %p520 = scmp.ne.s32.totalorder %s512, %s515
      %p521 = scmp.eq.s32.totalorder %s32, 0
      %p522 = por %p520, %p521
      %p523 = scmp.ne.s32.totalorder %s512, %s515
      %p524 = scmp.eq.s32.totalorder %s37, 1
      %p525 = por %p523, %p524
      %p526 = scmp.ne.s32.totalorder %s515, %s516
      %p527 = scmp.eq.s32.totalorder %s37, 0
      %p528 = por %p526, %p527
      %p529 = scmp.ne.s32.totalorder %s515, %s516
      %p530 = scmp.eq.s32.totalorder %s38, 1
      %p531 = por %p529, %p530
      %p533 = scmp.ne.s32.totalorder %s516, %s532
      %p534 = scmp.eq.s32.totalorder %s38, 0
      %p535 = por %p533, %p534
      %s536 = ssub.s32 %s40, %s47
      %p537 = scmp.eq.s32.totalorder %s536, 0
      %s539 = sadd.s32 %s538, 1
      %s540 = scalar_select %p537, %s538, %s539
      %p543 = pneg %p537
      %p544 = scmp.eq.s32.totalorder %s32, 1
      %p545 = por %p543, %p544
      %p546 = scmp.ne.s32.totalorder %s538, %s541
      %p547 = scmp.eq.s32.totalorder %s32, 0
      %p548 = por %p546, %p547
      %p549 = scmp.ne.s32.totalorder %s538, %s541
      %p550 = scmp.eq.s32.totalorder %s37, 1
      %p551 = por %p549, %p550
      %p552 = scmp.ne.s32.totalorder %s541, %s542
      %p553 = scmp.eq.s32.totalorder %s37, 0
      %p554 = por %p552, %p553
      %p555 = scmp.ne.s32.totalorder %s541, %s542
      %p556 = scmp.eq.s32.totalorder %s38, 1
      %p557 = por %p555, %p556
      %p559 = scmp.ne.s32.totalorder %s542, %s558
      %p560 = scmp.eq.s32.totalorder %s38, 0
      %p561 = por %p559, %p560
      %s562 = ssub.s32 %s40, %s47
      %p563 = scmp.eq.s32.totalorder %s562, 0
      %s565 = sadd.s32 %s564, 1
      %s566 = scalar_select %p563, %s564, %s565
      %p569 = pneg %p563
      %p570 = scmp.eq.s32.totalorder %s32, 1
      %p571 = por %p569, %p570
      %p572 = scmp.ne.s32.totalorder %s564, %s567
      %p573 = scmp.eq.s32.totalorder %s32, 0
      %p574 = por %p572, %p573
      %p575 = scmp.ne.s32.totalorder %s564, %s567
      %p576 = scmp.eq.s32.totalorder %s37, 1
      %p577 = por %p575, %p576
      %p578 = scmp.ne.s32.totalorder %s567, %s568
      %p579 = scmp.eq.s32.totalorder %s37, 0
      %p580 = por %p578, %p579
      %p581 = scmp.ne.s32.totalorder %s567, %s568
      %p582 = scmp.eq.s32.totalorder %s38, 1
      %p583 = por %p581, %p582
      %p585 = scmp.ne.s32.totalorder %s568, %s584
      %p586 = scmp.eq.s32.totalorder %s38, 0
      %p587 = por %p585, %p586
      %s588 = ssub.s32 %s40, %s47
      %p589 = scmp.eq.s32.totalorder %s588, 0
      %s591 = sadd.s32 %s590, 1
      %s592 = scalar_select %p589, %s590, %s591
      %p595 = pneg %p589
      %p596 = scmp.eq.s32.totalorder %s32, 1
      %p597 = por %p595, %p596
      %p598 = scmp.ne.s32.totalorder %s590, %s593
      %p599 = scmp.eq.s32.totalorder %s32, 0
      %p600 = por %p598, %p599
      %p601 = scmp.ne.s32.totalorder %s590, %s593
      %p602 = scmp.eq.s32.totalorder %s37, 1
      %p603 = por %p601, %p602
      %p604 = scmp.ne.s32.totalorder %s593, %s594
      %p605 = scmp.eq.s32.totalorder %s37, 0
      %p606 = por %p604, %p605
      %p607 = scmp.ne.s32.totalorder %s593, %s594
      %p608 = scmp.eq.s32.totalorder %s38, 1
      %p609 = por %p607, %p608
      %p611 = scmp.ne.s32.totalorder %s594, %s610
      %p612 = scmp.eq.s32.totalorder %s38, 0
      %p613 = por %p611, %p612
      %s614 = ssub.s32 %s40, %s47
      %p615 = scmp.eq.s32.totalorder %s614, 0
      %s617 = sadd.s32 %s616, 1
      %s618 = scalar_select %p615, %s616, %s617
      %p621 = pneg %p615
      %p622 = scmp.eq.s32.totalorder %s32, 1
      %p623 = por %p621, %p622
      %p624 = scmp.ne.s32.totalorder %s616, %s619
      %p625 = scmp.eq.s32.totalorder %s32, 0
      %p626 = por %p624, %p625
      %p627 = scmp.ne.s32.totalorder %s616, %s619
      %p628 = scmp.eq.s32.totalorder %s37, 1
      %p629 = por %p627, %p628
      %p630 = scmp.ne.s32.totalorder %s619, %s620
      %p631 = scmp.eq.s32.totalorder %s37, 0
      %p632 = por %p630, %p631
      %p633 = scmp.ne.s32.totalorder %s619, %s620
      %p634 = scmp.eq.s32.totalorder %s38, 1
      %p635 = por %p633, %p634
      %p637 = scmp.ne.s32.totalorder %s620, %s636
      %p638 = scmp.eq.s32.totalorder %s38, 0
      %p639 = por %p637, %p638
      %s640 = ssub.s32 %s39, %s51
      %p641 = scmp.eq.s32.totalorder %s640, 0
      %s643 = sadd.s32 %s642, 1
      %s644 = scalar_select %p641, %s642, %s643
      %p647 = pneg %p641
      %p648 = scmp.eq.s32.totalorder %s32, 1
      %p649 = por %p647, %p648
      %p650 = scmp.ne.s32.totalorder %s642, %s645
      %p651 = scmp.eq.s32.totalorder %s32, 0
      %p652 = por %p650, %p651
      %p653 = scmp.ne.s32.totalorder %s642, %s645
      %p654 = scmp.eq.s32.totalorder %s37, 1
      %p655 = por %p653, %p654
      %p656 = scmp.ne.s32.totalorder %s645, %s646
      %p657 = scmp.eq.s32.totalorder %s37, 0
      %p658 = por %p656, %p657
      %p659 = scmp.ne.s32.totalorder %s645, %s646
      %p660 = scmp.eq.s32.totalorder %s38, 1
      %p661 = por %p659, %p660
      %p663 = scmp.ne.s32.totalorder %s646, %s662
      %p664 = scmp.eq.s32.totalorder %s38, 0
      %p665 = por %p663, %p664
      %p666 = scmp.le.s32.totalorder 1, %s32
      %p667 = scmp.lt.s32.totalorder %s32, 3
      %p668 = pnand %p666, %p667
      %p669 = pneg %p668
      // Predicated region
      $region9: #{tpu_custom_call.1} parent=5 // pred_check
        _
      $region10: #{tpu_custom_call.1} parent=5 // pred_check_branch
        %671 = sbr.rel (%p668) target = $region12
      $region11: #{tpu_custom_call.1} parent=5 // pred_region
        %s672 = ssub.s32 %s32, 1
        // Predicated region
        $region13: #{tpu_custom_call.1} parent=11 // pred_check
          %p673 = pneg %p70
        $region14: #{tpu_custom_call.1} parent=11 // pred_check_branch
          %675 = sbr.rel (%p673) target = $region16
        $region15: #{tpu_custom_call.1} parent=11 // pred_region
          %s676 = smul.u32 2, %s41
          %p677 = scmp.lt.s32.totalorder %s676, 1
          %s678 = scalar_select %p677, %s676, 1
          %s679 = smul.addr %s678, 4
          %s680 = scalar_lea.vmem %s0, %s679
          %s681 = smul.u32 2, %s41
        $region16: #{tpu_custom_call.1} parent=11 // pred_fallthru
          _
        // Predicated region
        $region17: #{tpu_custom_call.1} parent=11 // pred_check
          %p682 = pneg %p96
        $region18: #{tpu_custom_call.1} parent=11 // pred_check_branch
          %684 = sbr.rel (%p682) target = $region20
        $region19: #{tpu_custom_call.1} parent=11 // pred_region
          %s685 = smul.u32 2, %s41
          %p686 = scmp.lt.s32.totalorder %s685, 1
          %s687 = scalar_select %p686, %s685, 1
          %s688 = smul.addr %s687, 8
          %s689 = scalar_lea.vmem %s1, %s688
          %s690 = smul.u32 2, %s41
        $region20: #{tpu_custom_call.1} parent=11 // pred_fallthru
          _
        // Predicated region
        $region21: #{tpu_custom_call.1} parent=11 // pred_check
          %p691 = pneg %p122
        $region22: #{tpu_custom_call.1} parent=11 // pred_check_branch
          %693 = sbr.rel (%p691) target = $region24
        $region23: #{tpu_custom_call.1} parent=11 // pred_region
          %s694 = smul.u32 16, %s41
          %s696 = ssub.s32 1024, 1024
          %697 = vsyncadd [#allocation4], %s696
          %s698 = smul.addr %s694, 64
          %s699 = scalar_lea.hbm %s2, %s698
          %s700 = sshll.u32 [#allocation3], 4
          %s701 = int_to_ptr.vmem [resolvable:$true] %s700
          %706 = dma.hbm_to_vmem [thread:$0]  %s699, 1024, %s701, [#allocation4], 64, 64, 4
        $region24: #{tpu_custom_call.1} parent=11 // pred_fallthru
          _
        // Predicated region
        $region25: #{tpu_custom_call.1} parent=11 // pred_check
          %p707 = pneg %p148
        $region26: #{tpu_custom_call.1} parent=11 // pred_check_branch
          %709 = sbr.rel (%p707) target = $region28
        $region27: #{tpu_custom_call.1} parent=11 // pred_region
          %s710 = smul.u32 16, %s41
          %s712 = ssub.s32 1024, 1024
          %713 = vsyncadd [#allocation7], %s712
          %s714 = smul.addr %s710, 64
          %s715 = scalar_lea.hbm %s3, %s714
          %s716 = sshll.u32 [#allocation6], 4
          %s717 = int_to_ptr.vmem [resolvable:$true] %s716
          %722 = dma.hbm_to_vmem [thread:$0]  %s715, 1024, %s717, [#allocation7], 64, 64, 4
        $region28: #{tpu_custom_call.1} parent=11 // pred_fallthru
          _
        // Predicated region
        $region29: #{tpu_custom_call.1} parent=11 // pred_check
          %p723 = pneg %p174
        $region30: #{tpu_custom_call.1} parent=11 // pred_check_branch
          %725 = sbr.rel (%p723) target = $region32
        $region31: #{tpu_custom_call.1} parent=11 // pred_region
          %s726 = smul.u32 2, %s41
          %p727 = scmp.lt.s32.totalorder %s726, 1
          %s728 = scalar_select %p727, %s726, 1
          %s729 = smul.addr %s728, 8
          %s730 = scalar_lea.vmem %s4, %s729
          %s731 = smul.u32 2, %s41
        $region32: #{tpu_custom_call.1} parent=11 // pred_fallthru
          _
        // Predicated region
        $region33: #{tpu_custom_call.1} parent=11 // pred_check
          %p732 = pneg %p195
        $region34: #{tpu_custom_call.1} parent=11 // pred_check_branch
          %734 = sbr.rel (%p732) target = $region36
        $region35: #{tpu_custom_call.1} parent=11 // pred_region
          _
        $region36: #{tpu_custom_call.1} parent=11 // pred_fallthru
          _
        // Predicated region
        $region37: #{tpu_custom_call.1} parent=11 // pred_check
          %p735 = pneg %p216
        $region38: #{tpu_custom_call.1} parent=11 // pred_check_branch
          %737 = sbr.rel (%p735) target = $region40
        $region39: #{tpu_custom_call.1} parent=11 // pred_region
          _
        $region40: #{tpu_custom_call.1} parent=11 // pred_fallthru
          _
      $region12: #{tpu_custom_call.1} parent=5 // pred_fallthru
        _
      %p738 = scmp.lt.s32.totalorder %s32, 2
      // Predicated region
      $region41: #{tpu_custom_call.1} parent=5 // pred_check
        %p739 = pneg %p738
      $region42: #{tpu_custom_call.1} parent=5 // pred_check_branch
        %741 = sbr.rel (%p739) target = $region44
      $region43: #{tpu_custom_call.1} parent=5 // pred_region
        // Predicated region
        $region45: #{tpu_custom_call.1} parent=43 // pred_check
          %p742 = pneg %p236
        $region46: #{tpu_custom_call.1} parent=43 // pred_check_branch
          %744 = sbr.rel (%p742) target = $region48
        $region47: #{tpu_custom_call.1} parent=43 // pred_region
          %p745 = scmp.lt.s32.totalorder %s40, 1
          %s746 = scalar_select %p745, %s40, 1
          %s747 = smul.addr %s746, 16
          %s748 = smul.addr %s747, 4
          %s749 = scalar_lea.vmem %s7, %s748
        $region48: #{tpu_custom_call.1} parent=43 // pred_fallthru
          _
        // Predicated region
        $region49: #{tpu_custom_call.1} parent=43 // pred_check
          %p750 = pneg %p262
        $region50: #{tpu_custom_call.1} parent=43 // pred_check_branch
          %752 = sbr.rel (%p750) target = $region52
        $region51: #{tpu_custom_call.1} parent=43 // pred_region
          %p753 = scmp.lt.s32.totalorder %s40, 1
          %s754 = scalar_select %p753, %s40, 1
          %s755 = scalar_lea.vmem %s8, %s754
        $region52: #{tpu_custom_call.1} parent=43 // pred_fallthru
          _
        // Predicated region
        $region53: #{tpu_custom_call.1} parent=43 // pred_check
          %p756 = pneg %p288
        $region54: #{tpu_custom_call.1} parent=43 // pred_check_branch
          %758 = sbr.rel (%p756) target = $region56
        $region55: #{tpu_custom_call.1} parent=43 // pred_region
          %s759 = sand.u32 %s32, 1
          %s760 = scalar_lea.sflag [#allocation4], %s759
          %s761 = sand.u32 %s278, 1
          %s762 = smul.addr %s761, 64
          %s763 = scalar_lea.vmem [#allocation8], %s762
          %s765 = ssub.s32 1024, 1024
          %766 = vsyncadd %s760, %s765
          %s767 = smul.addr %s40, 16
          %s768 = smul.addr %s767, 64
          %s769 = scalar_lea.hbm %s9, %s768
          %s770 = sshll.u32 %s763, 4
          %s771 = int_to_ptr.vmem [resolvable:$true] %s770
          %776 = dma.hbm_to_vmem [thread:$0]  %s769, 1024, %s771, %s760, 64, 64, 4
        $region56: #{tpu_custom_call.1} parent=43 // pred_fallthru
          _
        // Predicated region
        $region57: #{tpu_custom_call.1} parent=43 // pred_check
          %p777 = pneg %p314
        $region58: #{tpu_custom_call.1} parent=43 // pred_check_branch
          %779 = sbr.rel (%p777) target = $region60
        $region59: #{tpu_custom_call.1} parent=43 // pred_region
          %p780 = scmp.lt.s32.totalorder %s40, 1
          %s781 = scalar_select %p780, %s40, 1
          %s782 = scalar_lea.vmem %s10, %s781
        $region60: #{tpu_custom_call.1} parent=43 // pred_fallthru
          _
        // Predicated region
        $region61: #{tpu_custom_call.1} parent=43 // pred_check
          %p783 = pneg %p340
        $region62: #{tpu_custom_call.1} parent=43 // pred_check_branch
          %785 = sbr.rel (%p783) target = $region64
        $region63: #{tpu_custom_call.1} parent=43 // pred_region
          %s786 = sand.u32 %s32, 1
          %s787 = scalar_lea.sflag [#allocation4], %s786
          %s788 = sand.u32 %s330, 1
          %s789 = smul.addr %s788, 64
          %s790 = scalar_lea.vmem [#allocation9], %s789
          %s792 = ssub.s32 1024, 1024
          %793 = vsyncadd %s787, %s792
          %s794 = smul.addr %s40, 16
          %s795 = smul.addr %s794, 64
          %s796 = scalar_lea.hbm %s11, %s795
          %s797 = sshll.u32 %s790, 4
          %s798 = int_to_ptr.vmem [resolvable:$true] %s797
          %803 = dma.hbm_to_vmem [thread:$0]  %s796, 1024, %s798, %s787, 64, 64, 4
        $region64: #{tpu_custom_call.1} parent=43 // pred_fallthru
          _
        // Predicated region
        $region65: #{tpu_custom_call.1} parent=43 // pred_check
          %p804 = pneg %p366
        $region66: #{tpu_custom_call.1} parent=43 // pred_check_branch
          %806 = sbr.rel (%p804) target = $region68
        $region67: #{tpu_custom_call.1} parent=43 // pred_region
          %s807 = sand.u32 %s32, 1
          %s808 = scalar_lea.sflag [#allocation4], %s807
          %s809 = sand.u32 %s356, 1
          %s810 = smul.addr %s809, 64
          %s811 = scalar_lea.vmem [#allocation10], %s810
          %s813 = ssub.s32 1024, 1024
          %814 = vsyncadd %s808, %s813
          %s815 = smul.addr %s40, 16
          %s816 = smul.addr %s815, 64
          %s817 = scalar_lea.hbm %s12, %s816
          %s818 = sshll.u32 %s811, 4
          %s819 = int_to_ptr.vmem [resolvable:$true] %s818
          %824 = dma.hbm_to_vmem [thread:$0]  %s817, 1024, %s819, %s808, 64, 64, 4
        $region68: #{tpu_custom_call.1} parent=43 // pred_fallthru
          _
        // Predicated region
        $region69: #{tpu_custom_call.1} parent=43 // pred_check
          %p825 = pneg %p392
        $region70: #{tpu_custom_call.1} parent=43 // pred_check_branch
          %827 = sbr.rel (%p825) target = $region72
        $region71: #{tpu_custom_call.1} parent=43 // pred_region
          %s828 = sand.u32 %s32, 1
          %s829 = scalar_lea.sflag [#allocation4], %s828
          %s830 = sand.u32 %s382, 1
          %s831 = smul.addr %s830, 64
          %s832 = scalar_lea.vmem [#allocation11], %s831
          %s834 = ssub.s32 1024, 1024
          %835 = vsyncadd %s829, %s834
          %s836 = smul.addr %s40, 16
          %s837 = smul.addr %s836, 64
          %s838 = scalar_lea.hbm %s13, %s837
          %s839 = sshll.u32 %s832, 4
          %s840 = int_to_ptr.vmem [resolvable:$true] %s839
          %845 = dma.hbm_to_vmem [thread:$0]  %s838, 1024, %s840, %s829, 64, 64, 4
        $region72: #{tpu_custom_call.1} parent=43 // pred_fallthru
          _
        // Predicated region
        $region73: #{tpu_custom_call.1} parent=43 // pred_check
          %p846 = pneg %p418
        $region74: #{tpu_custom_call.1} parent=43 // pred_check_branch
          %848 = sbr.rel (%p846) target = $region76
        $region75: #{tpu_custom_call.1} parent=43 // pred_region
          %p849 = scmp.lt.s32.totalorder %s40, 1
          %s850 = scalar_select %p849, %s40, 1
          %s851 = scalar_lea.vmem %s14, %s850
        $region76: #{tpu_custom_call.1} parent=43 // pred_fallthru
          _
        // Predicated region
        $region77: #{tpu_custom_call.1} parent=43 // pred_check
          %p852 = pneg %p444
        $region78: #{tpu_custom_call.1} parent=43 // pred_check_branch
          %854 = sbr.rel (%p852) target = $region80
        $region79: #{tpu_custom_call.1} parent=43 // pred_region
          %s855 = sand.u32 %s32, 1
          %s856 = scalar_lea.sflag [#allocation4], %s855
          %s857 = sand.u32 %s434, 1
          %s858 = smul.addr %s857, 128
          %s859 = scalar_lea.vmem [#allocation12], %s858
          %s861 = ssub.s32 2048, 2048
          %862 = vsyncadd %s856, %s861
          %s863 = smul.addr %s40, 32
          %s864 = smul.addr %s863, 64
          %s865 = scalar_lea.hbm %s15, %s864
          %s866 = sshll.u32 %s859, 4
          %s867 = int_to_ptr.vmem [resolvable:$true] %s866
          %872 = dma.hbm_to_vmem [thread:$0]  %s865, 2048, %s867, %s856, 128, 128, 8
        $region80: #{tpu_custom_call.1} parent=43 // pred_fallthru
          _
        // Predicated region
        $region81: #{tpu_custom_call.1} parent=43 // pred_check
          %p873 = pneg %p470
        $region82: #{tpu_custom_call.1} parent=43 // pred_check_branch
          %875 = sbr.rel (%p873) target = $region84
        $region83: #{tpu_custom_call.1} parent=43 // pred_region
          %p876 = scmp.lt.s32.totalorder %s40, 1
          %s877 = scalar_select %p876, %s40, 1
          %s878 = smul.addr %s877, 2
          %s879 = scalar_lea.vmem %s16, %s878
        $region84: #{tpu_custom_call.1} parent=43 // pred_fallthru
          _
        // Predicated region
        $region85: #{tpu_custom_call.1} parent=43 // pred_check
          %p880 = pneg %p496
        $region86: #{tpu_custom_call.1} parent=43 // pred_check_branch
          %882 = sbr.rel (%p880) target = $region88
        $region87: #{tpu_custom_call.1} parent=43 // pred_region
          %s883 = sand.u32 %s32, 1
          %s884 = scalar_lea.sflag [#allocation4], %s883
          %s885 = sand.u32 %s486, 1
          %s886 = smul.addr %s885, 128
          %s887 = scalar_lea.vmem [#allocation13], %s886
          %s889 = ssub.s32 2048, 2048
          %890 = vsyncadd %s884, %s889
          %s891 = smul.addr %s40, 32
          %s892 = smul.addr %s891, 64
          %s893 = scalar_lea.hbm %s17, %s892
          %s894 = sshll.u32 %s887, 4
          %s895 = int_to_ptr.vmem [resolvable:$true] %s894
          %900 = dma.hbm_to_vmem [thread:$0]  %s893, 2048, %s895, %s884, 64, 64, 4
        $region88: #{tpu_custom_call.1} parent=43 // pred_fallthru
          _
        // Predicated region
        $region89: #{tpu_custom_call.1} parent=43 // pred_check
          %p901 = pneg %p522
        $region90: #{tpu_custom_call.1} parent=43 // pred_check_branch
          %903 = sbr.rel (%p901) target = $region92
        $region91: #{tpu_custom_call.1} parent=43 // pred_region
          %p904 = scmp.lt.s32.totalorder %s40, 1
          %s905 = scalar_select %p904, %s40, 1
          %s906 = scalar_lea.vmem %s18, %s905
        $region92: #{tpu_custom_call.1} parent=43 // pred_fallthru
          _
        // Predicated region
        $region93: #{tpu_custom_call.1} parent=43 // pred_check
          %p907 = pneg %p548
        $region94: #{tpu_custom_call.1} parent=43 // pred_check_branch
          %909 = sbr.rel (%p907) target = $region96
        $region95: #{tpu_custom_call.1} parent=43 // pred_region
          %p910 = scmp.lt.s32.totalorder %s40, 1
          %s911 = scalar_select %p910, %s40, 1
          %s912 = scalar_lea.vmem %s19, %s911
        $region96: #{tpu_custom_call.1} parent=43 // pred_fallthru
          _
        // Predicated region
        $region97: #{tpu_custom_call.1} parent=43 // pred_check
          %p913 = pneg %p574
        $region98: #{tpu_custom_call.1} parent=43 // pred_check_branch
          %915 = sbr.rel (%p913) target = $region100
        $region99: #{tpu_custom_call.1} parent=43 // pred_region
          %p916 = scmp.lt.s32.totalorder %s40, 1
          %s917 = scalar_select %p916, %s40, 1
          %s918 = scalar_lea.vmem %s20, %s917
        $region100: #{tpu_custom_call.1} parent=43 // pred_fallthru
          _
        // Predicated region
        $region101: #{tpu_custom_call.1} parent=43 // pred_check
          %p919 = pneg %p600
        $region102: #{tpu_custom_call.1} parent=43 // pred_check_branch
          %921 = sbr.rel (%p919) target = $region104
        $region103: #{tpu_custom_call.1} parent=43 // pred_region
          %p922 = scmp.lt.s32.totalorder %s40, 1
          %s923 = scalar_select %p922, %s40, 1
          %s924 = scalar_lea.vmem %s21, %s923
        $region104: #{tpu_custom_call.1} parent=43 // pred_fallthru
          _
        // Predicated region
        $region105: #{tpu_custom_call.1} parent=43 // pred_check
          %p925 = pneg %p626
        $region106: #{tpu_custom_call.1} parent=43 // pred_check_branch
          %927 = sbr.rel (%p925) target = $region108
        $region107: #{tpu_custom_call.1} parent=43 // pred_region
          %p928 = scmp.lt.s32.totalorder %s40, 1
          %s929 = scalar_select %p928, %s40, 1
          %s930 = scalar_lea.vmem %s22, %s929
        $region108: #{tpu_custom_call.1} parent=43 // pred_fallthru
          _
      $region44: #{tpu_custom_call.1} parent=5 // pred_fallthru
        _
      %p931 = scmp.le.s32.totalorder 1, %s32
      %p932 = scmp.lt.s32.totalorder %s32, 3
      %p933 = pnand %p931, %p932
      %p934 = pneg %p933
      // Predicated region
      $region109: #{tpu_custom_call.1} parent=5 // pred_check
        _
      $region110: #{tpu_custom_call.1} parent=5 // pred_check_branch
        %936 = sbr.rel (%p933) target = $region112
      $region111: #{tpu_custom_call.1} parent=5 // pred_region
        %s937 = ssub.s32 %s32, 1
        // Predicated region
        $region113: #{tpu_custom_call.1} parent=111 // pred_check
          %p938 = pneg %p122
        $region114: #{tpu_custom_call.1} parent=111 // pred_check_branch
          %940 = sbr.rel (%p938) target = $region116
        $region115: #{tpu_custom_call.1} parent=111 // pred_region
          %941 = dma.done [#allocation4], 1024
        $region116: #{tpu_custom_call.1} parent=111 // pred_fallthru
          _
        // Predicated region
        $region117: #{tpu_custom_call.1} parent=111 // pred_check
          %p942 = pneg %p148
        $region118: #{tpu_custom_call.1} parent=111 // pred_check_branch
          %944 = sbr.rel (%p942) target = $region120
        $region119: #{tpu_custom_call.1} parent=111 // pred_region
          %945 = dma.done [#allocation7], 1024
        $region120: #{tpu_custom_call.1} parent=111 // pred_fallthru
          _
        %s946 = sand.u32 %s37, 1
        %s947 = scalar_lea.sflag [#allocation4], %s946
        %s948 = sand.u32 %s281, 1
        %s949 = smul.addr %s948, 64
        %s950 = scalar_lea.vmem [#allocation8], %s949
        // Predicated region
        $region121: #{tpu_custom_call.1} parent=111 // pred_check
          %p951 = pneg %p294
        $region122: #{tpu_custom_call.1} parent=111 // pred_check_branch
          %953 = sbr.rel (%p951) target = $region124
        $region123: #{tpu_custom_call.1} parent=111 // pred_region
          %954 = dma.done %s947, 1024
        $region124: #{tpu_custom_call.1} parent=111 // pred_fallthru
          _
        %s955 = sand.u32 %s37, 1
        %s956 = scalar_lea.sflag [#allocation4], %s955
        %s957 = sand.u32 %s333, 1
        %s958 = smul.addr %s957, 64
        %s959 = scalar_lea.vmem [#allocation9], %s958
        // Predicated region
        $region125: #{tpu_custom_call.1} parent=111 // pred_check
          %p960 = pneg %p346
        $region126: #{tpu_custom_call.1} parent=111 // pred_check_branch
          %962 = sbr.rel (%p960) target = $region128
        $region127: #{tpu_custom_call.1} parent=111 // pred_region
          %963 = dma.done %s956, 1024
        $region128: #{tpu_custom_call.1} parent=111 // pred_fallthru
          _
        %s964 = sand.u32 %s37, 1
        %s965 = scalar_lea.sflag [#allocation4], %s964
        %s966 = sand.u32 %s359, 1
        %s967 = smul.addr %s966, 64
        %s968 = scalar_lea.vmem [#allocation10], %s967
        // Predicated region
        $region129: #{tpu_custom_call.1} parent=111 // pred_check
          %p969 = pneg %p372
        $region130: #{tpu_custom_call.1} parent=111 // pred_check_branch
          %971 = sbr.rel (%p969) target = $region132
        $region131: #{tpu_custom_call.1} parent=111 // pred_region
          %972 = dma.done %s965, 1024
        $region132: #{tpu_custom_call.1} parent=111 // pred_fallthru
          _
        %s973 = sand.u32 %s37, 1
        %s974 = scalar_lea.sflag [#allocation4], %s973
        %s975 = sand.u32 %s385, 1
        %s976 = smul.addr %s975, 64
        %s977 = scalar_lea.vmem [#allocation11], %s976
        // Predicated region
        $region133: #{tpu_custom_call.1} parent=111 // pred_check
          %p978 = pneg %p398
        $region134: #{tpu_custom_call.1} parent=111 // pred_check_branch
          %980 = sbr.rel (%p978) target = $region136
        $region135: #{tpu_custom_call.1} parent=111 // pred_region
          %981 = dma.done %s974, 1024
        $region136: #{tpu_custom_call.1} parent=111 // pred_fallthru
          _
        %s982 = sand.u32 %s37, 1
        %s983 = scalar_lea.sflag [#allocation4], %s982
        %s984 = sand.u32 %s437, 1
        %s985 = smul.addr %s984, 128
        %s986 = scalar_lea.vmem [#allocation12], %s985
        // Predicated region
        $region137: #{tpu_custom_call.1} parent=111 // pred_check
          %p987 = pneg %p450
        $region138: #{tpu_custom_call.1} parent=111 // pred_check_branch
          %989 = sbr.rel (%p987) target = $region140
        $region139: #{tpu_custom_call.1} parent=111 // pred_region
          %990 = dma.done %s983, 2048
        $region140: #{tpu_custom_call.1} parent=111 // pred_fallthru
          _
        %s991 = sand.u32 %s37, 1
        %s992 = scalar_lea.sflag [#allocation4], %s991
        %s993 = sand.u32 %s489, 1
        %s994 = smul.addr %s993, 128
        %s995 = scalar_lea.vmem [#allocation13], %s994
        // Predicated region
        $region141: #{tpu_custom_call.1} parent=111 // pred_check
          %p996 = pneg %p502
        $region142: #{tpu_custom_call.1} parent=111 // pred_check_branch
          %998 = sbr.rel (%p996) target = $region144
        $region143: #{tpu_custom_call.1} parent=111 // pred_region
          %999 = dma.done %s992, 2048
        $region144: #{tpu_custom_call.1} parent=111 // pred_fallthru
          _
        %s1000 = smul.u32 2, %s41
        %p1001 = scmp.lt.s32.totalorder %s1000, 1
        %s1002 = scalar_select %p1001, %s1000, 1
        %s1003 = smul.addr %s1002, 4
        %s1004 = scalar_lea.vmem %s0, %s1003
        %p1005 = pneg %p70
        %p1006 = pneg %p67
        %s1007 = smul.u32 2, %s41
        %p1008 = scmp.lt.s32.totalorder %s1007, 1
        %s1009 = scalar_select %p1008, %s1007, 1
        %s1010 = smul.addr %s1009, 8
        %s1011 = scalar_lea.vmem %s1, %s1010
        %p1012 = pneg %p96
        %p1013 = pneg %p93
        %p1014 = pneg %p122
        %p1015 = pneg %p119
        %p1016 = pneg %p148
        %p1017 = pneg %p145
        %s1018 = smul.u32 2, %s41
        %p1019 = scmp.lt.s32.totalorder %s1018, 1
        %s1020 = scalar_select %p1019, %s1018, 1
        %s1021 = smul.addr %s1020, 8
        %s1022 = scalar_lea.vmem %s4, %s1021
        %p1023 = pneg %p174
        %p1024 = pneg %p171
        %p1025 = pneg %p195
        %p1026 = pneg %p192
        %p1027 = pneg %p216
        %p1028 = pneg %p213
        %p1029 = scmp.lt.s32.totalorder %s42, 1
        %s1030 = scalar_select %p1029, %s42, 1
        %s1031 = smul.addr %s1030, 16
        %s1032 = smul.addr %s1031, 4
        %s1033 = scalar_lea.vmem %s7, %s1032
        %p1034 = pneg %p242
        %p1035 = pneg %p239
        %p1036 = scmp.lt.s32.totalorder %s42, 1
        %s1037 = scalar_select %p1036, %s42, 1
        %s1038 = scalar_lea.vmem %s8, %s1037
        %p1039 = pneg %p268
        %p1040 = pneg %p265
        %s1041 = sand.u32 %s37, 1
        %s1042 = scalar_lea.sflag [#allocation4], %s1041
        %s1043 = sand.u32 %s281, 1
        %s1044 = smul.addr %s1043, 64
        %s1045 = scalar_lea.vmem [#allocation8], %s1044
        %p1046 = pneg %p294
        %p1047 = pneg %p291
        %p1048 = scmp.lt.s32.totalorder %s42, 1
        %s1049 = scalar_select %p1048, %s42, 1
        %s1050 = scalar_lea.vmem %s10, %s1049
        %p1051 = pneg %p320
        %p1052 = pneg %p317
        %s1053 = sand.u32 %s37, 1
        %s1054 = scalar_lea.sflag [#allocation4], %s1053
        %s1055 = sand.u32 %s333, 1
        %s1056 = smul.addr %s1055, 64
        %s1057 = scalar_lea.vmem [#allocation9], %s1056
        %p1058 = pneg %p346
        %p1059 = pneg %p343
        %s1060 = sand.u32 %s37, 1
        %s1061 = scalar_lea.sflag [#allocation4], %s1060
        %s1062 = sand.u32 %s359, 1
        %s1063 = smul.addr %s1062, 64
        %s1064 = scalar_lea.vmem [#allocation10], %s1063
        %p1065 = pneg %p372
        %p1066 = pneg %p369
        %s1067 = sand.u32 %s37, 1
        %s1068 = scalar_lea.sflag [#allocation4], %s1067
        %s1069 = sand.u32 %s385, 1
        %s1070 = smul.addr %s1069, 64
        %s1071 = scalar_lea.vmem [#allocation11], %s1070
        %p1072 = pneg %p398
        %p1073 = pneg %p395
        %p1074 = scmp.lt.s32.totalorder %s42, 1
        %s1075 = scalar_select %p1074, %s42, 1
        %s1076 = scalar_lea.vmem %s14, %s1075
        %p1077 = pneg %p424
        %p1078 = pneg %p421
        %s1079 = sand.u32 %s37, 1
        %s1080 = scalar_lea.sflag [#allocation4], %s1079
        %s1081 = sand.u32 %s437, 1
        %s1082 = smul.addr %s1081, 128
        %s1083 = scalar_lea.vmem [#allocation12], %s1082
        %p1084 = pneg %p450
        %p1085 = pneg %p447
        %p1086 = scmp.lt.s32.totalorder %s42, 1
        %s1087 = scalar_select %p1086, %s42, 1
        %s1088 = smul.addr %s1087, 2
        %s1089 = scalar_lea.vmem %s16, %s1088
        %p1090 = pneg %p476
        %p1091 = pneg %p473
        %s1092 = sand.u32 %s37, 1
        %s1093 = scalar_lea.sflag [#allocation4], %s1092
        %s1094 = sand.u32 %s489, 1
        %s1095 = smul.addr %s1094, 128
        %s1096 = scalar_lea.vmem [#allocation13], %s1095
        %p1097 = pneg %p502
        %p1098 = pneg %p499
        %p1099 = scmp.lt.s32.totalorder %s42, 1
        %s1100 = scalar_select %p1099, %s42, 1
        %s1101 = scalar_lea.vmem %s18, %s1100
        %p1102 = pneg %p528
        %p1103 = pneg %p525
        %p1104 = scmp.lt.s32.totalorder %s42, 1
        %s1105 = scalar_select %p1104, %s42, 1
        %s1106 = scalar_lea.vmem %s19, %s1105
        %p1107 = pneg %p554
        %p1108 = pneg %p551
        %p1109 = scmp.lt.s32.totalorder %s42, 1
        %s1110 = scalar_select %p1109, %s42, 1
        %s1111 = scalar_lea.vmem %s20, %s1110
        %p1112 = pneg %p580
        %p1113 = pneg %p577
        %p1114 = scmp.lt.s32.totalorder %s42, 1
        %s1115 = scalar_select %p1114, %s42, 1
        %s1116 = scalar_lea.vmem %s21, %s1115
        %p1117 = pneg %p606
        %p1118 = pneg %p603
        %p1119 = scmp.lt.s32.totalorder %s42, 1
        %s1120 = scalar_select %p1119, %s42, 1
        %s1121 = scalar_lea.vmem %s22, %s1120
        %p1122 = pneg %p632
        %p1123 = pneg %p629
        %p1124 = pneg %p658
        %p1125 = pneg %p655
        %s1126 = smul.u32 2, %s41
        %p1127 = scmp.lt.s32.totalorder %s1126, 1
        %s1128 = scalar_select %p1127, %s1126, 1
        %s1129 = smul.addr %s1128, 4
        %s1130 = scalar_lea.vmem %s0, %s1129
        %s1131 = smul.u32 2, %s41
        %s1132 = smul.u32 2, %s41
        %p1133 = scmp.lt.s32.totalorder %s1132, 1
        %s1134 = scalar_select %p1133, %s1132, 1
        %s1135 = smul.addr %s1134, 8
        %s1136 = scalar_lea.vmem %s1, %s1135
        %s1137 = smul.u32 2, %s41
        %s1138 = smul.u32 16, %s41
        %s1139 = smul.u32 16, %s41
        %s1140 = smul.u32 2, %s41
        %p1141 = scmp.lt.s32.totalorder %s1140, 1
        %s1142 = scalar_select %p1141, %s1140, 1
        %s1143 = smul.addr %s1142, 8
        %s1144 = scalar_lea.vmem %s4, %s1143
        %s1145 = smul.u32 2, %s41
        %p1146 = scmp.lt.s32.totalorder %s42, 1
        %s1147 = scalar_select %p1146, %s42, 1
        %s1148 = smul.addr %s1147, 16
        %s1149 = smul.addr %s1148, 4
        %s1150 = scalar_lea.vmem %s7, %s1149
        %p1151 = scmp.lt.s32.totalorder %s42, 1
        %s1152 = scalar_select %p1151, %s42, 1
        %s1153 = scalar_lea.vmem %s8, %s1152
        %p1154 = scmp.lt.s32.totalorder %s42, 1
        %s1155 = scalar_select %p1154, %s42, 1
        %s1156 = scalar_lea.vmem %s10, %s1155
        %p1157 = scmp.lt.s32.totalorder %s42, 1
        %s1158 = scalar_select %p1157, %s42, 1
        %s1159 = scalar_lea.vmem %s14, %s1158
        %p1160 = scmp.lt.s32.totalorder %s42, 1
        %s1161 = scalar_select %p1160, %s42, 1
        %s1162 = smul.addr %s1161, 2
        %s1163 = scalar_lea.vmem %s16, %s1162
        %p1164 = scmp.lt.s32.totalorder %s42, 1
        %s1165 = scalar_select %p1164, %s42, 1
        %s1166 = scalar_lea.vmem %s18, %s1165
        %p1167 = scmp.lt.s32.totalorder %s42, 1
        %s1168 = scalar_select %p1167, %s42, 1
        %s1169 = scalar_lea.vmem %s19, %s1168
        %p1170 = scmp.lt.s32.totalorder %s42, 1
        %s1171 = scalar_select %p1170, %s42, 1
        %s1172 = scalar_lea.vmem %s20, %s1171
        %p1173 = scmp.lt.s32.totalorder %s42, 1
        %s1174 = scalar_select %p1173, %s42, 1
        %s1175 = scalar_lea.vmem %s21, %s1174
        %p1176 = scmp.lt.s32.totalorder %s42, 1
        %s1177 = scalar_select %p1176, %s42, 1
        %s1178 = scalar_lea.vmem %s22, %s1177
        %s1179 = smul.u32 2, %s41
        %p1181 = scmp.eq.s32.totalorder %s42, 0
        // Predicated region
        $region145: #{tpu_custom_call.1} parent=111 // pred_check
          %p1182 = pneg %p1181
        $region146: #{tpu_custom_call.1} parent=111 // pred_check_branch
          %1184 = sbr.rel (%p1182) target = $region148
        $region147: #{tpu_custom_call.1} parent=111 // pred_region
          %v1185 = vld [vmem:[%s1136] sm:$0xff]
          %v1186 = vld [vmem:[%s1136 + $0x8] sm:$0xff]
          %1187 = vst [vmem:[#allocation2] sm:$0xff] %v1185
          %1188 = vst [vmem:[#allocation2 + $0x8] sm:$0xff] %v1186
        $region148: #{tpu_custom_call.1} parent=111 // pred_fallthru
          _
        %v1189 = vld [vmem:[#allocation2] sm:$0xff]
        %v1190 = vld [vmem:[#allocation2 + $0x8] sm:$0xff]
        %v1191 = vld [vmem:[%s1130] sm:$0xf]
        %v1192 = vld [vmem:[%s1130 + $0x4] sm:$0xf]
        %v1193 = vld [vmem:[#allocation3] sm:$0xf]
        %v1194 = vld [vmem:[#allocation3 + $0x4] sm:$0xf]
        %v1195 = vld [vmem:[#allocation3 + $0x8] sm:$0xf]
        %v1196 = vld [vmem:[#allocation3 + $0xc] sm:$0xf]
        %v1197 = vld [vmem:[#allocation3 + $0x10] sm:$0xf]
        %v1198 = vld [vmem:[#allocation3 + $0x14] sm:$0xf]
        %v1199 = vld [vmem:[#allocation3 + $0x18] sm:$0xf]
        %v1200 = vld [vmem:[#allocation3 + $0x1c] sm:$0xf]
        %v1201 = vld [vmem:[#allocation3 + $0x20] sm:$0xf]
        %v1202 = vld [vmem:[#allocation3 + $0x24] sm:$0xf]
        %v1203 = vld [vmem:[#allocation3 + $0x28] sm:$0xf]
        %v1204 = vld [vmem:[#allocation3 + $0x2c] sm:$0xf]
        %v1205 = vld [vmem:[#allocation3 + $0x30] sm:$0xf]
        %v1206 = vld [vmem:[#allocation3 + $0x34] sm:$0xf]
        %v1207 = vld [vmem:[#allocation3 + $0x38] sm:$0xf]
        %v1208 = vld [vmem:[#allocation3 + $0x3c] sm:$0xf]
        %v1209 = vld [vmem:[#allocation6] sm:$0xf]
        %v1210 = vld [vmem:[#allocation6 + $0x4] sm:$0xf]
        %v1211 = vld [vmem:[#allocation6 + $0x8] sm:$0xf]
        %v1212 = vld [vmem:[#allocation6 + $0xc] sm:$0xf]
        %v1213 = vld [vmem:[#allocation6 + $0x10] sm:$0xf]
        %v1214 = vld [vmem:[#allocation6 + $0x14] sm:$0xf]
        %v1215 = vld [vmem:[#allocation6 + $0x18] sm:$0xf]
        %v1216 = vld [vmem:[#allocation6 + $0x1c] sm:$0xf]
        %v1217 = vld [vmem:[#allocation6 + $0x20] sm:$0xf]
        %v1218 = vld [vmem:[#allocation6 + $0x24] sm:$0xf]
        %v1219 = vld [vmem:[#allocation6 + $0x28] sm:$0xf]
        %v1220 = vld [vmem:[#allocation6 + $0x2c] sm:$0xf]
        %v1221 = vld [vmem:[#allocation6 + $0x30] sm:$0xf]
        %v1222 = vld [vmem:[#allocation6 + $0x34] sm:$0xf]
        %v1223 = vld [vmem:[#allocation6 + $0x38] sm:$0xf]
        %v1224 = vld [vmem:[#allocation6 + $0x3c] sm:$0xf]
        %v1225 = vld [vmem:[%s1144] sm:$0xff]
        %v1226 = vld [vmem:[%s1144 + $0x8] sm:$0xff]
        %v1227 = vsub.f32 1.0, %v1225
        %v1228 = vsub.f32 1.0, %v1226
        %v1229 = vmul.f32 %v1227, 1e+31
        %v1230 = vmul.f32 %v1228, 1e+31
        %v1231 = vlaneseq
        %v1232 = vshrl.u32 %v1231, 7
        %v1233 = vsub.s32 0, %v1232
        %v1234 = vrot.slane %v1229, %v1233
        %1236 = vbcast.lane.b32.xlu0 %v1234, 256
        %v1237 = vpop.permute.xlu0 %1236
        %v1238 = vlaneseq
        %v1239 = vshrl.u32 %v1238, 7
        %v1240 = vsub.s32 1, %v1239
        %v1241 = vrot.slane %v1229, %v1240
        %1243 = vbcast.lane.b32.xlu0 %v1241, 256
        %v1244 = vpop.permute.xlu0 %1243
        %v1245 = vlaneseq
        %v1246 = vshrl.u32 %v1245, 7
        %v1247 = vsub.s32 2, %v1246
        %v1248 = vrot.slane %v1229, %v1247
        %1250 = vbcast.lane.b32.xlu0 %v1248, 256
        %v1251 = vpop.permute.xlu0 %1250
        %v1252 = vlaneseq
        %v1253 = vshrl.u32 %v1252, 7
        %v1254 = vsub.s32 3, %v1253
        %v1255 = vrot.slane %v1229, %v1254
        %1257 = vbcast.lane.b32.xlu0 %v1255, 256
        %v1258 = vpop.permute.xlu0 %1257
        %v1259 = vlaneseq
        %v1260 = vshrl.u32 %v1259, 7
        %v1261 = vsub.s32 4, %v1260
        %v1262 = vrot.slane %v1229, %v1261
        %1264 = vbcast.lane.b32.xlu0 %v1262, 256
        %v1265 = vpop.permute.xlu0 %1264
        %v1266 = vlaneseq
        %v1267 = vshrl.u32 %v1266, 7
        %v1268 = vsub.s32 5, %v1267
        %v1269 = vrot.slane %v1229, %v1268
        %1271 = vbcast.lane.b32.xlu0 %v1269, 256
        %v1272 = vpop.permute.xlu0 %1271
        %v1273 = vlaneseq
        %v1274 = vshrl.u32 %v1273, 7
        %v1275 = vsub.s32 6, %v1274
        %v1276 = vrot.slane %v1229, %v1275
        %1278 = vbcast.lane.b32.xlu0 %v1276, 256
        %v1279 = vpop.permute.xlu0 %1278
        %v1280 = vlaneseq
        %v1281 = vshrl.u32 %v1280, 7
        %v1282 = vsub.s32 7, %v1281
        %v1283 = vrot.slane %v1229, %v1282
        %1285 = vbcast.lane.b32.xlu0 %v1283, 256
        %v1286 = vpop.permute.xlu0 %1285
        %v1287 = vlaneseq
        %v1288 = vshrl.u32 %v1287, 7
        %v1289 = vsub.s32 0, %v1288
        %v1290 = vrot.slane %v1230, %v1289
        %1292 = vbcast.lane.b32.xlu0 %v1290, 256
        %v1293 = vpop.permute.xlu0 %1292
        %v1294 = vlaneseq
        %v1295 = vshrl.u32 %v1294, 7
        %v1296 = vsub.s32 1, %v1295
        %v1297 = vrot.slane %v1230, %v1296
        %1299 = vbcast.lane.b32.xlu0 %v1297, 256
        %v1300 = vpop.permute.xlu0 %1299
        %v1301 = vlaneseq
        %v1302 = vshrl.u32 %v1301, 7
        %v1303 = vsub.s32 2, %v1302
        %v1304 = vrot.slane %v1230, %v1303
        %1306 = vbcast.lane.b32.xlu0 %v1304, 256
        %v1307 = vpop.permute.xlu0 %1306
        %v1308 = vlaneseq
        %v1309 = vshrl.u32 %v1308, 7
        %v1310 = vsub.s32 3, %v1309
        %v1311 = vrot.slane %v1230, %v1310
        %1313 = vbcast.lane.b32.xlu0 %v1311, 256
        %v1314 = vpop.permute.xlu0 %1313
        %v1315 = vlaneseq
        %v1316 = vshrl.u32 %v1315, 7
        %v1317 = vsub.s32 4, %v1316
        %v1318 = vrot.slane %v1230, %v1317
        %1320 = vbcast.lane.b32.xlu0 %v1318, 256
        %v1321 = vpop.permute.xlu0 %1320
        %v1322 = vlaneseq
        %v1323 = vshrl.u32 %v1322, 7
        %v1324 = vsub.s32 5, %v1323
        %v1325 = vrot.slane %v1230, %v1324
        %1327 = vbcast.lane.b32.xlu0 %v1325, 256
        %v1328 = vpop.permute.xlu0 %1327
        %v1329 = vlaneseq
        %v1330 = vshrl.u32 %v1329, 7
        %v1331 = vsub.s32 6, %v1330
        %v1332 = vrot.slane %v1230, %v1331
        %1334 = vbcast.lane.b32.xlu0 %v1332, 256
        %v1335 = vpop.permute.xlu0 %1334
        %v1336 = vlaneseq
        %v1337 = vshrl.u32 %v1336, 7
        %v1338 = vsub.s32 7, %v1337
        %v1339 = vrot.slane %v1230, %v1338
        %1341 = vbcast.lane.b32.xlu0 %v1339, 256
        %v1342 = vpop.permute.xlu0 %1341
        %v1343 = vld [vmem:[%s1150] sm:$0xf]
        %v1344 = vld [vmem:[%s1150 + $0x4] sm:$0xf]
        %v1345 = vld [vmem:[%s1150 + $0x8] sm:$0xf]
        %v1346 = vld [vmem:[%s1150 + $0xc] sm:$0xf]
        %v1347 = vld [vmem:[%s1150 + $0x10] sm:$0xf]
        %v1348 = vld [vmem:[%s1150 + $0x14] sm:$0xf]
        %v1349 = vld [vmem:[%s1150 + $0x18] sm:$0xf]
        %v1350 = vld [vmem:[%s1150 + $0x1c] sm:$0xf]
        %v1351 = vld [vmem:[%s1150 + $0x20] sm:$0xf]
        %v1352 = vld [vmem:[%s1150 + $0x24] sm:$0xf]
        %v1353 = vld [vmem:[%s1150 + $0x28] sm:$0xf]
        %v1354 = vld [vmem:[%s1150 + $0x2c] sm:$0xf]
        %v1355 = vld [vmem:[%s1150 + $0x30] sm:$0xf]
        %v1356 = vld [vmem:[%s1150 + $0x34] sm:$0xf]
        %v1357 = vld [vmem:[%s1150 + $0x38] sm:$0xf]
        %v1358 = vld [vmem:[%s1150 + $0x3c] sm:$0xf]
        %v1359 = vld [vmem:[%s1153] sm:$0x1]
        %v1361 = vlaneseq
        %v1362 = vshrl.u32 %v1361, 7
        %v1363 = vsub.s32 0, %v1362
        %v1364 = vrot.slane %v1359, %v1363
        %v1368 = vunpack.c.l.b16 %v1191
        %v1369 = vunpack.c.l.b16 %v1192
        %v1370 = vpack.c.b16 %v1369, %v1368
        %v1388 = vunpack.c.l.b16 %v1343
        %v1389 = vunpack.c.l.b16 %v1344
        %v1390 = vunpack.c.l.b16 %v1345
        %v1391 = vunpack.c.l.b16 %v1346
        %v1392 = vunpack.c.l.b16 %v1347
        %v1393 = vunpack.c.l.b16 %v1348
        %v1394 = vunpack.c.l.b16 %v1349
        %v1395 = vunpack.c.l.b16 %v1350
        %v1396 = vunpack.c.l.b16 %v1351
        %v1397 = vunpack.c.l.b16 %v1352
        %v1398 = vunpack.c.l.b16 %v1353
        %v1399 = vunpack.c.l.b16 %v1354
        %v1400 = vunpack.c.l.b16 %v1355
        %v1401 = vunpack.c.l.b16 %v1356
        %v1402 = vunpack.c.l.b16 %v1357
        %v1403 = vunpack.c.l.b16 %v1358
        %v1404 = vpack.c.b16 %v1389, %v1388
        %v1405 = vpack.c.b16 %v1391, %v1390
        %v1406 = vpack.c.b16 %v1393, %v1392
        %v1407 = vpack.c.b16 %v1395, %v1394
        %v1408 = vpack.c.b16 %v1397, %v1396
        %v1409 = vpack.c.b16 %v1399, %v1398
        %v1410 = vpack.c.b16 %v1401, %v1400
        %v1411 = vpack.c.b16 %v1403, %v1402
        %1420 = vmatprep.subr.bf16.mxu0 0
        %1421 = vmatpush1.bf16.msra.mxu0 %v1404
        %1422 = vmatprep.subr.bf16.mxu0 0
        %1423 = vmatpush1.bf16.msra.mxu0 %v1405
        %1424 = vmatprep.subr.bf16.mxu0 0
        %1425 = vmatpush1.bf16.msra.mxu0 %v1406
        %1426 = vmatprep.subr.bf16.mxu0 0
        %1427 = vmatpush1.bf16.msra.mxu0 %v1407
        %1428 = vmatprep.subr.bf16.mxu0 0
        %1429 = vmatpush1.bf16.msra.mxu0 %v1408
        %1430 = vmatprep.subr.bf16.mxu0 0
        %1431 = vmatpush1.bf16.msra.mxu0 %v1409
        %1432 = vmatprep.subr.bf16.mxu0 0
        %1433 = vmatpush1.bf16.msra.mxu0 %v1410
        %1434 = vmatprep.subr.bf16.mxu0 0
        %1435 = vmatpush1.bf16.msra.mxu0 %v1411
        %1436 = vmatprep.subr.bf16.mxu0 0
        %1437 = vmatpush1.bf16.msra.mxu0 0
        %1438 = vmatprep.subr.bf16.mxu0 0
        %1439 = vmatpush1.bf16.msra.mxu0 0
        %1440 = vmatprep.subr.bf16.mxu0 0
        %1441 = vmatpush1.bf16.msra.mxu0 0
        %1442 = vmatprep.subr.bf16.mxu0 0
        %1443 = vmatpush1.bf16.msra.mxu0 0
        %1444 = vmatprep.subr.bf16.mxu0 0
        %1445 = vmatpush1.bf16.msra.mxu0 0
        %1446 = vmatprep.subr.bf16.mxu0 0
        %1447 = vmatpush1.bf16.msra.mxu0 0
        %1448 = vmatprep.subr.bf16.mxu0 0
        %1449 = vmatpush1.bf16.msra.mxu0 0
        %1450 = vmatprep.subr.bf16.mxu0 0
        %1451 = vmatpush1.bf16.msra.mxu0 0
        %1452 = vmatprep.mubr.bf16.mxu0 0
        %1453 = vmatmul.mubr.bf16.gmra.mrb[0].mxu0 %v1370
        %v1454 = vpop.f32.mrb[0].mxu0
        %v1455 = vadd.f32 %v1364, %v1454
        %v1456 = vpop.f32.mrb[0].mxu0
        %v1457 = vpop.f32.mrb[0].mxu0
        %v1458 = vadd.f32 %v1364, %v1457
        %v1459 = vpop.f32.mrb[0].mxu0
        %1460 = vdwg.mxu0
        %v1461 = vld [vmem:[%s950] sm:$0xf]
        %v1462 = vld [vmem:[%s950 + $0x4] sm:$0xf]
        %v1463 = vld [vmem:[%s950 + $0x8] sm:$0xf]
        %v1464 = vld [vmem:[%s950 + $0xc] sm:$0xf]
        %v1465 = vld [vmem:[%s950 + $0x10] sm:$0xf]
        %v1466 = vld [vmem:[%s950 + $0x14] sm:$0xf]
        %v1467 = vld [vmem:[%s950 + $0x18] sm:$0xf]
        %v1468 = vld [vmem:[%s950 + $0x1c] sm:$0xf]
        %v1469 = vld [vmem:[%s950 + $0x20] sm:$0xf]
        %v1470 = vld [vmem:[%s950 + $0x24] sm:$0xf]
        %v1471 = vld [vmem:[%s950 + $0x28] sm:$0xf]
        %v1472 = vld [vmem:[%s950 + $0x2c] sm:$0xf]
        %v1473 = vld [vmem:[%s950 + $0x30] sm:$0xf]
        %v1474 = vld [vmem:[%s950 + $0x34] sm:$0xf]
        %v1475 = vld [vmem:[%s950 + $0x38] sm:$0xf]
        %v1476 = vld [vmem:[%s950 + $0x3c] sm:$0xf]
        %v1477 = vld [vmem:[%s1156] sm:$0x1]
        %v1479 = vlaneseq
        %v1480 = vshrl.u32 %v1479, 7
        %v1481 = vsub.s32 0, %v1480
        %v1482 = vrot.slane %v1477, %v1481
        %v1500 = vunpack.c.l.b16 %v1193
        %v1501 = vunpack.c.l.b16 %v1194
        %v1502 = vunpack.c.l.b16 %v1195
        %v1503 = vunpack.c.l.b16 %v1196
        %v1504 = vunpack.c.l.b16 %v1197
        %v1505 = vunpack.c.l.b16 %v1198
        %v1506 = vunpack.c.l.b16 %v1199
        %v1507 = vunpack.c.l.b16 %v1200
        %v1508 = vunpack.c.l.b16 %v1201
        %v1509 = vunpack.c.l.b16 %v1202
        %v1510 = vunpack.c.l.b16 %v1203
        %v1511 = vunpack.c.l.b16 %v1204
        %v1512 = vunpack.c.l.b16 %v1205
        %v1513 = vunpack.c.l.b16 %v1206
        %v1514 = vunpack.c.l.b16 %v1207
        %v1515 = vunpack.c.l.b16 %v1208
        %v1516 = vpack.c.b16 %v1501, %v1500
        %v1517 = vpack.c.b16 %v1503, %v1502
        %v1518 = vpack.c.b16 %v1505, %v1504
        %v1519 = vpack.c.b16 %v1507, %v1506
        %v1520 = vpack.c.b16 %v1509, %v1508
        %v1521 = vpack.c.b16 %v1511, %v1510
        %v1522 = vpack.c.b16 %v1513, %v1512
        %v1523 = vpack.c.b16 %v1515, %v1514
        %v1548 = vunpack.c.l.b16 %v1461
        %v1549 = vunpack.c.l.b16 %v1462
        %v1550 = vunpack.c.l.b16 %v1463
        %v1551 = vunpack.c.l.b16 %v1464
        %v1552 = vunpack.c.l.b16 %v1465
        %v1553 = vunpack.c.l.b16 %v1466
        %v1554 = vunpack.c.l.b16 %v1467
        %v1555 = vunpack.c.l.b16 %v1468
        %v1556 = vunpack.c.l.b16 %v1469
        %v1557 = vunpack.c.l.b16 %v1470
        %v1558 = vunpack.c.l.b16 %v1471
        %v1559 = vunpack.c.l.b16 %v1472
        %v1560 = vunpack.c.l.b16 %v1473
        %v1561 = vunpack.c.l.b16 %v1474
        %v1562 = vunpack.c.l.b16 %v1475
        %v1563 = vunpack.c.l.b16 %v1476
        %v1564 = vpack.c.b16 %v1549, %v1548
        %v1565 = vpack.c.b16 %v1551, %v1550
        %v1566 = vpack.c.b16 %v1553, %v1552
        %v1567 = vpack.c.b16 %v1555, %v1554
        %v1568 = vpack.c.b16 %v1557, %v1556
        %v1569 = vpack.c.b16 %v1559, %v1558
        %v1570 = vpack.c.b16 %v1561, %v1560
        %v1571 = vpack.c.b16 %v1563, %v1562
        %1580 = vmatprep.subr.bf16.mxu0 0
        %1581 = vmatpush1.bf16.msra.mxu0 %v1564
        %1582 = vmatprep.subr.bf16.mxu0 0
        %1583 = vmatpush1.bf16.msra.mxu0 %v1565
        %1584 = vmatprep.subr.bf16.mxu0 0
        %1585 = vmatpush1.bf16.msra.mxu0 %v1566
        %1586 = vmatprep.subr.bf16.mxu0 0
        %1587 = vmatpush1.bf16.msra.mxu0 %v1567
        %1588 = vmatprep.subr.bf16.mxu0 0
        %1589 = vmatpush1.bf16.msra.mxu0 %v1568
        %1590 = vmatprep.subr.bf16.mxu0 0
        %1591 = vmatpush1.bf16.msra.mxu0 %v1569
        %1592 = vmatprep.subr.bf16.mxu0 0
        %1593 = vmatpush1.bf16.msra.mxu0 %v1570
        %1594 = vmatprep.subr.bf16.mxu0 0
        %1595 = vmatpush1.bf16.msra.mxu0 %v1571
        %1596 = vmatprep.subr.bf16.mxu0 0
        %1597 = vmatpush1.bf16.msra.mxu0 0
        %1598 = vmatprep.subr.bf16.mxu0 0
        %1599 = vmatpush1.bf16.msra.mxu0 0
        %1600 = vmatprep.subr.bf16.mxu0 0
        %1601 = vmatpush1.bf16.msra.mxu0 0
        %1602 = vmatprep.subr.bf16.mxu0 0
        %1603 = vmatpush1.bf16.msra.mxu0 0
        %1604 = vmatprep.subr.bf16.mxu0 0
        %1605 = vmatpush1.bf16.msra.mxu0 0
        %1606 = vmatprep.subr.bf16.mxu0 0
        %1607 = vmatpush1.bf16.msra.mxu0 0
        %1608 = vmatprep.subr.bf16.mxu0 0
        %1609 = vmatpush1.bf16.msra.mxu0 0
        %1610 = vmatprep.subr.bf16.mxu0 0
        %1611 = vmatpush1.bf16.msra.mxu0 0
        %1612 = vmatprep.mubr.bf16.mxu0 0
        %1613 = vmatmul.mubr.bf16.gmra.mrb[0].mxu0 %v1516
        %v1614 = vpop.f32.mrb[0].mxu0
        %v1615 = vadd.f32 %v1482, %v1614
        %v1616 = vpop.f32.mrb[0].mxu0
        %v1617 = vpop.f32.mrb[0].mxu0
        %v1618 = vadd.f32 %v1482, %v1617
        %v1619 = vpop.f32.mrb[0].mxu0
        %1620 = vmatprep.mubr.bf16.mxu0 0
        %1621 = vmatmul.mubr.bf16.gmra.mrb[0].mxu0 %v1517
        %v1622 = vpop.f32.mrb[0].mxu0
        %v1623 = vadd.f32 %v1482, %v1622
        %v1624 = vpop.f32.mrb[0].mxu0
        %v1625 = vpop.f32.mrb[0].mxu0
        %v1626 = vadd.f32 %v1482, %v1625
        %v1627 = vpop.f32.mrb[0].mxu0
        %1628 = vmatprep.mubr.bf16.mxu0 0
        %1629 = vmatmul.mubr.bf16.gmra.mrb[0].mxu0 %v1518
        %v1630 = vpop.f32.mrb[0].mxu0
        %v1631 = vadd.f32 %v1482, %v1630
        %v1632 = vpop.f32.mrb[0].mxu0
        %v1633 = vpop.f32.mrb[0].mxu0
        %v1634 = vadd.f32 %v1482, %v1633
        %v1635 = vpop.f32.mrb[0].mxu0
        %1636 = vmatprep.mubr.bf16.mxu0 0
        %1637 = vmatmul.mubr.bf16.gmra.mrb[0].mxu0 %v1519
        %v1638 = vpop.f32.mrb[0].mxu0
        %v1639 = vadd.f32 %v1482, %v1638
        %v1640 = vpop.f32.mrb[0].mxu0
        %v1641 = vpop.f32.mrb[0].mxu0
        %v1642 = vadd.f32 %v1482, %v1641
        %v1643 = vpop.f32.mrb[0].mxu0
        %1644 = vmatprep.mubr.bf16.mxu0 0
        %1645 = vmatmul.mubr.bf16.gmra.mrb[0].mxu0 %v1520
        %v1646 = vpop.f32.mrb[0].mxu0
        %v1647 = vadd.f32 %v1482, %v1646
        %v1648 = vpop.f32.mrb[0].mxu0
        %v1649 = vpop.f32.mrb[0].mxu0
        %v1650 = vadd.f32 %v1482, %v1649
        %v1651 = vpop.f32.mrb[0].mxu0
        %1652 = vmatprep.mubr.bf16.mxu0 0
        %1653 = vmatmul.mubr.bf16.gmra.mrb[0].mxu0 %v1521
        %v1654 = vpop.f32.mrb[0].mxu0
        %v1655 = vadd.f32 %v1482, %v1654
        %v1656 = vpop.f32.mrb[0].mxu0
        %v1657 = vpop.f32.mrb[0].mxu0
        %v1658 = vadd.f32 %v1482, %v1657
        %v1659 = vpop.f32.mrb[0].mxu0
        %1660 = vmatprep.mubr.bf16.mxu0 0
        %1661 = vmatmul.mubr.bf16.gmra.mrb[0].mxu0 %v1522
        %v1662 = vpop.f32.mrb[0].mxu0
        %v1663 = vadd.f32 %v1482, %v1662
        %v1664 = vpop.f32.mrb[0].mxu0
        %v1665 = vpop.f32.mrb[0].mxu0
        %v1666 = vadd.f32 %v1482, %v1665
        %v1667 = vpop.f32.mrb[0].mxu0
        %1668 = vmatprep.mubr.bf16.mxu0 0
        %1669 = vmatmul.mubr.bf16.gmra.mrb[0].mxu0 %v1523
        %v1670 = vpop.f32.mrb[0].mxu0
        %v1671 = vadd.f32 %v1482, %v1670
        %v1672 = vpop.f32.mrb[0].mxu0
        %v1673 = vpop.f32.mrb[0].mxu0
        %v1674 = vadd.f32 %v1482, %v1673
        %v1675 = vpop.f32.mrb[0].mxu0
        %1676 = vdwg.mxu0
        %v1677 = vld [vmem:[%s968] sm:$0xf]
        %v1678 = vld [vmem:[%s968 + $0x4] sm:$0xf]
        %v1679 = vld [vmem:[%s968 + $0x8] sm:$0xf]
        %v1680 = vld [vmem:[%s968 + $0xc] sm:$0xf]
        %v1681 = vld [vmem:[%s968 + $0x10] sm:$0xf]
        %v1682 = vld [vmem:[%s968 + $0x14] sm:$0xf]
        %v1683 = vld [vmem:[%s968 + $0x18] sm:$0xf]
        %v1684 = vld [vmem:[%s968 + $0x1c] sm:$0xf]
        %v1685 = vld [vmem:[%s968 + $0x20] sm:$0xf]
        %v1686 = vld [vmem:[%s968 + $0x24] sm:$0xf]
        %v1687 = vld [vmem:[%s968 + $0x28] sm:$0xf]
        %v1688 = vld [vmem:[%s968 + $0x2c] sm:$0xf]
        %v1689 = vld [vmem:[%s968 + $0x30] sm:$0xf]
        %v1690 = vld [vmem:[%s968 + $0x34] sm:$0xf]
        %v1691 = vld [vmem:[%s968 + $0x38] sm:$0xf]
        %v1692 = vld [vmem:[%s968 + $0x3c] sm:$0xf]
        %v1693 = vld [vmem:[%s977] sm:$0xf]
        %v1694 = vld [vmem:[%s977 + $0x4] sm:$0xf]
        %v1695 = vld [vmem:[%s977 + $0x8] sm:$0xf]
        %v1696 = vld [vmem:[%s977 + $0xc] sm:$0xf]
        %v1697 = vld [vmem:[%s977 + $0x10] sm:$0xf]
        %v1698 = vld [vmem:[%s977 + $0x14] sm:$0xf]
        %v1699 = vld [vmem:[%s977 + $0x18] sm:$0xf]
        %v1700 = vld [vmem:[%s977 + $0x1c] sm:$0xf]
        %v1701 = vld [vmem:[%s977 + $0x20] sm:$0xf]
        %v1702 = vld [vmem:[%s977 + $0x24] sm:$0xf]
        %v1703 = vld [vmem:[%s977 + $0x28] sm:$0xf]
        %v1704 = vld [vmem:[%s977 + $0x2c] sm:$0xf]
        %v1705 = vld [vmem:[%s977 + $0x30] sm:$0xf]
        %v1706 = vld [vmem:[%s977 + $0x34] sm:$0xf]
        %v1707 = vld [vmem:[%s977 + $0x38] sm:$0xf]
        %v1708 = vld [vmem:[%s977 + $0x3c] sm:$0xf]
        %v1725 = vunpack.c.l.b16 %v1209
        %v1726 = vunpack.c.l.b16 %v1210
        %v1727 = vunpack.c.l.b16 %v1211
        %v1728 = vunpack.c.l.b16 %v1212
        %v1729 = vunpack.c.l.b16 %v1213
        %v1730 = vunpack.c.l.b16 %v1214
        %v1731 = vunpack.c.l.b16 %v1215
        %v1732 = vunpack.c.l.b16 %v1216
        %v1733 = vunpack.c.l.b16 %v1217
        %v1734 = vunpack.c.l.b16 %v1218
        %v1735 = vunpack.c.l.b16 %v1219
        %v1736 = vunpack.c.l.b16 %v1220
        %v1737 = vunpack.c.l.b16 %v1221
        %v1738 = vunpack.c.l.b16 %v1222
        %v1739 = vunpack.c.l.b16 %v1223
        %v1740 = vunpack.c.l.b16 %v1224
        %v1741 = vpack.c.b16 %v1726, %v1725
        %v1742 = vpack.c.b16 %v1728, %v1727
        %v1743 = vpack.c.b16 %v1730, %v1729
        %v1744 = vpack.c.b16 %v1732, %v1731
        %v1745 = vpack.c.b16 %v1734, %v1733
        %v1746 = vpack.c.b16 %v1736, %v1735
        %v1747 = vpack.c.b16 %v1738, %v1737
        %v1748 = vpack.c.b16 %v1740, %v1739
        %v1773 = vunpack.c.l.b16 %v1693
        %v1774 = vunpack.c.l.b16 %v1694
        %v1775 = vunpack.c.l.b16 %v1695
        %v1776 = vunpack.c.l.b16 %v1696
        %v1777 = vunpack.c.l.b16 %v1697
        %v1778 = vunpack.c.l.b16 %v1698
        %v1779 = vunpack.c.l.b16 %v1699
        %v1780 = vunpack.c.l.b16 %v1700
        %v1781 = vunpack.c.l.b16 %v1701
        %v1782 = vunpack.c.l.b16 %v1702
        %v1783 = vunpack.c.l.b16 %v1703
        %v1784 = vunpack.c.l.b16 %v1704
        %v1785 = vunpack.c.l.b16 %v1705
        %v1786 = vunpack.c.l.b16 %v1706
        %v1787 = vunpack.c.l.b16 %v1707
        %v1788 = vunpack.c.l.b16 %v1708
        %v1789 = vpack.c.b16 %v1774, %v1773
        %v1790 = vpack.c.b16 %v1776, %v1775
        %v1791 = vpack.c.b16 %v1778, %v1777
        %v1792 = vpack.c.b16 %v1780, %v1779
        %v1793 = vpack.c.b16 %v1782, %v1781
        %v1794 = vpack.c.b16 %v1784, %v1783
        %v1795 = vpack.c.b16 %v1786, %v1785
        %v1796 = vpack.c.b16 %v1788, %v1787
        %1805 = vmatprep.subr.bf16.mxu0 0
        %1806 = vmatpush1.bf16.msra.mxu0 %v1789
        %1807 = vmatprep.subr.bf16.mxu0 0
        %1808 = vmatpush1.bf16.msra.mxu0 %v1790
        %1809 = vmatprep.subr.bf16.mxu0 0
        %1810 = vmatpush1.bf16.msra.mxu0 %v1791
        %1811 = vmatprep.subr.bf16.mxu0 0
        %1812 = vmatpush1.bf16.msra.mxu0 %v1792
        %1813 = vmatprep.subr.bf16.mxu0 0
        %1814 = vmatpush1.bf16.msra.mxu0 %v1793
        %1815 = vmatprep.subr.bf16.mxu0 0
        %1816 = vmatpush1.bf16.msra.mxu0 %v1794
        %1817 = vmatprep.subr.bf16.mxu0 0
        %1818 = vmatpush1.bf16.msra.mxu0 %v1795
        %1819 = vmatprep.subr.bf16.mxu0 0
        %1820 = vmatpush1.bf16.msra.mxu0 %v1796
        %1821 = vmatprep.subr.bf16.mxu0 0
        %1822 = vmatpush1.bf16.msra.mxu0 0
        %1823 = vmatprep.subr.bf16.mxu0 0
        %1824 = vmatpush1.bf16.msra.mxu0 0
        %1825 = vmatprep.subr.bf16.mxu0 0
        %1826 = vmatpush1.bf16.msra.mxu0 0
        %1827 = vmatprep.subr.bf16.mxu0 0
        %1828 = vmatpush1.bf16.msra.mxu0 0
        %1829 = vmatprep.subr.bf16.mxu0 0
        %1830 = vmatpush1.bf16.msra.mxu0 0
        %1831 = vmatprep.subr.bf16.mxu0 0
        %1832 = vmatpush1.bf16.msra.mxu0 0
        %1833 = vmatprep.subr.bf16.mxu0 0
        %1834 = vmatpush1.bf16.msra.mxu0 0
        %1835 = vmatprep.subr.bf16.mxu0 0
        %1836 = vmatpush1.bf16.msra.mxu0 0
        %1837 = vmatprep.mubr.bf16.mxu0 0
        %1838 = vmatmul.mubr.bf16.gmra.mrb[0].mxu0 %v1741
        %v1839 = vpop.f32.mrb[0].mxu0
        %v1840 = vadd.f32 0.0, %v1839
        %v1841 = vpop.f32.mrb[0].mxu0
        %v1842 = vpop.f32.mrb[0].mxu0
        %v1843 = vadd.f32 0.0, %v1842
        %v1844 = vpop.f32.mrb[0].mxu0
        %1845 = vmatprep.mubr.bf16.mxu0 0
        %1846 = vmatmul.mubr.bf16.gmra.mrb[0].mxu0 %v1742
        %v1847 = vpop.f32.mrb[0].mxu0
        %v1848 = vadd.f32 0.0, %v1847
        %v1849 = vpop.f32.mrb[0].mxu0
        %v1850 = vpop.f32.mrb[0].mxu0
        %v1851 = vadd.f32 0.0, %v1850
        %v1852 = vpop.f32.mrb[0].mxu0
        %1853 = vmatprep.mubr.bf16.mxu0 0
        %1854 = vmatmul.mubr.bf16.gmra.mrb[0].mxu0 %v1743
        %v1855 = vpop.f32.mrb[0].mxu0
        %v1856 = vadd.f32 0.0, %v1855
        %v1857 = vpop.f32.mrb[0].mxu0
        %v1858 = vpop.f32.mrb[0].mxu0
        %v1859 = vadd.f32 0.0, %v1858
        %v1860 = vpop.f32.mrb[0].mxu0
        %1861 = vmatprep.mubr.bf16.mxu0 0
        %1862 = vmatmul.mubr.bf16.gmra.mrb[0].mxu0 %v1744
        %v1863 = vpop.f32.mrb[0].mxu0
        %v1864 = vadd.f32 0.0, %v1863
        %v1865 = vpop.f32.mrb[0].mxu0
        %v1866 = vpop.f32.mrb[0].mxu0
        %v1867 = vadd.f32 0.0, %v1866
        %v1868 = vpop.f32.mrb[0].mxu0
        %1869 = vmatprep.mubr.bf16.mxu0 0
        %1870 = vmatmul.mubr.bf16.gmra.mrb[0].mxu0 %v1745
        %v1871 = vpop.f32.mrb[0].mxu0
        %v1872 = vadd.f32 0.0, %v1871
        %v1873 = vpop.f32.mrb[0].mxu0
        %v1874 = vpop.f32.mrb[0].mxu0
        %v1875 = vadd.f32 0.0, %v1874
        %v1876 = vpop.f32.mrb[0].mxu0
        %1877 = vmatprep.mubr.bf16.mxu0 0
        %1878 = vmatmul.mubr.bf16.gmra.mrb[0].mxu0 %v1746
        %v1879 = vpop.f32.mrb[0].mxu0
        %v1880 = vadd.f32 0.0, %v1879
        %v1881 = vpop.f32.mrb[0].mxu0
        %v1882 = vpop.f32.mrb[0].mxu0
        %v1883 = vadd.f32 0.0, %v1882
        %v1884 = vpop.f32.mrb[0].mxu0
        %1885 = vmatprep.mubr.bf16.mxu0 0
        %1886 = vmatmul.mubr.bf16.gmra.mrb[0].mxu0 %v1747
        %v1887 = vpop.f32.mrb[0].mxu0
        %v1888 = vadd.f32 0.0, %v1887
        %v1889 = vpop.f32.mrb[0].mxu0
        %v1890 = vpop.f32.mrb[0].mxu0
        %v1891 = vadd.f32 0.0, %v1890
        %v1892 = vpop.f32.mrb[0].mxu0
        %1893 = vmatprep.mubr.bf16.mxu0 0
        %1894 = vmatmul.mubr.bf16.gmra.mrb[0].mxu0 %v1748
        %v1895 = vpop.f32.mrb[0].mxu0
        %v1896 = vadd.f32 0.0, %v1895
        %v1897 = vpop.f32.mrb[0].mxu0
        %v1898 = vpop.f32.mrb[0].mxu0
        %v1899 = vadd.f32 0.0, %v1898
        %v1900 = vpop.f32.mrb[0].mxu0
        %1901 = vdwg.mxu0
        %v1902 = vpack.c.bf16 %v1190, %v1189
        %v1903 = vld [vmem:[%s959] sm:$0xf]
        %v1904 = vld [vmem:[%s959 + $0x4] sm:$0xf]
        %v1905 = vld [vmem:[%s959 + $0x8] sm:$0xf]
        %v1906 = vld [vmem:[%s959 + $0xc] sm:$0xf]
        %v1907 = vld [vmem:[%s959 + $0x10] sm:$0xf]
        %v1908 = vld [vmem:[%s959 + $0x14] sm:$0xf]
        %v1909 = vld [vmem:[%s959 + $0x18] sm:$0xf]
        %v1910 = vld [vmem:[%s959 + $0x1c] sm:$0xf]
        %v1911 = vld [vmem:[%s959 + $0x20] sm:$0xf]
        %v1912 = vld [vmem:[%s959 + $0x24] sm:$0xf]
        %v1913 = vld [vmem:[%s959 + $0x28] sm:$0xf]
        %v1914 = vld [vmem:[%s959 + $0x2c] sm:$0xf]
        %v1915 = vld [vmem:[%s959 + $0x30] sm:$0xf]
        %v1916 = vld [vmem:[%s959 + $0x34] sm:$0xf]
        %v1917 = vld [vmem:[%s959 + $0x38] sm:$0xf]
        %v1918 = vld [vmem:[%s959 + $0x3c] sm:$0xf]
        %v1935 = vunpack.c.l.b16 %v1903
        %v1936 = vunpack.c.l.b16 %v1904
        %v1937 = vunpack.c.l.b16 %v1905
        %v1938 = vunpack.c.l.b16 %v1906
        %v1939 = vunpack.c.l.b16 %v1907
        %v1940 = vunpack.c.l.b16 %v1908
        %v1941 = vunpack.c.l.b16 %v1909
        %v1942 = vunpack.c.l.b16 %v1910
        %v1943 = vunpack.c.l.b16 %v1911
        %v1944 = vunpack.c.l.b16 %v1912
        %v1945 = vunpack.c.l.b16 %v1913
        %v1946 = vunpack.c.l.b16 %v1914
        %v1947 = vunpack.c.l.b16 %v1915
        %v1948 = vunpack.c.l.b16 %v1916
        %v1949 = vunpack.c.l.b16 %v1917
        %v1950 = vunpack.c.l.b16 %v1918
        %v1951 = vpack.c.b16 %v1936, %v1935
        %v1952 = vpack.c.b16 %v1938, %v1937
        %v1953 = vpack.c.b16 %v1940, %v1939
        %v1954 = vpack.c.b16 %v1942, %v1941
        %v1955 = vpack.c.b16 %v1944, %v1943
        %v1956 = vpack.c.b16 %v1946, %v1945
        %v1957 = vpack.c.b16 %v1948, %v1947
        %v1958 = vpack.c.b16 %v1950, %v1949
        %1967 = vmatprep.subr.bf16.mxu0 0
        %1968 = vmatpush1.bf16.msra.mxu0 %v1951
        %1969 = vmatprep.subr.bf16.mxu0 0
        %1970 = vmatpush1.bf16.msra.mxu0 %v1952
        %1971 = vmatprep.subr.bf16.mxu0 0
        %1972 = vmatpush1.bf16.msra.mxu0 %v1953
        %1973 = vmatprep.subr.bf16.mxu0 0
        %1974 = vmatpush1.bf16.msra.mxu0 %v1954
        %1975 = vmatprep.subr.bf16.mxu0 0
        %1976 = vmatpush1.bf16.msra.mxu0 %v1955
        %1977 = vmatprep.subr.bf16.mxu0 0
        %1978 = vmatpush1.bf16.msra.mxu0 %v1956
        %1979 = vmatprep.subr.bf16.mxu0 0
        %1980 = vmatpush1.bf16.msra.mxu0 %v1957
        %1981 = vmatprep.subr.bf16.mxu0 0
        %1982 = vmatpush1.bf16.msra.mxu0 %v1958
        %1983 = vmatprep.subr.bf16.mxu0 0
        %1984 = vmatpush1.bf16.msra.mxu0 0
        %1985 = vmatprep.subr.bf16.mxu0 0
        %1986 = vmatpush1.bf16.msra.mxu0 0
        %1987 = vmatprep.subr.bf16.mxu0 0
        %1988 = vmatpush1.bf16.msra.mxu0 0
        %1989 = vmatprep.subr.bf16.mxu0 0
        %1990 = vmatpush1.bf16.msra.mxu0 0
        %1991 = vmatprep.subr.bf16.mxu0 0
        %1992 = vmatpush1.bf16.msra.mxu0 0
        %1993 = vmatprep.subr.bf16.mxu0 0
        %1994 = vmatpush1.bf16.msra.mxu0 0
        %1995 = vmatprep.subr.bf16.mxu0 0
        %1996 = vmatpush1.bf16.msra.mxu0 0
        %1997 = vmatprep.subr.bf16.mxu0 0
        %1998 = vmatpush1.bf16.msra.mxu0 0
        %1999 = vmatprep.mubr.bf16.mxu0 0
        %2000 = vmatmul.mubr.bf16.gmra.mrb[0].mxu0 %v1902
        %v2001 = vpop.f32.mrb[0].mxu0
        %v2002 = vadd.f32 0.0, %v2001
        %v2003 = vpop.f32.mrb[0].mxu0
        %v2004 = vpop.f32.mrb[0].mxu0
        %v2005 = vadd.f32 0.0, %v2004
        %v2006 = vpop.f32.mrb[0].mxu0
        %2007 = vdwg.mxu0
        %v2024 = vunpack.c.l.b16 %v1677
        %v2025 = vunpack.c.l.b16 %v1678
        %v2026 = vunpack.c.l.b16 %v1679
        %v2027 = vunpack.c.l.b16 %v1680
        %v2028 = vunpack.c.l.b16 %v1681
        %v2029 = vunpack.c.l.b16 %v1682
        %v2030 = vunpack.c.l.b16 %v1683
        %v2031 = vunpack.c.l.b16 %v1684
        %v2032 = vunpack.c.l.b16 %v1685
        %v2033 = vunpack.c.l.b16 %v1686
        %v2034 = vunpack.c.l.b16 %v1687
        %v2035 = vunpack.c.l.b16 %v1688
        %v2036 = vunpack.c.l.b16 %v1689
        %v2037 = vunpack.c.l.b16 %v1690
        %v2038 = vunpack.c.l.b16 %v1691
        %v2039 = vunpack.c.l.b16 %v1692
        %v2040 = vpack.c.b16 %v2025, %v2024
        %v2041 = vpack.c.b16 %v2027, %v2026
        %v2042 = vpack.c.b16 %v2029, %v2028
        %v2043 = vpack.c.b16 %v2031, %v2030
        %v2044 = vpack.c.b16 %v2033, %v2032
        %v2045 = vpack.c.b16 %v2035, %v2034
        %v2046 = vpack.c.b16 %v2037, %v2036
        %v2047 = vpack.c.b16 %v2039, %v2038
        %2056 = vmatprep.subr.bf16.mxu0 0
        %2057 = vmatpush1.bf16.msra.mxu0 %v2040
        %2058 = vmatprep.subr.bf16.mxu0 0
        %2059 = vmatpush1.bf16.msra.mxu0 %v2041
        %2060 = vmatprep.subr.bf16.mxu0 0
        %2061 = vmatpush1.bf16.msra.mxu0 %v2042
        %2062 = vmatprep.subr.bf16.mxu0 0
        %2063 = vmatpush1.bf16.msra.mxu0 %v2043
        %2064 = vmatprep.subr.bf16.mxu0 0
        %2065 = vmatpush1.bf16.msra.mxu0 %v2044
        %2066 = vmatprep.subr.bf16.mxu0 0
        %2067 = vmatpush1.bf16.msra.mxu0 %v2045
        %2068 = vmatprep.subr.bf16.mxu0 0
        %2069 = vmatpush1.bf16.msra.mxu0 %v2046
        %2070 = vmatprep.subr.bf16.mxu0 0
        %2071 = vmatpush1.bf16.msra.mxu0 %v2047
        %2072 = vmatprep.subr.bf16.mxu0 0
        %2073 = vmatpush1.bf16.msra.mxu0 0
        %2074 = vmatprep.subr.bf16.mxu0 0
        %2075 = vmatpush1.bf16.msra.mxu0 0
        %2076 = vmatprep.subr.bf16.mxu0 0
        %2077 = vmatpush1.bf16.msra.mxu0 0
        %2078 = vmatprep.subr.bf16.mxu0 0
        %2079 = vmatpush1.bf16.msra.mxu0 0
        %2080 = vmatprep.subr.bf16.mxu0 0
        %2081 = vmatpush1.bf16.msra.mxu0 0
        %2082 = vmatprep.subr.bf16.mxu0 0
        %2083 = vmatpush1.bf16.msra.mxu0 0
        %2084 = vmatprep.subr.bf16.mxu0 0
        %2085 = vmatpush1.bf16.msra.mxu0 0
        %2086 = vmatprep.subr.bf16.mxu0 0
        %2087 = vmatpush1.bf16.msra.mxu0 0
        %2088 = vmatprep.mubr.bf16.mxu0 0
        %2089 = vmatmul.mubr.bf16.gmra.mrb[0].mxu0 %v1516
        %v2090 = vpop.f32.mrb[0].mxu0
        %v2091 = vadd.f32 %v1840, %v2090
        %v2092 = vpop.f32.mrb[0].mxu0
        %v2093 = vpop.f32.mrb[0].mxu0
        %v2094 = vadd.f32 %v1843, %v2093
        %v2095 = vpop.f32.mrb[0].mxu0
        %2096 = vmatprep.mubr.bf16.mxu0 0
        %2097 = vmatmul.mubr.bf16.gmra.mrb[0].mxu0 %v1517
        %v2098 = vpop.f32.mrb[0].mxu0
        %v2099 = vadd.f32 %v1848, %v2098
        %v2100 = vpop.f32.mrb[0].mxu0
        %v2101 = vpop.f32.mrb[0].mxu0
        %v2102 = vadd.f32 %v1851, %v2101
        %v2103 = vpop.f32.mrb[0].mxu0
        %2104 = vmatprep.mubr.bf16.mxu0 0
        %2105 = vmatmul.mubr.bf16.gmra.mrb[0].mxu0 %v1518
        %v2106 = vpop.f32.mrb[0].mxu0
        %v2107 = vadd.f32 %v1856, %v2106
        %v2108 = vpop.f32.mrb[0].mxu0
        %v2109 = vpop.f32.mrb[0].mxu0
        %v2110 = vadd.f32 %v1859, %v2109
        %v2111 = vpop.f32.mrb[0].mxu0
        %2112 = vmatprep.mubr.bf16.mxu0 0
        %2113 = vmatmul.mubr.bf16.gmra.mrb[0].mxu0 %v1519
        %v2114 = vpop.f32.mrb[0].mxu0
        %v2115 = vadd.f32 %v1864, %v2114
        %v2116 = vpop.f32.mrb[0].mxu0
        %v2117 = vpop.f32.mrb[0].mxu0
        %v2118 = vadd.f32 %v1867, %v2117
        %v2119 = vpop.f32.mrb[0].mxu0
        %2120 = vmatprep.mubr.bf16.mxu0 0
        %2121 = vmatmul.mubr.bf16.gmra.mrb[0].mxu0 %v1520
        %v2122 = vpop.f32.mrb[0].mxu0
        %v2123 = vadd.f32 %v1872, %v2122
        %v2124 = vpop.f32.mrb[0].mxu0
        %v2125 = vpop.f32.mrb[0].mxu0
        %v2126 = vadd.f32 %v1875, %v2125
        %v2127 = vpop.f32.mrb[0].mxu0
        %2128 = vmatprep.mubr.bf16.mxu0 0
        %2129 = vmatmul.mubr.bf16.gmra.mrb[0].mxu0 %v1521
        %v2130 = vpop.f32.mrb[0].mxu0
        %v2131 = vadd.f32 %v1880, %v2130
        %v2132 = vpop.f32.mrb[0].mxu0
        %v2133 = vpop.f32.mrb[0].mxu0
        %v2134 = vadd.f32 %v1883, %v2133
        %v2135 = vpop.f32.mrb[0].mxu0
        %2136 = vmatprep.mubr.bf16.mxu0 0
        %2137 = vmatmul.mubr.bf16.gmra.mrb[0].mxu0 %v1522
        %v2138 = vpop.f32.mrb[0].mxu0
        %v2139 = vadd.f32 %v1888, %v2138
        %v2140 = vpop.f32.mrb[0].mxu0
        %v2141 = vpop.f32.mrb[0].mxu0
        %v2142 = vadd.f32 %v1891, %v2141
        %v2143 = vpop.f32.mrb[0].mxu0
        %2144 = vmatprep.mubr.bf16.mxu0 0
        %2145 = vmatmul.mubr.bf16.gmra.mrb[0].mxu0 %v1523
        %v2146 = vpop.f32.mrb[0].mxu0
        %v2147 = vadd.f32 %v1896, %v2146
        %v2148 = vpop.f32.mrb[0].mxu0
        %v2149 = vpop.f32.mrb[0].mxu0
        %v2150 = vadd.f32 %v1899, %v2149
        %v2151 = vpop.f32.mrb[0].mxu0
        %2152 = vdwg.mxu0
        %v2155 = vcombine.high %v2002, %v2002
        %v2157 = vunpack.c.l.s4 1966171168
        %v2158 = vunpack.c.0.s8 %v2157
        %v2159 = vlaneseq
        %v2160 = vshrl.u32 %v2159, 7
        %v2161 = vsub.s32 %v2158, %v2160
        %v2162 = vrot.slane %v2002, %v2161
        %v2164 = vunpack.c.l.s4 1966171168
        %v2165 = vunpack.c.0.s8 %v2164
        %v2166 = vlaneseq
        %v2167 = vshrl.u32 %v2166, 7
        %v2168 = vsub.s32 %v2165, %v2167
        %v2169 = vrot.slane %v2155, %v2168
        %v2170 = vcombine.high %v2162, %v2162
        %v2171 = vcombine.high %v2169, %v2169
        %v2173 = vunpack.c.l.s4 1966171168
        %v2174 = vunpack.c.0.s8 %v2173
        %v2175 = vlaneseq
        %v2176 = vshrl.u32 %v2175, 7
        %v2177 = vsub.s32 %v2174, %v2176
        %v2178 = vrot.slane %v2162, %v2177
        %v2180 = vunpack.c.l.s4 1966171168
        %v2181 = vunpack.c.0.s8 %v2180
        %v2182 = vlaneseq
        %v2183 = vshrl.u32 %v2182, 7
        %v2184 = vsub.s32 %v2181, %v2183
        %v2185 = vrot.slane %v2169, %v2184
        %v2187 = vunpack.c.l.s4 1966171168
        %v2188 = vunpack.c.0.s8 %v2187
        %v2189 = vlaneseq
        %v2190 = vshrl.u32 %v2189, 7
        %v2191 = vsub.s32 %v2188, %v2190
        %v2192 = vrot.slane %v2170, %v2191
        %v2194 = vunpack.c.l.s4 1966171168
        %v2195 = vunpack.c.0.s8 %v2194
        %v2196 = vlaneseq
        %v2197 = vshrl.u32 %v2196, 7
        %v2198 = vsub.s32 %v2195, %v2197
        %v2199 = vrot.slane %v2171, %v2198
        %v2200 = vcombine.high %v2178, %v2178
        %v2201 = vcombine.high %v2185, %v2185
        %v2202 = vcombine.high %v2192, %v2192
        %v2203 = vcombine.high %v2199, %v2199
        %v2204 = vcombine.high %v2005, %v2005
        %v2206 = vunpack.c.l.s4 1966171168
        %v2207 = vunpack.c.0.s8 %v2206
        %v2208 = vlaneseq
        %v2209 = vshrl.u32 %v2208, 7
        %v2210 = vsub.s32 %v2207, %v2209
        %v2211 = vrot.slane %v2005, %v2210
        %v2213 = vunpack.c.l.s4 1966171168
        %v2214 = vunpack.c.0.s8 %v2213
        %v2215 = vlaneseq
        %v2216 = vshrl.u32 %v2215, 7
        %v2217 = vsub.s32 %v2214, %v2216
        %v2218 = vrot.slane %v2204, %v2217
        %v2219 = vcombine.high %v2211, %v2211
        %v2220 = vcombine.high %v2218, %v2218
        %v2222 = vunpack.c.l.s4 1966171168
        %v2223 = vunpack.c.0.s8 %v2222
        %v2224 = vlaneseq
        %v2225 = vshrl.u32 %v2224, 7
        %v2226 = vsub.s32 %v2223, %v2225
        %v2227 = vrot.slane %v2211, %v2226
        %v2229 = vunpack.c.l.s4 1966171168
        %v2230 = vunpack.c.0.s8 %v2229
        %v2231 = vlaneseq
        %v2232 = vshrl.u32 %v2231, 7
        %v2233 = vsub.s32 %v2230, %v2232
        %v2234 = vrot.slane %v2218, %v2233
        %v2236 = vunpack.c.l.s4 1966171168
        %v2237 = vunpack.c.0.s8 %v2236
        %v2238 = vlaneseq
        %v2239 = vshrl.u32 %v2238, 7
        %v2240 = vsub.s32 %v2237, %v2239
        %v2241 = vrot.slane %v2219, %v2240
        %v2243 = vunpack.c.l.s4 1966171168
        %v2244 = vunpack.c.0.s8 %v2243
        %v2245 = vlaneseq
        %v2246 = vshrl.u32 %v2245, 7
        %v2247 = vsub.s32 %v2244, %v2246
        %v2248 = vrot.slane %v2220, %v2247
        %v2249 = vcombine.high %v2227, %v2227
        %v2250 = vcombine.high %v2234, %v2234
        %v2251 = vcombine.high %v2241, %v2241
        %v2252 = vcombine.high %v2248, %v2248
        %v2253 = vlaneseq
        %v2254 = vshrl.u32 %v2253, 7
        %v2255 = vsub.s32 0, %v2254
        %v2256 = vrot.slane %v2178, %v2255
        %v2257 = vlaneseq
        %v2258 = vshrl.u32 %v2257, 7
        %v2259 = vsub.s32 0, %v2258
        %v2260 = vrot.slane %v2192, %v2259
        %v2261 = vlaneseq
        %v2262 = vshrl.u32 %v2261, 7
        %v2263 = vsub.s32 0, %v2262
        %v2264 = vrot.slane %v2200, %v2263
        %v2265 = vlaneseq
        %v2266 = vshrl.u32 %v2265, 7
        %v2267 = vsub.s32 0, %v2266
        %v2268 = vrot.slane %v2202, %v2267
        %v2269 = vlaneseq
        %v2270 = vshrl.u32 %v2269, 7
        %v2271 = vsub.s32 0, %v2270
        %v2272 = vrot.slane %v2185, %v2271
        %v2273 = vlaneseq
        %v2274 = vshrl.u32 %v2273, 7
        %v2275 = vsub.s32 0, %v2274
        %v2276 = vrot.slane %v2199, %v2275
        %v2277 = vlaneseq
        %v2278 = vshrl.u32 %v2277, 7
        %v2279 = vsub.s32 0, %v2278
        %v2280 = vrot.slane %v2201, %v2279
        %v2281 = vlaneseq
        %v2282 = vshrl.u32 %v2281, 7
        %v2283 = vsub.s32 0, %v2282
        %v2284 = vrot.slane %v2203, %v2283
        %v2285 = vlaneseq
        %v2286 = vshrl.u32 %v2285, 7
        %v2287 = vsub.s32 0, %v2286
        %v2288 = vrot.slane %v2227, %v2287
        %v2289 = vlaneseq
        %v2290 = vshrl.u32 %v2289, 7
        %v2291 = vsub.s32 0, %v2290
        %v2292 = vrot.slane %v2241, %v2291
        %v2293 = vlaneseq
        %v2294 = vshrl.u32 %v2293, 7
        %v2295 = vsub.s32 0, %v2294
        %v2296 = vrot.slane %v2249, %v2295
        %v2297 = vlaneseq
        %v2298 = vshrl.u32 %v2297, 7
        %v2299 = vsub.s32 0, %v2298
        %v2300 = vrot.slane %v2251, %v2299
        %v2301 = vlaneseq
        %v2302 = vshrl.u32 %v2301, 7
        %v2303 = vsub.s32 0, %v2302
        %v2304 = vrot.slane %v2234, %v2303
        %v2305 = vlaneseq
        %v2306 = vshrl.u32 %v2305, 7
        %v2307 = vsub.s32 0, %v2306
        %v2308 = vrot.slane %v2248, %v2307
        %v2309 = vlaneseq
        %v2310 = vshrl.u32 %v2309, 7
        %v2311 = vsub.s32 0, %v2310
        %v2312 = vrot.slane %v2250, %v2311
        %v2313 = vlaneseq
        %v2314 = vshrl.u32 %v2313, 7
        %v2315 = vsub.s32 0, %v2314
        %v2316 = vrot.slane %v2252, %v2315
        %v2333 = vadd.f32 %v2091, %v2256
        %v2334 = vadd.f32 %v2094, %v2260
        %v2335 = vadd.f32 %v2099, %v2264
        %v2336 = vadd.f32 %v2102, %v2268
        %v2337 = vadd.f32 %v2107, %v2272
        %v2338 = vadd.f32 %v2110, %v2276
        %v2339 = vadd.f32 %v2115, %v2280
        %v2340 = vadd.f32 %v2118, %v2284
        %v2341 = vadd.f32 %v2123, %v2288
        %v2342 = vadd.f32 %v2126, %v2292
        %v2343 = vadd.f32 %v2131, %v2296
        %v2344 = vadd.f32 %v2134, %v2300
        %v2345 = vadd.f32 %v2139, %v2304
        %v2346 = vadd.f32 %v2142, %v2308
        %v2347 = vadd.f32 %v2147, %v2312
        %v2348 = vadd.f32 %v2150, %v2316
        %v2349 = vld [vmem:[%s1159] sm:$0x1]
        %v2351 = vlaneseq
        %v2352 = vshrl.u32 %v2351, 7
        %v2353 = vsub.s32 0, %v2352
        %v2354 = vrot.slane %v2349, %v2353
        %v2356 = vadd.f32 %v2333, %v2354
        %v2357 = vadd.f32 %v2334, %v2354
        %v2358 = vadd.f32 %v2335, %v2354
        %v2359 = vadd.f32 %v2336, %v2354
        %v2360 = vadd.f32 %v2337, %v2354
        %v2361 = vadd.f32 %v2338, %v2354
        %v2362 = vadd.f32 %v2339, %v2354
        %v2363 = vadd.f32 %v2340, %v2354
        %v2364 = vadd.f32 %v2341, %v2354
        %v2365 = vadd.f32 %v2342, %v2354
        %v2366 = vadd.f32 %v2343, %v2354
        %v2367 = vadd.f32 %v2344, %v2354
        %v2368 = vadd.f32 %v2345, %v2354
        %v2369 = vadd.f32 %v2346, %v2354
        %v2370 = vadd.f32 %v2347, %v2354
        %v2371 = vadd.f32 %v2348, %v2354
        %vm2372 = vcmp.ge.f32.partialorder %v2356, 0.0
        %vm2373 = vcmp.ge.f32.partialorder %v2357, 0.0
        %vm2374 = vcmp.ge.f32.partialorder %v2358, 0.0
        %vm2375 = vcmp.ge.f32.partialorder %v2359, 0.0
        %vm2376 = vcmp.ge.f32.partialorder %v2360, 0.0
        %vm2377 = vcmp.ge.f32.partialorder %v2361, 0.0
        %vm2378 = vcmp.ge.f32.partialorder %v2362, 0.0
        %vm2379 = vcmp.ge.f32.partialorder %v2363, 0.0
        %vm2380 = vcmp.ge.f32.partialorder %v2364, 0.0
        %vm2381 = vcmp.ge.f32.partialorder %v2365, 0.0
        %vm2382 = vcmp.ge.f32.partialorder %v2366, 0.0
        %vm2383 = vcmp.ge.f32.partialorder %v2367, 0.0
        %vm2384 = vcmp.ge.f32.partialorder %v2368, 0.0
        %vm2385 = vcmp.ge.f32.partialorder %v2369, 0.0
        %vm2386 = vcmp.ge.f32.partialorder %v2370, 0.0
        %vm2387 = vcmp.ge.f32.partialorder %v2371, 0.0
        %v2388 = vmul.f32 %v2356, 0.01
        %v2389 = vmul.f32 %v2357, 0.01
        %v2390 = vmul.f32 %v2358, 0.01
        %v2391 = vmul.f32 %v2359, 0.01
        %v2392 = vmul.f32 %v2360, 0.01
        %v2393 = vmul.f32 %v2361, 0.01
        %v2394 = vmul.f32 %v2362, 0.01
        %v2395 = vmul.f32 %v2363, 0.01
        %v2396 = vmul.f32 %v2364, 0.01
        %v2397 = vmul.f32 %v2365, 0.01
        %v2398 = vmul.f32 %v2366, 0.01
        %v2399 = vmul.f32 %v2367, 0.01
        %v2400 = vmul.f32 %v2368, 0.01
        %v2401 = vmul.f32 %v2369, 0.01
        %v2402 = vmul.f32 %v2370, 0.01
        %v2403 = vmul.f32 %v2371, 0.01
        %v2404 = vsel %vm2372, %v2356, %v2388
        %v2405 = vsel %vm2373, %v2357, %v2389
        %v2406 = vsel %vm2374, %v2358, %v2390
        %v2407 = vsel %vm2375, %v2359, %v2391
        %v2408 = vsel %vm2376, %v2360, %v2392
        %v2409 = vsel %vm2377, %v2361, %v2393
        %v2410 = vsel %vm2378, %v2362, %v2394
        %v2411 = vsel %vm2379, %v2363, %v2395
        %v2412 = vsel %vm2380, %v2364, %v2396
        %v2413 = vsel %vm2381, %v2365, %v2397
        %v2414 = vsel %vm2382, %v2366, %v2398
        %v2415 = vsel %vm2383, %v2367, %v2399
        %v2416 = vsel %vm2384, %v2368, %v2400
        %v2417 = vsel %vm2385, %v2369, %v2401
        %v2418 = vsel %vm2386, %v2370, %v2402
        %v2419 = vsel %vm2387, %v2371, %v2403
        %v2422 = vcombine.high %v1455, %v1455
        %v2424 = vunpack.c.l.s4 1966171168
        %v2425 = vunpack.c.0.s8 %v2424
        %v2426 = vlaneseq
        %v2427 = vshrl.u32 %v2426, 7
        %v2428 = vsub.s32 %v2425, %v2427
        %v2429 = vrot.slane %v1455, %v2428
        %v2431 = vunpack.c.l.s4 1966171168
        %v2432 = vunpack.c.0.s8 %v2431
        %v2433 = vlaneseq
        %v2434 = vshrl.u32 %v2433, 7
        %v2435 = vsub.s32 %v2432, %v2434
        %v2436 = vrot.slane %v2422, %v2435
        %v2437 = vcombine.high %v2429, %v2429
        %v2438 = vcombine.high %v2436, %v2436
        %v2440 = vunpack.c.l.s4 1966171168
        %v2441 = vunpack.c.0.s8 %v2440
        %v2442 = vlaneseq
        %v2443 = vshrl.u32 %v2442, 7
        %v2444 = vsub.s32 %v2441, %v2443
        %v2445 = vrot.slane %v2429, %v2444
        %v2447 = vunpack.c.l.s4 1966171168
        %v2448 = vunpack.c.0.s8 %v2447
        %v2449 = vlaneseq
        %v2450 = vshrl.u32 %v2449, 7
        %v2451 = vsub.s32 %v2448, %v2450
        %v2452 = vrot.slane %v2436, %v2451
        %v2454 = vunpack.c.l.s4 1966171168
        %v2455 = vunpack.c.0.s8 %v2454
        %v2456 = vlaneseq
        %v2457 = vshrl.u32 %v2456, 7
        %v2458 = vsub.s32 %v2455, %v2457
        %v2459 = vrot.slane %v2437, %v2458
        %v2461 = vunpack.c.l.s4 1966171168
        %v2462 = vunpack.c.0.s8 %v2461
        %v2463 = vlaneseq
        %v2464 = vshrl.u32 %v2463, 7
        %v2465 = vsub.s32 %v2462, %v2464
        %v2466 = vrot.slane %v2438, %v2465
        %v2467 = vcombine.high %v2445, %v2445
        %v2468 = vcombine.high %v2452, %v2452
        %v2469 = vcombine.high %v2459, %v2459
        %v2470 = vcombine.high %v2466, %v2466
        %v2471 = vcombine.high %v1458, %v1458
        %v2473 = vunpack.c.l.s4 1966171168
        %v2474 = vunpack.c.0.s8 %v2473
        %v2475 = vlaneseq
        %v2476 = vshrl.u32 %v2475, 7
        %v2477 = vsub.s32 %v2474, %v2476
        %v2478 = vrot.slane %v1458, %v2477
        %v2480 = vunpack.c.l.s4 1966171168
        %v2481 = vunpack.c.0.s8 %v2480
        %v2482 = vlaneseq
        %v2483 = vshrl.u32 %v2482, 7
        %v2484 = vsub.s32 %v2481, %v2483
        %v2485 = vrot.slane %v2471, %v2484
        %v2486 = vcombine.high %v2478, %v2478
        %v2487 = vcombine.high %v2485, %v2485
        %v2489 = vunpack.c.l.s4 1966171168
        %v2490 = vunpack.c.0.s8 %v2489
        %v2491 = vlaneseq
        %v2492 = vshrl.u32 %v2491, 7
        %v2493 = vsub.s32 %v2490, %v2492
        %v2494 = vrot.slane %v2478, %v2493
        %v2496 = vunpack.c.l.s4 1966171168
        %v2497 = vunpack.c.0.s8 %v2496
        %v2498 = vlaneseq
        %v2499 = vshrl.u32 %v2498, 7
        %v2500 = vsub.s32 %v2497, %v2499
        %v2501 = vrot.slane %v2485, %v2500
        %v2503 = vunpack.c.l.s4 1966171168
        %v2504 = vunpack.c.0.s8 %v2503
        %v2505 = vlaneseq
        %v2506 = vshrl.u32 %v2505, 7
        %v2507 = vsub.s32 %v2504, %v2506
        %v2508 = vrot.slane %v2486, %v2507
        %v2510 = vunpack.c.l.s4 1966171168
        %v2511 = vunpack.c.0.s8 %v2510
        %v2512 = vlaneseq
        %v2513 = vshrl.u32 %v2512, 7
        %v2514 = vsub.s32 %v2511, %v2513
        %v2515 = vrot.slane %v2487, %v2514
        %v2516 = vcombine.high %v2494, %v2494
        %v2517 = vcombine.high %v2501, %v2501
        %v2518 = vcombine.high %v2508, %v2508
        %v2519 = vcombine.high %v2515, %v2515
        %v2520 = vlaneseq
        %v2521 = vshrl.u32 %v2520, 7
        %v2522 = vsub.s32 0, %v2521
        %v2523 = vrot.slane %v2445, %v2522
        %v2524 = vlaneseq
        %v2525 = vshrl.u32 %v2524, 7
        %v2526 = vsub.s32 0, %v2525
        %v2527 = vrot.slane %v2459, %v2526
        %v2528 = vlaneseq
        %v2529 = vshrl.u32 %v2528, 7
        %v2530 = vsub.s32 0, %v2529
        %v2531 = vrot.slane %v2467, %v2530
        %v2532 = vlaneseq
        %v2533 = vshrl.u32 %v2532, 7
        %v2534 = vsub.s32 0, %v2533
        %v2535 = vrot.slane %v2469, %v2534
        %v2536 = vlaneseq
        %v2537 = vshrl.u32 %v2536, 7
        %v2538 = vsub.s32 0, %v2537
        %v2539 = vrot.slane %v2452, %v2538
        %v2540 = vlaneseq
        %v2541 = vshrl.u32 %v2540, 7
        %v2542 = vsub.s32 0, %v2541
        %v2543 = vrot.slane %v2466, %v2542
        %v2544 = vlaneseq
        %v2545 = vshrl.u32 %v2544, 7
        %v2546 = vsub.s32 0, %v2545
        %v2547 = vrot.slane %v2468, %v2546
        %v2548 = vlaneseq
        %v2549 = vshrl.u32 %v2548, 7
        %v2550 = vsub.s32 0, %v2549
        %v2551 = vrot.slane %v2470, %v2550
        %v2552 = vlaneseq
        %v2553 = vshrl.u32 %v2552, 7
        %v2554 = vsub.s32 0, %v2553
        %v2555 = vrot.slane %v2494, %v2554
        %v2556 = vlaneseq
        %v2557 = vshrl.u32 %v2556, 7
        %v2558 = vsub.s32 0, %v2557
        %v2559 = vrot.slane %v2508, %v2558
        %v2560 = vlaneseq
        %v2561 = vshrl.u32 %v2560, 7
        %v2562 = vsub.s32 0, %v2561
        %v2563 = vrot.slane %v2516, %v2562
        %v2564 = vlaneseq
        %v2565 = vshrl.u32 %v2564, 7
        %v2566 = vsub.s32 0, %v2565
        %v2567 = vrot.slane %v2518, %v2566
        %v2568 = vlaneseq
        %v2569 = vshrl.u32 %v2568, 7
        %v2570 = vsub.s32 0, %v2569
        %v2571 = vrot.slane %v2501, %v2570
        %v2572 = vlaneseq
        %v2573 = vshrl.u32 %v2572, 7
        %v2574 = vsub.s32 0, %v2573
        %v2575 = vrot.slane %v2515, %v2574
        %v2576 = vlaneseq
        %v2577 = vshrl.u32 %v2576, 7
        %v2578 = vsub.s32 0, %v2577
        %v2579 = vrot.slane %v2517, %v2578
        %v2580 = vlaneseq
        %v2581 = vshrl.u32 %v2580, 7
        %v2582 = vsub.s32 0, %v2581
        %v2583 = vrot.slane %v2519, %v2582
        %v2600 = vmul.f32 %v2523, %v1615
        %v2601 = vmul.f32 %v2527, %v1618
        %v2602 = vmul.f32 %v2531, %v1623
        %v2603 = vmul.f32 %v2535, %v1626
        %v2604 = vmul.f32 %v2539, %v1631
        %v2605 = vmul.f32 %v2543, %v1634
        %v2606 = vmul.f32 %v2547, %v1639
        %v2607 = vmul.f32 %v2551, %v1642
        %v2608 = vmul.f32 %v2555, %v1647
        %v2609 = vmul.f32 %v2559, %v1650
        %v2610 = vmul.f32 %v2563, %v1655
        %v2611 = vmul.f32 %v2567, %v1658
        %v2612 = vmul.f32 %v2571, %v1663
        %v2613 = vmul.f32 %v2575, %v1666
        %v2614 = vmul.f32 %v2579, %v1671
        %v2615 = vmul.f32 %v2583, %v1674
        %v2616 = vld [vmem:[%s5] sm:$0xff]
        %v2617 = vld [vmem:[%s5 + $0x8] sm:$0xff]
        %v2618 = vld [vmem:[%s5 + $0x10] sm:$0xff]
        %v2619 = vld [vmem:[%s5 + $0x18] sm:$0xff]
        %v2620 = vld [vmem:[%s5 + $0x20] sm:$0xff]
        %v2621 = vld [vmem:[%s5 + $0x28] sm:$0xff]
        %v2622 = vld [vmem:[%s5 + $0x30] sm:$0xff]
        %v2623 = vld [vmem:[%s5 + $0x38] sm:$0xff]
        %v2624 = vld [vmem:[%s5 + $0x40] sm:$0xff]
        %v2625 = vld [vmem:[%s5 + $0x48] sm:$0xff]
        %v2626 = vld [vmem:[%s5 + $0x50] sm:$0xff]
        %v2627 = vld [vmem:[%s5 + $0x58] sm:$0xff]
        %v2628 = vld [vmem:[%s5 + $0x60] sm:$0xff]
        %v2629 = vld [vmem:[%s5 + $0x68] sm:$0xff]
        %v2630 = vld [vmem:[%s5 + $0x70] sm:$0xff]
        %v2631 = vld [vmem:[%s5 + $0x78] sm:$0xff]
        %2632 = vmatprep.subr.mxu0 0.0
        %2633 = vmatpush1.msra.mxu0 %v2616
        %2634 = vmatprep.subr.mxu0 0.0
        %2635 = vmatpush1.msra.mxu0 %v2617
        %2636 = vmatprep.subr.mxu0 0.0
        %2637 = vmatpush1.msra.mxu0 %v2618
        %2638 = vmatprep.subr.mxu0 0.0
        %2639 = vmatpush1.msra.mxu0 %v2619
        %2640 = vmatprep.subr.mxu0 0.0
        %2641 = vmatpush1.msra.mxu0 %v2620
        %2642 = vmatprep.subr.mxu0 0.0
        %2643 = vmatpush1.msra.mxu0 %v2621
        %2644 = vmatprep.subr.mxu0 0.0
        %2645 = vmatpush1.msra.mxu0 %v2622
        %2646 = vmatprep.subr.mxu0 0.0
        %2647 = vmatpush1.msra.mxu0 %v2623
        %2648 = vmatprep.subr.mxu0 0.0
        %2649 = vmatpush1.msra.mxu0 %v2624
        %2650 = vmatprep.subr.mxu0 0.0
        %2651 = vmatpush1.msra.mxu0 %v2625
        %2652 = vmatprep.subr.mxu0 0.0
        %2653 = vmatpush1.msra.mxu0 %v2626
        %2654 = vmatprep.subr.mxu0 0.0
        %2655 = vmatpush1.msra.mxu0 %v2627
        %2656 = vmatprep.subr.mxu0 0.0
        %2657 = vmatpush1.msra.mxu0 %v2628
        %2658 = vmatprep.subr.mxu0 0.0
        %2659 = vmatpush1.msra.mxu0 %v2629
        %2660 = vmatprep.subr.mxu0 0.0
        %2661 = vmatpush1.msra.mxu0 %v2630
        %2662 = vmatprep.subr.mxu0 0.0
        %2663 = vmatpush1.msra.mxu0 %v2631
        %2664 = vmatprep.subr.mxu0 0.0
        %2665 = vmatpush1.msra.mxu0 0.0
        %2666 = vmatprep.subr.mxu0 0.0
        %2667 = vmatpush1.msra.mxu0 0.0
        %2668 = vmatprep.subr.mxu0 0.0
        %2669 = vmatpush1.msra.mxu0 0.0
        %2670 = vmatprep.subr.mxu0 0.0
        %2671 = vmatpush1.msra.mxu0 0.0
        %2672 = vmatprep.subr.mxu0 0.0
        %2673 = vmatpush1.msra.mxu0 0.0
        %2674 = vmatprep.subr.mxu0 0.0
        %2675 = vmatpush1.msra.mxu0 0.0
        %2676 = vmatprep.subr.mxu0 0.0
        %2677 = vmatpush1.msra.mxu0 0.0
        %2678 = vmatprep.subr.mxu0 0.0
        %2679 = vmatpush1.msra.mxu0 0.0
        %2680 = vmatprep.subr.mxu0 0.0
        %2681 = vmatpush1.msra.mxu0 0.0
        %2682 = vmatprep.subr.mxu0 0.0
        %2683 = vmatpush1.msra.mxu0 0.0
        %2684 = vmatprep.subr.mxu0 0.0
        %2685 = vmatpush1.msra.mxu0 0.0
        %2686 = vmatprep.subr.mxu0 0.0
        %2687 = vmatpush1.msra.mxu0 0.0
        %2688 = vmatprep.subr.mxu0 0.0
        %2689 = vmatpush1.msra.mxu0 0.0
        %2690 = vmatprep.subr.mxu0 0.0
        %2691 = vmatpush1.msra.mxu0 0.0
        %2692 = vmatprep.subr.mxu0 0.0
        %2693 = vmatpush1.msra.mxu0 0.0
        %2694 = vmatprep.subr.mxu0 0.0
        %2695 = vmatpush1.msra.mxu0 0.0
        %2696 = vmatprep.mubr.f32.mxu0 0.0
        %2697 = vmatmul.mubr.f32.gmra.mrb[0].mxu0 %v2600
        %v2698 = vpop.f32.mrb[0].mxu0
        %v2699 = vadd.f32 0.0, %v2698
        %v2700 = vpop.f32.mrb[0].mxu0
        %2701 = vmatprep.mubr.f32.mxu0 0.0
        %2702 = vmatmul.mubr.f32.gmra.mrb[0].mxu0 %v2601
        %v2703 = vpop.f32.mrb[0].mxu0
        %v2704 = vadd.f32 0.0, %v2703
        %v2705 = vpop.f32.mrb[0].mxu0
        %2706 = vmatprep.mubr.f32.mxu0 0.0
        %2707 = vmatmul.mubr.f32.gmra.mrb[0].mxu0 %v2602
        %v2708 = vpop.f32.mrb[0].mxu0
        %v2709 = vadd.f32 0.0, %v2708
        %v2710 = vpop.f32.mrb[0].mxu0
        %2711 = vmatprep.mubr.f32.mxu0 0.0
        %2712 = vmatmul.mubr.f32.gmra.mrb[0].mxu0 %v2603
        %v2713 = vpop.f32.mrb[0].mxu0
        %v2714 = vadd.f32 0.0, %v2713
        %v2715 = vpop.f32.mrb[0].mxu0
        %2716 = vmatprep.mubr.f32.mxu0 0.0
        %2717 = vmatmul.mubr.f32.gmra.mrb[0].mxu0 %v2604
        %v2718 = vpop.f32.mrb[0].mxu0
        %v2719 = vadd.f32 0.0, %v2718
        %v2720 = vpop.f32.mrb[0].mxu0
        %2721 = vmatprep.mubr.f32.mxu0 0.0
        %2722 = vmatmul.mubr.f32.gmra.mrb[0].mxu0 %v2605
        %v2723 = vpop.f32.mrb[0].mxu0
        %v2724 = vadd.f32 0.0, %v2723
        %v2725 = vpop.f32.mrb[0].mxu0
        %2726 = vmatprep.mubr.f32.mxu0 0.0
        %2727 = vmatmul.mubr.f32.gmra.mrb[0].mxu0 %v2606
        %v2728 = vpop.f32.mrb[0].mxu0
        %v2729 = vadd.f32 0.0, %v2728
        %v2730 = vpop.f32.mrb[0].mxu0
        %2731 = vmatprep.mubr.f32.mxu0 0.0
        %2732 = vmatmul.mubr.f32.gmra.mrb[0].mxu0 %v2607
        %v2733 = vpop.f32.mrb[0].mxu0
        %v2734 = vadd.f32 0.0, %v2733
        %v2735 = vpop.f32.mrb[0].mxu0
        %2736 = vmatprep.mubr.f32.mxu0 0.0
        %2737 = vmatmul.mubr.f32.gmra.mrb[0].mxu0 %v2608
        %v2738 = vpop.f32.mrb[0].mxu0
        %v2739 = vadd.f32 0.0, %v2738
        %v2740 = vpop.f32.mrb[0].mxu0
        %2741 = vmatprep.mubr.f32.mxu0 0.0
        %2742 = vmatmul.mubr.f32.gmra.mrb[0].mxu0 %v2609
        %v2743 = vpop.f32.mrb[0].mxu0
        %v2744 = vadd.f32 0.0, %v2743
        %v2745 = vpop.f32.mrb[0].mxu0
        %2746 = vmatprep.mubr.f32.mxu0 0.0
        %2747 = vmatmul.mubr.f32.gmra.mrb[0].mxu0 %v2610
        %v2748 = vpop.f32.mrb[0].mxu0
        %v2749 = vadd.f32 0.0, %v2748
        %v2750 = vpop.f32.mrb[0].mxu0
        %2751 = vmatprep.mubr.f32.mxu0 0.0
        %2752 = vmatmul.mubr.f32.gmra.mrb[0].mxu0 %v2611
        %v2753 = vpop.f32.mrb[0].mxu0
        %v2754 = vadd.f32 0.0, %v2753
        %v2755 = vpop.f32.mrb[0].mxu0
        %2756 = vmatprep.mubr.f32.mxu0 0.0
        %2757 = vmatmul.mubr.f32.gmra.mrb[0].mxu0 %v2612
        %v2758 = vpop.f32.mrb[0].mxu0
        %v2759 = vadd.f32 0.0, %v2758
        %v2760 = vpop.f32.mrb[0].mxu0
        %2761 = vmatprep.mubr.f32.mxu0 0.0
        %2762 = vmatmul.mubr.f32.gmra.mrb[0].mxu0 %v2613
        %v2763 = vpop.f32.mrb[0].mxu0
        %v2764 = vadd.f32 0.0, %v2763
        %v2765 = vpop.f32.mrb[0].mxu0
        %2766 = vmatprep.mubr.f32.mxu0 0.0
        %2767 = vmatmul.mubr.f32.gmra.mrb[0].mxu0 %v2614
        %v2768 = vpop.f32.mrb[0].mxu0
        %v2769 = vadd.f32 0.0, %v2768
        %v2770 = vpop.f32.mrb[0].mxu0
        %2771 = vmatprep.mubr.f32.mxu0 0.0
        %2772 = vmatmul.mubr.f32.gmra.mrb[0].mxu0 %v2615
        %v2773 = vpop.f32.mrb[0].mxu0
        %v2774 = vadd.f32 0.0, %v2773
        %v2775 = vpop.f32.mrb[0].mxu0
        %2776 = vdwg.mxu0
        %v2777 = vsub.f32 %v2699, %v1237
        %v2778 = vsub.f32 %v2704, %v1244
        %v2779 = vsub.f32 %v2709, %v1251
        %v2780 = vsub.f32 %v2714, %v1258
        %v2781 = vsub.f32 %v2719, %v1265
        %v2782 = vsub.f32 %v2724, %v1272
        %v2783 = vsub.f32 %v2729, %v1279
        %v2784 = vsub.f32 %v2734, %v1286
        %v2785 = vsub.f32 %v2739, %v1293
        %v2786 = vsub.f32 %v2744, %v1300
        %v2787 = vsub.f32 %v2749, %v1307
        %v2788 = vsub.f32 %v2754, %v1314
        %v2789 = vsub.f32 %v2759, %v1321
        %v2790 = vsub.f32 %v2764, %v1328
        %v2791 = vsub.f32 %v2769, %v1335
        %v2792 = vsub.f32 %v2774, %v1342
        %vm2793 = vcmask 31744
        %v2794 = vsel %vm2793, %v2777, -inf
        %v2795 = vrot.slane %v2794, 4
        %v2796 = vmax.f32 %v2794, %v2795
        %v2797 = vrot.slane %v2796, 2
        %v2798 = vmax.f32 %v2796, %v2797
        %v2799 = vrot.slane %v2798, 1
        %v2800 = vmax.f32 %v2798, %v2799
        %v2801 = vsel %vm2793, %v2778, -inf
        %v2802 = vrot.slane %v2801, 4
        %v2803 = vmax.f32 %v2801, %v2802
        %v2804 = vrot.slane %v2803, 2
        %v2805 = vmax.f32 %v2803, %v2804
        %v2806 = vrot.slane %v2805, 1
        %v2807 = vmax.f32 %v2805, %v2806
        %v2808 = vsel %vm2793, %v2779, -inf
        %v2809 = vrot.slane %v2808, 4
        %v2810 = vmax.f32 %v2808, %v2809
        %v2811 = vrot.slane %v2810, 2
        %v2812 = vmax.f32 %v2810, %v2811
        %v2813 = vrot.slane %v2812, 1
        %v2814 = vmax.f32 %v2812, %v2813
        %v2815 = vsel %vm2793, %v2780, -inf
        %v2816 = vrot.slane %v2815, 4
        %v2817 = vmax.f32 %v2815, %v2816
        %v2818 = vrot.slane %v2817, 2
        %v2819 = vmax.f32 %v2817, %v2818
        %v2820 = vrot.slane %v2819, 1
        %v2821 = vmax.f32 %v2819, %v2820
        %v2822 = vsel %vm2793, %v2781, -inf
        %v2823 = vrot.slane %v2822, 4
        %v2824 = vmax.f32 %v2822, %v2823
        %v2825 = vrot.slane %v2824, 2
        %v2826 = vmax.f32 %v2824, %v2825
        %v2827 = vrot.slane %v2826, 1
        %v2828 = vmax.f32 %v2826, %v2827
        %v2829 = vsel %vm2793, %v2782, -inf
        %v2830 = vrot.slane %v2829, 4
        %v2831 = vmax.f32 %v2829, %v2830
        %v2832 = vrot.slane %v2831, 2
        %v2833 = vmax.f32 %v2831, %v2832
        %v2834 = vrot.slane %v2833, 1
        %v2835 = vmax.f32 %v2833, %v2834
        %v2836 = vsel %vm2793, %v2783, -inf
        %v2837 = vrot.slane %v2836, 4
        %v2838 = vmax.f32 %v2836, %v2837
        %v2839 = vrot.slane %v2838, 2
        %v2840 = vmax.f32 %v2838, %v2839
        %v2841 = vrot.slane %v2840, 1
        %v2842 = vmax.f32 %v2840, %v2841
        %v2843 = vsel %vm2793, %v2784, -inf
        %v2844 = vrot.slane %v2843, 4
        %v2845 = vmax.f32 %v2843, %v2844
        %v2846 = vrot.slane %v2845, 2
        %v2847 = vmax.f32 %v2845, %v2846
        %v2848 = vrot.slane %v2847, 1
        %v2849 = vmax.f32 %v2847, %v2848
        %v2850 = vsel %vm2793, %v2785, -inf
        %v2851 = vrot.slane %v2850, 4
        %v2852 = vmax.f32 %v2850, %v2851
        %v2853 = vrot.slane %v2852, 2
        %v2854 = vmax.f32 %v2852, %v2853
        %v2855 = vrot.slane %v2854, 1
        %v2856 = vmax.f32 %v2854, %v2855
        %v2857 = vsel %vm2793, %v2786, -inf
        %v2858 = vrot.slane %v2857, 4
        %v2859 = vmax.f32 %v2857, %v2858
        %v2860 = vrot.slane %v2859, 2
        %v2861 = vmax.f32 %v2859, %v2860
        %v2862 = vrot.slane %v2861, 1
        %v2863 = vmax.f32 %v2861, %v2862
        %v2864 = vsel %vm2793, %v2787, -inf
        %v2865 = vrot.slane %v2864, 4
        %v2866 = vmax.f32 %v2864, %v2865
        %v2867 = vrot.slane %v2866, 2
        %v2868 = vmax.f32 %v2866, %v2867
        %v2869 = vrot.slane %v2868, 1
        %v2870 = vmax.f32 %v2868, %v2869
        %v2871 = vsel %vm2793, %v2788, -inf
        %v2872 = vrot.slane %v2871, 4
        %v2873 = vmax.f32 %v2871, %v2872
        %v2874 = vrot.slane %v2873, 2
        %v2875 = vmax.f32 %v2873, %v2874
        %v2876 = vrot.slane %v2875, 1
        %v2877 = vmax.f32 %v2875, %v2876
        %v2878 = vsel %vm2793, %v2789, -inf
        %v2879 = vrot.slane %v2878, 4
        %v2880 = vmax.f32 %v2878, %v2879
        %v2881 = vrot.slane %v2880, 2
        %v2882 = vmax.f32 %v2880, %v2881
        %v2883 = vrot.slane %v2882, 1
        %v2884 = vmax.f32 %v2882, %v2883
        %v2885 = vsel %vm2793, %v2790, -inf
        %v2886 = vrot.slane %v2885, 4
        %v2887 = vmax.f32 %v2885, %v2886
        %v2888 = vrot.slane %v2887, 2
        %v2889 = vmax.f32 %v2887, %v2888
        %v2890 = vrot.slane %v2889, 1
        %v2891 = vmax.f32 %v2889, %v2890
        %v2892 = vsel %vm2793, %v2791, -inf
        %v2893 = vrot.slane %v2892, 4
        %v2894 = vmax.f32 %v2892, %v2893
        %v2895 = vrot.slane %v2894, 2
        %v2896 = vmax.f32 %v2894, %v2895
        %v2897 = vrot.slane %v2896, 1
        %v2898 = vmax.f32 %v2896, %v2897
        %v2899 = vsel %vm2793, %v2792, -inf
        %v2900 = vrot.slane %v2899, 4
        %v2901 = vmax.f32 %v2899, %v2900
        %v2902 = vrot.slane %v2901, 2
        %v2903 = vmax.f32 %v2901, %v2902
        %v2904 = vrot.slane %v2903, 1
        %v2905 = vmax.f32 %v2903, %v2904
        %v2906 = vsub.f32 %v2777, %v2800
        %v2907 = vsub.f32 %v2778, %v2807
        %v2908 = vsub.f32 %v2779, %v2814
        %v2909 = vsub.f32 %v2780, %v2821
        %v2910 = vsub.f32 %v2781, %v2828
        %v2911 = vsub.f32 %v2782, %v2835
        %v2912 = vsub.f32 %v2783, %v2842
        %v2913 = vsub.f32 %v2784, %v2849
        %v2914 = vsub.f32 %v2785, %v2856
        %v2915 = vsub.f32 %v2786, %v2863
        %v2916 = vsub.f32 %v2787, %v2870
        %v2917 = vsub.f32 %v2788, %v2877
        %v2918 = vsub.f32 %v2789, %v2884
        %v2919 = vsub.f32 %v2790, %v2891
        %v2920 = vsub.f32 %v2791, %v2898
        %v2921 = vsub.f32 %v2792, %v2905
        %v2922 = vmul.f32 %v2906, 1.442695
        %v2923 = vpow.pop %v2922
        %v2924 = vmul.f32 %v2907, 1.442695
        %v2925 = vpow.pop %v2924
        %v2926 = vmul.f32 %v2908, 1.442695
        %v2927 = vpow.pop %v2926
        %v2928 = vmul.f32 %v2909, 1.442695
        %v2929 = vpow.pop %v2928
        %v2930 = vmul.f32 %v2910, 1.442695
        %v2931 = vpow.pop %v2930
        %v2932 = vmul.f32 %v2911, 1.442695
        %v2933 = vpow.pop %v2932
        %v2934 = vmul.f32 %v2912, 1.442695
        %v2935 = vpow.pop %v2934
        %v2936 = vmul.f32 %v2913, 1.442695
        %v2937 = vpow.pop %v2936
        %v2938 = vmul.f32 %v2914, 1.442695
        %v2939 = vpow.pop %v2938
        %v2940 = vmul.f32 %v2915, 1.442695
        %v2941 = vpow.pop %v2940
        %v2942 = vmul.f32 %v2916, 1.442695
        %v2943 = vpow.pop %v2942
        %v2944 = vmul.f32 %v2917, 1.442695
        %v2945 = vpow.pop %v2944
        %v2946 = vmul.f32 %v2918, 1.442695
        %v2947 = vpow.pop %v2946
        %v2948 = vmul.f32 %v2919, 1.442695
        %v2949 = vpow.pop %v2948
        %v2950 = vmul.f32 %v2920, 1.442695
        %v2951 = vpow.pop %v2950
        %v2952 = vmul.f32 %v2921, 1.442695
        %v2953 = vpow.pop %v2952
        %v2954 = vsel %vm2793, %v2923, 0.0
        %v2955 = vrot.slane %v2954, 4
        %v2956 = vadd.f32 %v2954, %v2955
        %v2957 = vrot.slane %v2956, 2
        %v2958 = vadd.f32 %v2956, %v2957
        %v2959 = vrot.slane %v2958, 1
        %v2960 = vadd.f32 %v2958, %v2959
        %v2961 = vsel %vm2793, %v2925, 0.0
        %v2962 = vrot.slane %v2961, 4
        %v2963 = vadd.f32 %v2961, %v2962
        %v2964 = vrot.slane %v2963, 2
        %v2965 = vadd.f32 %v2963, %v2964
        %v2966 = vrot.slane %v2965, 1
        %v2967 = vadd.f32 %v2965, %v2966
        %v2968 = vsel %vm2793, %v2927, 0.0
        %v2969 = vrot.slane %v2968, 4
        %v2970 = vadd.f32 %v2968, %v2969
        %v2971 = vrot.slane %v2970, 2
        %v2972 = vadd.f32 %v2970, %v2971
        %v2973 = vrot.slane %v2972, 1
        %v2974 = vadd.f32 %v2972, %v2973
        %v2975 = vsel %vm2793, %v2929, 0.0
        %v2976 = vrot.slane %v2975, 4
        %v2977 = vadd.f32 %v2975, %v2976
        %v2978 = vrot.slane %v2977, 2
        %v2979 = vadd.f32 %v2977, %v2978
        %v2980 = vrot.slane %v2979, 1
        %v2981 = vadd.f32 %v2979, %v2980
        %v2982 = vsel %vm2793, %v2931, 0.0
        %v2983 = vrot.slane %v2982, 4
        %v2984 = vadd.f32 %v2982, %v2983
        %v2985 = vrot.slane %v2984, 2
        %v2986 = vadd.f32 %v2984, %v2985
        %v2987 = vrot.slane %v2986, 1
        %v2988 = vadd.f32 %v2986, %v2987
        %v2989 = vsel %vm2793, %v2933, 0.0
        %v2990 = vrot.slane %v2989, 4
        %v2991 = vadd.f32 %v2989, %v2990
        %v2992 = vrot.slane %v2991, 2
        %v2993 = vadd.f32 %v2991, %v2992
        %v2994 = vrot.slane %v2993, 1
        %v2995 = vadd.f32 %v2993, %v2994
        %v2996 = vsel %vm2793, %v2935, 0.0
        %v2997 = vrot.slane %v2996, 4
        %v2998 = vadd.f32 %v2996, %v2997
        %v2999 = vrot.slane %v2998, 2
        %v3000 = vadd.f32 %v2998, %v2999
        %v3001 = vrot.slane %v3000, 1
        %v3002 = vadd.f32 %v3000, %v3001
        %v3003 = vsel %vm2793, %v2937, 0.0
        %v3004 = vrot.slane %v3003, 4
        %v3005 = vadd.f32 %v3003, %v3004
        %v3006 = vrot.slane %v3005, 2
        %v3007 = vadd.f32 %v3005, %v3006
        %v3008 = vrot.slane %v3007, 1
        %v3009 = vadd.f32 %v3007, %v3008
        %v3010 = vsel %vm2793, %v2939, 0.0
        %v3011 = vrot.slane %v3010, 4
        %v3012 = vadd.f32 %v3010, %v3011
        %v3013 = vrot.slane %v3012, 2
        %v3014 = vadd.f32 %v3012, %v3013
        %v3015 = vrot.slane %v3014, 1
        %v3016 = vadd.f32 %v3014, %v3015
        %v3017 = vsel %vm2793, %v2941, 0.0
        %v3018 = vrot.slane %v3017, 4
        %v3019 = vadd.f32 %v3017, %v3018
        %v3020 = vrot.slane %v3019, 2
        %v3021 = vadd.f32 %v3019, %v3020
        %v3022 = vrot.slane %v3021, 1
        %v3023 = vadd.f32 %v3021, %v3022
        %v3024 = vsel %vm2793, %v2943, 0.0
        %v3025 = vrot.slane %v3024, 4
        %v3026 = vadd.f32 %v3024, %v3025
        %v3027 = vrot.slane %v3026, 2
        %v3028 = vadd.f32 %v3026, %v3027
        %v3029 = vrot.slane %v3028, 1
        %v3030 = vadd.f32 %v3028, %v3029
        %v3031 = vsel %vm2793, %v2945, 0.0
        %v3032 = vrot.slane %v3031, 4
        %v3033 = vadd.f32 %v3031, %v3032
        %v3034 = vrot.slane %v3033, 2
        %v3035 = vadd.f32 %v3033, %v3034
        %v3036 = vrot.slane %v3035, 1
        %v3037 = vadd.f32 %v3035, %v3036
        %v3038 = vsel %vm2793, %v2947, 0.0
        %v3039 = vrot.slane %v3038, 4
        %v3040 = vadd.f32 %v3038, %v3039
        %v3041 = vrot.slane %v3040, 2
        %v3042 = vadd.f32 %v3040, %v3041
        %v3043 = vrot.slane %v3042, 1
        %v3044 = vadd.f32 %v3042, %v3043
        %v3045 = vsel %vm2793, %v2949, 0.0
        %v3046 = vrot.slane %v3045, 4
        %v3047 = vadd.f32 %v3045, %v3046
        %v3048 = vrot.slane %v3047, 2
        %v3049 = vadd.f32 %v3047, %v3048
        %v3050 = vrot.slane %v3049, 1
        %v3051 = vadd.f32 %v3049, %v3050
        %v3052 = vsel %vm2793, %v2951, 0.0
        %v3053 = vrot.slane %v3052, 4
        %v3054 = vadd.f32 %v3052, %v3053
        %v3055 = vrot.slane %v3054, 2
        %v3056 = vadd.f32 %v3054, %v3055
        %v3057 = vrot.slane %v3056, 1
        %v3058 = vadd.f32 %v3056, %v3057
        %v3059 = vsel %vm2793, %v2953, 0.0
        %v3060 = vrot.slane %v3059, 4
        %v3061 = vadd.f32 %v3059, %v3060
        %v3062 = vrot.slane %v3061, 2
        %v3063 = vadd.f32 %v3061, %v3062
        %v3064 = vrot.slane %v3063, 1
        %v3065 = vadd.f32 %v3063, %v3064
        %v3066 = vrcp.pop %v2960
        %v3067 = vrcp.pop %v2967
        %v3068 = vrcp.pop %v2974
        %v3069 = vrcp.pop %v2981
        %v3070 = vrcp.pop %v2988
        %v3071 = vrcp.pop %v2995
        %v3072 = vrcp.pop %v3002
        %v3073 = vrcp.pop %v3009
        %v3074 = vrcp.pop %v3016
        %v3075 = vrcp.pop %v3023
        %v3076 = vrcp.pop %v3030
        %v3077 = vrcp.pop %v3037
        %v3078 = vrcp.pop %v3044
        %v3079 = vrcp.pop %v3051
        %v3080 = vrcp.pop %v3058
        %v3081 = vrcp.pop %v3065
        %v3082 = vmul.f32 %v2923, %v3066
        %v3083 = vmul.f32 %v2925, %v3067
        %v3084 = vmul.f32 %v2927, %v3068
        %v3085 = vmul.f32 %v2929, %v3069
        %v3086 = vmul.f32 %v2931, %v3070
        %v3087 = vmul.f32 %v2933, %v3071
        %v3088 = vmul.f32 %v2935, %v3072
        %v3089 = vmul.f32 %v2937, %v3073
        %v3090 = vmul.f32 %v2939, %v3074
        %v3091 = vmul.f32 %v2941, %v3075
        %v3092 = vmul.f32 %v2943, %v3076
        %v3093 = vmul.f32 %v2945, %v3077
        %v3094 = vmul.f32 %v2947, %v3078
        %v3095 = vmul.f32 %v2949, %v3079
        %v3096 = vmul.f32 %v2951, %v3080
        %v3097 = vmul.f32 %v2953, %v3081
        %v3098 = vld [vmem:[%s6] sm:$0xf]
        %v3100 = vsel %vm2793, %v3082, 0
        %v3103 = vsel %vm2793, %v3083, 0
        %v3106 = vsel %vm2793, %v3084, 0
        %v3109 = vsel %vm2793, %v3085, 0
        %v3112 = vsel %vm2793, %v3086, 0
        %v3115 = vsel %vm2793, %v3087, 0
        %v3118 = vsel %vm2793, %v3088, 0
        %v3121 = vsel %vm2793, %v3089, 0
        %v3124 = vsel %vm2793, %v3090, 0
        %v3127 = vsel %vm2793, %v3091, 0
        %v3130 = vsel %vm2793, %v3092, 0
        %v3133 = vsel %vm2793, %v3093, 0
        %v3136 = vsel %vm2793, %v3094, 0
        %v3139 = vsel %vm2793, %v3095, 0
        %v3142 = vsel %vm2793, %v3096, 0
        %v3145 = vsel %vm2793, %v3097, 0
        %vm3147 = vcmask 1043456
        %v3149 = vsel %vm3147, %v3098, 0
        %3151 = vmatprep.subr.mxu0 0.0
        %3152 = vmatpush1.msra.mxu0 %v3149
        %3153 = vmatprep.subr.mxu0 0.0
        %3154 = vmatpush1.msra.mxu0 0.0
        %3155 = vmatprep.subr.mxu0 0.0
        %3156 = vmatpush1.msra.mxu0 0.0
        %3157 = vmatprep.subr.mxu0 0.0
        %3158 = vmatpush1.msra.mxu0 0.0
        %3159 = vmatprep.subr.mxu0 0.0
        %3160 = vmatpush1.msra.mxu0 0.0
        %3161 = vmatprep.subr.mxu0 0.0
        %3162 = vmatpush1.msra.mxu0 0.0
        %3163 = vmatprep.subr.mxu0 0.0
        %3164 = vmatpush1.msra.mxu0 0.0
        %3165 = vmatprep.subr.mxu0 0.0
        %3166 = vmatpush1.msra.mxu0 0.0
        %3167 = vmatprep.subr.mxu0 0.0
        %3168 = vmatpush1.msra.mxu0 0.0
        %3169 = vmatprep.subr.mxu0 0.0
        %3170 = vmatpush1.msra.mxu0 0.0
        %3171 = vmatprep.subr.mxu0 0.0
        %3172 = vmatpush1.msra.mxu0 0.0
        %3173 = vmatprep.subr.mxu0 0.0
        %3174 = vmatpush1.msra.mxu0 0.0
        %3175 = vmatprep.subr.mxu0 0.0
        %3176 = vmatpush1.msra.mxu0 0.0
        %3177 = vmatprep.subr.mxu0 0.0
        %3178 = vmatpush1.msra.mxu0 0.0
        %3179 = vmatprep.subr.mxu0 0.0
        %3180 = vmatpush1.msra.mxu0 0.0
        %3181 = vmatprep.subr.mxu0 0.0
        %3182 = vmatpush1.msra.mxu0 0.0
        %3183 = vmatprep.subr.mxu0 0.0
        %3184 = vmatpush1.msra.mxu0 0.0
        %3185 = vmatprep.subr.mxu0 0.0
        %3186 = vmatpush1.msra.mxu0 0.0
        %3187 = vmatprep.subr.mxu0 0.0
        %3188 = vmatpush1.msra.mxu0 0.0
        %3189 = vmatprep.subr.mxu0 0.0
        %3190 = vmatpush1.msra.mxu0 0.0
        %3191 = vmatprep.subr.mxu0 0.0
        %3192 = vmatpush1.msra.mxu0 0.0
        %3193 = vmatprep.subr.mxu0 0.0
        %3194 = vmatpush1.msra.mxu0 0.0
        %3195 = vmatprep.subr.mxu0 0.0
        %3196 = vmatpush1.msra.mxu0 0.0
        %3197 = vmatprep.subr.mxu0 0.0
        %3198 = vmatpush1.msra.mxu0 0.0
        %3199 = vmatprep.subr.mxu0 0.0
        %3200 = vmatpush1.msra.mxu0 0.0
        %3201 = vmatprep.subr.mxu0 0.0
        %3202 = vmatpush1.msra.mxu0 0.0
        %3203 = vmatprep.subr.mxu0 0.0
        %3204 = vmatpush1.msra.mxu0 0.0
        %3205 = vmatprep.subr.mxu0 0.0
        %3206 = vmatpush1.msra.mxu0 0.0
        %3207 = vmatprep.subr.mxu0 0.0
        %3208 = vmatpush1.msra.mxu0 0.0
        %3209 = vmatprep.subr.mxu0 0.0
        %3210 = vmatpush1.msra.mxu0 0.0
        %3211 = vmatprep.subr.mxu0 0.0
        %3212 = vmatpush1.msra.mxu0 0.0
        %3213 = vmatprep.subr.mxu0 0.0
        %3214 = vmatpush1.msra.mxu0 0.0
        %3215 = vmatprep.mubr.f32.mxu0 0.0
        %3216 = vmatmul.mubr.f32.gmra.mrb[0].mxu0 %v3100
        %v3217 = vpop.f32.mrb[0].mxu0
        %v3218 = vadd.f32 0.0, %v3217
        %v3219 = vpop.f32.mrb[0].mxu0
        %3220 = vmatprep.mubr.f32.mxu0 0.0
        %3221 = vmatmul.mubr.f32.gmra.mrb[0].mxu0 %v3103
        %v3222 = vpop.f32.mrb[0].mxu0
        %v3223 = vadd.f32 0.0, %v3222
        %v3224 = vpop.f32.mrb[0].mxu0
        %3225 = vmatprep.mubr.f32.mxu0 0.0
        %3226 = vmatmul.mubr.f32.gmra.mrb[0].mxu0 %v3106
        %v3227 = vpop.f32.mrb[0].mxu0
        %v3228 = vadd.f32 0.0, %v3227
        %v3229 = vpop.f32.mrb[0].mxu0
        %3230 = vmatprep.mubr.f32.mxu0 0.0
        %3231 = vmatmul.mubr.f32.gmra.mrb[0].mxu0 %v3109
        %v3232 = vpop.f32.mrb[0].mxu0
        %v3233 = vadd.f32 0.0, %v3232
        %v3234 = vpop.f32.mrb[0].mxu0
        %3235 = vmatprep.mubr.f32.mxu0 0.0
        %3236 = vmatmul.mubr.f32.gmra.mrb[0].mxu0 %v3112
        %v3237 = vpop.f32.mrb[0].mxu0
        %v3238 = vadd.f32 0.0, %v3237
        %v3239 = vpop.f32.mrb[0].mxu0
        %3240 = vmatprep.mubr.f32.mxu0 0.0
        %3241 = vmatmul.mubr.f32.gmra.mrb[0].mxu0 %v3115
        %v3242 = vpop.f32.mrb[0].mxu0
        %v3243 = vadd.f32 0.0, %v3242
        %v3244 = vpop.f32.mrb[0].mxu0
        %3245 = vmatprep.mubr.f32.mxu0 0.0
        %3246 = vmatmul.mubr.f32.gmra.mrb[0].mxu0 %v3118
        %v3247 = vpop.f32.mrb[0].mxu0
        %v3248 = vadd.f32 0.0, %v3247
        %v3249 = vpop.f32.mrb[0].mxu0
        %3250 = vmatprep.mubr.f32.mxu0 0.0
        %3251 = vmatmul.mubr.f32.gmra.mrb[0].mxu0 %v3121
        %v3252 = vpop.f32.mrb[0].mxu0
        %v3253 = vadd.f32 0.0, %v3252
        %v3254 = vpop.f32.mrb[0].mxu0
        %3255 = vmatprep.mubr.f32.mxu0 0.0
        %3256 = vmatmul.mubr.f32.gmra.mrb[0].mxu0 %v3124
        %v3257 = vpop.f32.mrb[0].mxu0
        %v3258 = vadd.f32 0.0, %v3257
        %v3259 = vpop.f32.mrb[0].mxu0
        %3260 = vmatprep.mubr.f32.mxu0 0.0
        %3261 = vmatmul.mubr.f32.gmra.mrb[0].mxu0 %v3127
        %v3262 = vpop.f32.mrb[0].mxu0
        %v3263 = vadd.f32 0.0, %v3262
        %v3264 = vpop.f32.mrb[0].mxu0
        %3265 = vmatprep.mubr.f32.mxu0 0.0
        %3266 = vmatmul.mubr.f32.gmra.mrb[0].mxu0 %v3130
        %v3267 = vpop.f32.mrb[0].mxu0
        %v3268 = vadd.f32 0.0, %v3267
        %v3269 = vpop.f32.mrb[0].mxu0
        %3270 = vmatprep.mubr.f32.mxu0 0.0
        %3271 = vmatmul.mubr.f32.gmra.mrb[0].mxu0 %v3133
        %v3272 = vpop.f32.mrb[0].mxu0
        %v3273 = vadd.f32 0.0, %v3272
        %v3274 = vpop.f32.mrb[0].mxu0
        %3275 = vmatprep.mubr.f32.mxu0 0.0
        %3276 = vmatmul.mubr.f32.gmra.mrb[0].mxu0 %v3136
        %v3277 = vpop.f32.mrb[0].mxu0
        %v3278 = vadd.f32 0.0, %v3277
        %v3279 = vpop.f32.mrb[0].mxu0
        %3280 = vmatprep.mubr.f32.mxu0 0.0
        %3281 = vmatmul.mubr.f32.gmra.mrb[0].mxu0 %v3139
        %v3282 = vpop.f32.mrb[0].mxu0
        %v3283 = vadd.f32 0.0, %v3282
        %v3284 = vpop.f32.mrb[0].mxu0
        %3285 = vmatprep.mubr.f32.mxu0 0.0
        %3286 = vmatmul.mubr.f32.gmra.mrb[0].mxu0 %v3142
        %v3287 = vpop.f32.mrb[0].mxu0
        %v3288 = vadd.f32 0.0, %v3287
        %v3289 = vpop.f32.mrb[0].mxu0
        %3290 = vmatprep.mubr.f32.mxu0 0.0
        %3291 = vmatmul.mubr.f32.gmra.mrb[0].mxu0 %v3145
        %v3292 = vpop.f32.mrb[0].mxu0
        %v3293 = vadd.f32 0.0, %v3292
        %v3294 = vpop.f32.mrb[0].mxu0
        %3295 = vdwg.mxu0
        %v3296 = vmul.f32 %v3218, %v2404
        %v3297 = vmul.f32 %v3223, %v2405
        %v3298 = vmul.f32 %v3228, %v2406
        %v3299 = vmul.f32 %v3233, %v2407
        %v3300 = vmul.f32 %v3238, %v2408
        %v3301 = vmul.f32 %v3243, %v2409
        %v3302 = vmul.f32 %v3248, %v2410
        %v3303 = vmul.f32 %v3253, %v2411
        %v3304 = vmul.f32 %v3258, %v2412
        %v3305 = vmul.f32 %v3263, %v2413
        %v3306 = vmul.f32 %v3268, %v2414
        %v3307 = vmul.f32 %v3273, %v2415
        %v3308 = vmul.f32 %v3278, %v2416
        %v3309 = vmul.f32 %v3283, %v2417
        %v3310 = vmul.f32 %v3288, %v2418
        %v3311 = vmul.f32 %v3293, %v2419
        %v3312 = vrot.slane %v3296, 4
        %v3313 = vadd.f32 %v3296, %v3312
        %v3314 = vrot.slane %v3313, 2
        %v3315 = vadd.f32 %v3313, %v3314
        %v3316 = vrot.slane %v3315, 1
        %v3317 = vadd.f32 %v3315, %v3316
        %v3318 = vrot.slane %v3297, 4
        %v3319 = vadd.f32 %v3297, %v3318
        %v3320 = vrot.slane %v3319, 2
        %v3321 = vadd.f32 %v3319, %v3320
        %v3322 = vrot.slane %v3321, 1
        %v3323 = vadd.f32 %v3321, %v3322
        %v3324 = vrot.slane %v3298, 4
        %v3325 = vadd.f32 %v3298, %v3324
        %v3326 = vrot.slane %v3325, 2
        %v3327 = vadd.f32 %v3325, %v3326
        %v3328 = vrot.slane %v3327, 1
        %v3329 = vadd.f32 %v3327, %v3328
        %v3330 = vrot.slane %v3299, 4
        %v3331 = vadd.f32 %v3299, %v3330
        %v3332 = vrot.slane %v3331, 2
        %v3333 = vadd.f32 %v3331, %v3332
        %v3334 = vrot.slane %v3333, 1
        %v3335 = vadd.f32 %v3333, %v3334
        %v3336 = vrot.slane %v3300, 4
        %v3337 = vadd.f32 %v3300, %v3336
        %v3338 = vrot.slane %v3337, 2
        %v3339 = vadd.f32 %v3337, %v3338
        %v3340 = vrot.slane %v3339, 1
        %v3341 = vadd.f32 %v3339, %v3340
        %v3342 = vrot.slane %v3301, 4
        %v3343 = vadd.f32 %v3301, %v3342
        %v3344 = vrot.slane %v3343, 2
        %v3345 = vadd.f32 %v3343, %v3344
        %v3346 = vrot.slane %v3345, 1
        %v3347 = vadd.f32 %v3345, %v3346
        %v3348 = vrot.slane %v3302, 4
        %v3349 = vadd.f32 %v3302, %v3348
        %v3350 = vrot.slane %v3349, 2
        %v3351 = vadd.f32 %v3349, %v3350
        %v3352 = vrot.slane %v3351, 1
        %v3353 = vadd.f32 %v3351, %v3352
        %v3354 = vrot.slane %v3303, 4
        %v3355 = vadd.f32 %v3303, %v3354
        %v3356 = vrot.slane %v3355, 2
        %v3357 = vadd.f32 %v3355, %v3356
        %v3358 = vrot.slane %v3357, 1
        %v3359 = vadd.f32 %v3357, %v3358
        %v3360 = vrot.slane %v3304, 4
        %v3361 = vadd.f32 %v3304, %v3360
        %v3362 = vrot.slane %v3361, 2
        %v3363 = vadd.f32 %v3361, %v3362
        %v3364 = vrot.slane %v3363, 1
        %v3365 = vadd.f32 %v3363, %v3364
        %v3366 = vrot.slane %v3305, 4
        %v3367 = vadd.f32 %v3305, %v3366
        %v3368 = vrot.slane %v3367, 2
        %v3369 = vadd.f32 %v3367, %v3368
        %v3370 = vrot.slane %v3369, 1
        %v3371 = vadd.f32 %v3369, %v3370
        %v3372 = vrot.slane %v3306, 4
        %v3373 = vadd.f32 %v3306, %v3372
        %v3374 = vrot.slane %v3373, 2
        %v3375 = vadd.f32 %v3373, %v3374
        %v3376 = vrot.slane %v3375, 1
        %v3377 = vadd.f32 %v3375, %v3376
        %v3378 = vrot.slane %v3307, 4
        %v3379 = vadd.f32 %v3307, %v3378
        %v3380 = vrot.slane %v3379, 2
        %v3381 = vadd.f32 %v3379, %v3380
        %v3382 = vrot.slane %v3381, 1
        %v3383 = vadd.f32 %v3381, %v3382
        %v3384 = vrot.slane %v3308, 4
        %v3385 = vadd.f32 %v3308, %v3384
        %v3386 = vrot.slane %v3385, 2
        %v3387 = vadd.f32 %v3385, %v3386
        %v3388 = vrot.slane %v3387, 1
        %v3389 = vadd.f32 %v3387, %v3388
        %v3390 = vrot.slane %v3309, 4
        %v3391 = vadd.f32 %v3309, %v3390
        %v3392 = vrot.slane %v3391, 2
        %v3393 = vadd.f32 %v3391, %v3392
        %v3394 = vrot.slane %v3393, 1
        %v3395 = vadd.f32 %v3393, %v3394
        %v3396 = vrot.slane %v3310, 4
        %v3397 = vadd.f32 %v3310, %v3396
        %v3398 = vrot.slane %v3397, 2
        %v3399 = vadd.f32 %v3397, %v3398
        %v3400 = vrot.slane %v3399, 1
        %v3401 = vadd.f32 %v3399, %v3400
        %v3402 = vrot.slane %v3311, 4
        %v3403 = vadd.f32 %v3311, %v3402
        %v3404 = vrot.slane %v3403, 2
        %v3405 = vadd.f32 %v3403, %v3404
        %v3406 = vrot.slane %v3405, 1
        %v3407 = vadd.f32 %v3405, %v3406
        %vm3424 = vcmask 1041409
        %v3425 = vsel %vm3424, %v3323, %v3317
        %vm3426 = vcmask 1042434
        %v3427 = vsel %vm3426, %v3329, %v3425
        %vm3428 = vcmask 1043459
        %v3429 = vsel %vm3428, %v3335, %v3427
        %vm3430 = vcmask 1044484
        %v3431 = vsel %vm3430, %v3341, %v3429
        %vm3432 = vcmask 1045509
        %v3433 = vsel %vm3432, %v3347, %v3431
        %vm3434 = vcmask 1046534
        %v3435 = vsel %vm3434, %v3353, %v3433
        %vm3436 = vcmask 1047559
        %v3437 = vsel %vm3436, %v3359, %v3435
        %v3438 = vsel %vm3424, %v3371, %v3365
        %v3439 = vsel %vm3426, %v3377, %v3438
        %v3440 = vsel %vm3428, %v3383, %v3439
        %v3441 = vsel %vm3430, %v3389, %v3440
        %v3442 = vsel %vm3432, %v3395, %v3441
        %v3443 = vsel %vm3434, %v3401, %v3442
        %v3444 = vsel %vm3436, %v3407, %v3443
        %v3447 = vadd.f32 %v1189, %v3437
        %v3448 = vadd.f32 %v1190, %v3444
        %v3449 = vld [vmem:[%s1169] sm:$0x1]
        %v3450 = vld [vmem:[%s1172] sm:$0x1]
        %3451 = vadd.xlane.f32.xlu0 %v3447
        %v3452 = vpop.xlane.xlu0 %3451
        %3453 = vadd.xlane.f32.xlu0 %v3448
        %v3454 = vpop.xlane.xlu0 %3453
        %v3455 = vrcp.pop 128.0
        %v3456 = vmul.f32 %v3452, %v3455
        %v3457 = vmul.f32 %v3454, %v3455
        %v3458 = vsub.f32 %v3447, %v3456
        %v3459 = vsub.f32 %v3448, %v3457
        %v3460 = vmul.f32 %v3458, %v3458
        %v3461 = vmul.f32 %v3459, %v3459
        %3462 = vadd.xlane.f32.xlu0 %v3460
        %v3463 = vpop.xlane.xlu0 %3462
        %3464 = vadd.xlane.f32.xlu0 %v3461
        %v3465 = vpop.xlane.xlu0 %3464
        %v3466 = vmul.f32 %v3463, %v3455
        %v3467 = vmul.f32 %v3465, %v3455
        %v3468 = vadd.f32 %v3466, 1e-05
        %v3469 = vadd.f32 %v3467, 1e-05
        %v3470 = vrsqrt.pop %v3468
        %v3471 = vrsqrt.pop %v3469
        %v3472 = vmul.f32 %v3458, %v3470
        %v3473 = vmul.f32 %v3459, %v3471
        %v3475 = vlaneseq
        %v3476 = vshrl.u32 %v3475, 7
        %v3477 = vsub.s32 0, %v3476
        %v3478 = vrot.slane %v3449, %v3477
        %v3480 = vmul.f32 %v3472, %v3478
        %v3481 = vmul.f32 %v3473, %v3478
        %v3483 = vlaneseq
        %v3484 = vshrl.u32 %v3483, 7
        %v3485 = vsub.s32 0, %v3484
        %v3486 = vrot.slane %v3450, %v3485
        %v3488 = vadd.f32 %v3480, %v3486
        %v3489 = vadd.f32 %v3481, %v3486
        %v3490 = vpack.c.bf16 %v3489, %v3488
        %v3491 = vld [vmem:[%s986] sm:$0xff]
        %v3492 = vld [vmem:[%s986 + $0x8] sm:$0xff]
        %v3493 = vld [vmem:[%s986 + $0x10] sm:$0xff]
        %v3494 = vld [vmem:[%s986 + $0x18] sm:$0xff]
        %v3495 = vld [vmem:[%s986 + $0x20] sm:$0xff]
        %v3496 = vld [vmem:[%s986 + $0x28] sm:$0xff]
        %v3497 = vld [vmem:[%s986 + $0x30] sm:$0xff]
        %v3498 = vld [vmem:[%s986 + $0x38] sm:$0xff]
        %v3499 = vld [vmem:[%s986 + $0x40] sm:$0xff]
        %v3500 = vld [vmem:[%s986 + $0x48] sm:$0xff]
        %v3501 = vld [vmem:[%s986 + $0x50] sm:$0xff]
        %v3502 = vld [vmem:[%s986 + $0x58] sm:$0xff]
        %v3503 = vld [vmem:[%s986 + $0x60] sm:$0xff]
        %v3504 = vld [vmem:[%s986 + $0x68] sm:$0xff]
        %v3505 = vld [vmem:[%s986 + $0x70] sm:$0xff]
        %v3506 = vld [vmem:[%s986 + $0x78] sm:$0xff]
        %v3507 = vld [vmem:[%s1163] sm:$0x3]
        %v3509 = vlaneseq
        %v3510 = vshrl.u32 %v3509, 7
        %v3511 = vsub.s32 0, %v3510
        %v3512 = vrot.slane %v3507, %v3511
        %v3513 = vlaneseq
        %v3514 = vshrl.u32 %v3513, 7
        %v3515 = vsub.s32 1, %v3514
        %v3516 = vrot.slane %v3507, %v3515
        %v3535 = vunpack.c.l.b16 %v3491
        %v3536 = vunpack.c.h.b16 %v3491
        %v3537 = vunpack.c.l.b16 %v3492
        %v3538 = vunpack.c.h.b16 %v3492
        %v3539 = vunpack.c.l.b16 %v3493
        %v3540 = vunpack.c.h.b16 %v3493
        %v3541 = vunpack.c.l.b16 %v3494
        %v3542 = vunpack.c.h.b16 %v3494
        %v3543 = vunpack.c.l.b16 %v3495
        %v3544 = vunpack.c.h.b16 %v3495
        %v3545 = vunpack.c.l.b16 %v3496
        %v3546 = vunpack.c.h.b16 %v3496
        %v3547 = vunpack.c.l.b16 %v3497
        %v3548 = vunpack.c.h.b16 %v3497
        %v3549 = vunpack.c.l.b16 %v3498
        %v3550 = vunpack.c.h.b16 %v3498
        %v3551 = vunpack.c.l.b16 %v3499
        %v3552 = vunpack.c.h.b16 %v3499
        %v3553 = vunpack.c.l.b16 %v3500
        %v3554 = vunpack.c.h.b16 %v3500
        %v3555 = vunpack.c.l.b16 %v3501
        %v3556 = vunpack.c.h.b16 %v3501
        %v3557 = vunpack.c.l.b16 %v3502
        %v3558 = vunpack.c.h.b16 %v3502
        %v3559 = vunpack.c.l.b16 %v3503
        %v3560 = vunpack.c.h.b16 %v3503
        %v3561 = vunpack.c.l.b16 %v3504
        %v3562 = vunpack.c.h.b16 %v3504
        %v3563 = vunpack.c.l.b16 %v3505
        %v3564 = vunpack.c.h.b16 %v3505
        %v3565 = vunpack.c.l.b16 %v3506
        %v3566 = vunpack.c.h.b16 %v3506
        %v3567 = vpack.c.b16 %v3537, %v3535
        %v3568 = vpack.c.b16 %v3538, %v3536
        %v3569 = vpack.c.b16 %v3541, %v3539
        %v3570 = vpack.c.b16 %v3542, %v3540
        %v3571 = vpack.c.b16 %v3545, %v3543
        %v3572 = vpack.c.b16 %v3546, %v3544
        %v3573 = vpack.c.b16 %v3549, %v3547
        %v3574 = vpack.c.b16 %v3550, %v3548
        %v3575 = vpack.c.b16 %v3553, %v3551
        %v3576 = vpack.c.b16 %v3554, %v3552
        %v3577 = vpack.c.b16 %v3557, %v3555
        %v3578 = vpack.c.b16 %v3558, %v3556
        %v3579 = vpack.c.b16 %v3561, %v3559
        %v3580 = vpack.c.b16 %v3562, %v3560
        %v3581 = vpack.c.b16 %v3565, %v3563
        %v3582 = vpack.c.b16 %v3566, %v3564
        %3599 = vmatprep.subr.bf16.mxu0 %v3568
        %3600 = vmatpush1.bf16.msra.mxu0 %v3567
        %3601 = vmatprep.subr.bf16.mxu0 %v3570
        %3602 = vmatpush1.bf16.msra.mxu0 %v3569
        %3603 = vmatprep.subr.bf16.mxu0 %v3572
        %3604 = vmatpush1.bf16.msra.mxu0 %v3571
        %3605 = vmatprep.subr.bf16.mxu0 %v3574
        %3606 = vmatpush1.bf16.msra.mxu0 %v3573
        %3607 = vmatprep.subr.bf16.mxu0 %v3576
        %3608 = vmatpush1.bf16.msra.mxu0 %v3575
        %3609 = vmatprep.subr.bf16.mxu0 %v3578
        %3610 = vmatpush1.bf16.msra.mxu0 %v3577
        %3611 = vmatprep.subr.bf16.mxu0 %v3580
        %3612 = vmatpush1.bf16.msra.mxu0 %v3579
        %3613 = vmatprep.subr.bf16.mxu0 %v3582
        %3614 = vmatpush1.bf16.msra.mxu0 %v3581
        %3615 = vmatprep.subr.bf16.mxu0 0
        %3616 = vmatpush1.bf16.msra.mxu0 0
        %3617 = vmatprep.subr.bf16.mxu0 0
        %3618 = vmatpush1.bf16.msra.mxu0 0
        %3619 = vmatprep.subr.bf16.mxu0 0
        %3620 = vmatpush1.bf16.msra.mxu0 0
        %3621 = vmatprep.subr.bf16.mxu0 0
        %3622 = vmatpush1.bf16.msra.mxu0 0
        %3623 = vmatprep.subr.bf16.mxu0 0
        %3624 = vmatpush1.bf16.msra.mxu0 0
        %3625 = vmatprep.subr.bf16.mxu0 0
        %3626 = vmatpush1.bf16.msra.mxu0 0
        %3627 = vmatprep.subr.bf16.mxu0 0
        %3628 = vmatpush1.bf16.msra.mxu0 0
        %3629 = vmatprep.subr.bf16.mxu0 0
        %3630 = vmatpush1.bf16.msra.mxu0 0
        %3631 = vmatprep.mubr.bf16.mxu0 0
        %3632 = vmatmul.mubr.bf16.gmra.mrb[0].mxu0 %v3490
        %v3633 = vpop.f32.mrb[0].mxu0
        %v3634 = vadd.f32 %v3512, %v3633
        %v3635 = vpop.f32.mrb[0].mxu0
        %v3636 = vadd.f32 %v3516, %v3635
        %v3637 = vpop.f32.mrb[0].mxu0
        %v3638 = vadd.f32 %v3512, %v3637
        %v3639 = vpop.f32.mrb[0].mxu0
        %v3640 = vadd.f32 %v3516, %v3639
        %3641 = vdwg.mxu0
        %v3642 = vmax.f32 %v3634, 0.0
        %v3643 = vmax.f32 %v3636, 0.0
        %v3644 = vmax.f32 %v3638, 0.0
        %v3645 = vmax.f32 %v3640, 0.0
        %v3646 = vpack.c.bf16 %v3644, %v3642
        %v3647 = vpack.c.bf16 %v3645, %v3643
        %v3648 = vld [vmem:[%s995] sm:$0xf]
        %v3649 = vld [vmem:[%s995 + $0x4] sm:$0xf]
        %v3650 = vld [vmem:[%s995 + $0x8] sm:$0xf]
        %v3651 = vld [vmem:[%s995 + $0xc] sm:$0xf]
        %v3652 = vld [vmem:[%s995 + $0x10] sm:$0xf]
        %v3653 = vld [vmem:[%s995 + $0x14] sm:$0xf]
        %v3654 = vld [vmem:[%s995 + $0x18] sm:$0xf]
        %v3655 = vld [vmem:[%s995 + $0x1c] sm:$0xf]
        %v3656 = vld [vmem:[%s995 + $0x20] sm:$0xf]
        %v3657 = vld [vmem:[%s995 + $0x24] sm:$0xf]
        %v3658 = vld [vmem:[%s995 + $0x28] sm:$0xf]
        %v3659 = vld [vmem:[%s995 + $0x2c] sm:$0xf]
        %v3660 = vld [vmem:[%s995 + $0x30] sm:$0xf]
        %v3661 = vld [vmem:[%s995 + $0x34] sm:$0xf]
        %v3662 = vld [vmem:[%s995 + $0x38] sm:$0xf]
        %v3663 = vld [vmem:[%s995 + $0x3c] sm:$0xf]
        %v3664 = vld [vmem:[%s995 + $0x40] sm:$0xf]
        %v3665 = vld [vmem:[%s995 + $0x44] sm:$0xf]
        %v3666 = vld [vmem:[%s995 + $0x48] sm:$0xf]
        %v3667 = vld [vmem:[%s995 + $0x4c] sm:$0xf]
        %v3668 = vld [vmem:[%s995 + $0x50] sm:$0xf]
        %v3669 = vld [vmem:[%s995 + $0x54] sm:$0xf]
        %v3670 = vld [vmem:[%s995 + $0x58] sm:$0xf]
        %v3671 = vld [vmem:[%s995 + $0x5c] sm:$0xf]
        %v3672 = vld [vmem:[%s995 + $0x60] sm:$0xf]
        %v3673 = vld [vmem:[%s995 + $0x64] sm:$0xf]
        %v3674 = vld [vmem:[%s995 + $0x68] sm:$0xf]
        %v3675 = vld [vmem:[%s995 + $0x6c] sm:$0xf]
        %v3676 = vld [vmem:[%s995 + $0x70] sm:$0xf]
        %v3677 = vld [vmem:[%s995 + $0x74] sm:$0xf]
        %v3678 = vld [vmem:[%s995 + $0x78] sm:$0xf]
        %v3679 = vld [vmem:[%s995 + $0x7c] sm:$0xf]
        %v3680 = vld [vmem:[%s1166] sm:$0x1]
        %v3682 = vlaneseq
        %v3683 = vshrl.u32 %v3682, 7
        %v3684 = vsub.s32 0, %v3683
        %v3685 = vrot.slane %v3680, %v3684
        %v3719 = vunpack.c.l.b16 %v3648
        %v3720 = vunpack.c.l.b16 %v3649
        %v3721 = vunpack.c.l.b16 %v3650
        %v3722 = vunpack.c.l.b16 %v3651
        %v3723 = vunpack.c.l.b16 %v3652
        %v3724 = vunpack.c.l.b16 %v3653
        %v3725 = vunpack.c.l.b16 %v3654
        %v3726 = vunpack.c.l.b16 %v3655
        %v3727 = vunpack.c.l.b16 %v3656
        %v3728 = vunpack.c.l.b16 %v3657
        %v3729 = vunpack.c.l.b16 %v3658
        %v3730 = vunpack.c.l.b16 %v3659
        %v3731 = vunpack.c.l.b16 %v3660
        %v3732 = vunpack.c.l.b16 %v3661
        %v3733 = vunpack.c.l.b16 %v3662
        %v3734 = vunpack.c.l.b16 %v3663
        %v3735 = vunpack.c.l.b16 %v3664
        %v3736 = vunpack.c.l.b16 %v3665
        %v3737 = vunpack.c.l.b16 %v3666
        %v3738 = vunpack.c.l.b16 %v3667
        %v3739 = vunpack.c.l.b16 %v3668
        %v3740 = vunpack.c.l.b16 %v3669
        %v3741 = vunpack.c.l.b16 %v3670
        %v3742 = vunpack.c.l.b16 %v3671
        %v3743 = vunpack.c.l.b16 %v3672
        %v3744 = vunpack.c.l.b16 %v3673
        %v3745 = vunpack.c.l.b16 %v3674
        %v3746 = vunpack.c.l.b16 %v3675
        %v3747 = vunpack.c.l.b16 %v3676
        %v3748 = vunpack.c.l.b16 %v3677
        %v3749 = vunpack.c.l.b16 %v3678
        %v3750 = vunpack.c.l.b16 %v3679
        %v3751 = vpack.c.b16 %v3720, %v3719
        %v3752 = vpack.c.b16 %v3722, %v3721
        %v3753 = vpack.c.b16 %v3724, %v3723
        %v3754 = vpack.c.b16 %v3726, %v3725
        %v3755 = vpack.c.b16 %v3728, %v3727
        %v3756 = vpack.c.b16 %v3730, %v3729
        %v3757 = vpack.c.b16 %v3732, %v3731
        %v3758 = vpack.c.b16 %v3734, %v3733
        %v3759 = vpack.c.b16 %v3736, %v3735
        %v3760 = vpack.c.b16 %v3738, %v3737
        %v3761 = vpack.c.b16 %v3740, %v3739
        %v3762 = vpack.c.b16 %v3742, %v3741
        %v3763 = vpack.c.b16 %v3744, %v3743
        %v3764 = vpack.c.b16 %v3746, %v3745
        %v3765 = vpack.c.b16 %v3748, %v3747
        %v3766 = vpack.c.b16 %v3750, %v3749
        %3783 = vmatprep.subr.bf16.mxu0 0
        %3784 = vmatpush1.bf16.msra.mxu0 %v3751
        %3785 = vmatprep.subr.bf16.mxu0 0
        %3786 = vmatpush1.bf16.msra.mxu0 %v3752
        %3787 = vmatprep.subr.bf16.mxu0 0
        %3788 = vmatpush1.bf16.msra.mxu0 %v3753
        %3789 = vmatprep.subr.bf16.mxu0 0
        %3790 = vmatpush1.bf16.msra.mxu0 %v3754
        %3791 = vmatprep.subr.bf16.mxu0 0
        %3792 = vmatpush1.bf16.msra.mxu0 %v3755
        %3793 = vmatprep.subr.bf16.mxu0 0
        %3794 = vmatpush1.bf16.msra.mxu0 %v3756
        %3795 = vmatprep.subr.bf16.mxu0 0
        %3796 = vmatpush1.bf16.msra.mxu0 %v3757
        %3797 = vmatprep.subr.bf16.mxu0 0
        %3798 = vmatpush1.bf16.msra.mxu0 %v3758
        %3799 = vmatprep.subr.bf16.mxu0 0
        %3800 = vmatpush1.bf16.msra.mxu0 %v3759
        %3801 = vmatprep.subr.bf16.mxu0 0
        %3802 = vmatpush1.bf16.msra.mxu0 %v3760
        %3803 = vmatprep.subr.bf16.mxu0 0
        %3804 = vmatpush1.bf16.msra.mxu0 %v3761
        %3805 = vmatprep.subr.bf16.mxu0 0
        %3806 = vmatpush1.bf16.msra.mxu0 %v3762
        %3807 = vmatprep.subr.bf16.mxu0 0
        %3808 = vmatpush1.bf16.msra.mxu0 %v3763
        %3809 = vmatprep.subr.bf16.mxu0 0
        %3810 = vmatpush1.bf16.msra.mxu0 %v3764
        %3811 = vmatprep.subr.bf16.mxu0 0
        %3812 = vmatpush1.bf16.msra.mxu0 %v3765
        %3813 = vmatprep.subr.bf16.mxu0 0
        %3814 = vmatpush1.bf16.msra.mxu0 %v3766
        %3815 = vmatprep.mubr.bf16.mxu0 %v3647
        %3816 = vmatmul.mubr.bf16.gmra.mrb[0].mxu0 %v3646
        %v3817 = vpop.f32.mrb[0].mxu0
        %v3818 = vadd.f32 %v3685, %v3817
        %v3819 = vpop.f32.mrb[0].mxu0
        %v3820 = vpop.f32.mrb[0].mxu0
        %v3821 = vadd.f32 %v3685, %v3820
        %v3822 = vpop.f32.mrb[0].mxu0
        %3823 = vdwg.mxu0
        %v3824 = vadd.f32 %v3488, %v3818
        %v3825 = vadd.f32 %v3489, %v3821
        %v3826 = vld [vmem:[%s1175] sm:$0x1]
        %v3827 = vld [vmem:[%s1178] sm:$0x1]
        %3828 = vadd.xlane.f32.xlu0 %v3824
        %v3829 = vpop.xlane.xlu0 %3828
        %3830 = vadd.xlane.f32.xlu0 %v3825
        %v3831 = vpop.xlane.xlu0 %3830
        %v3832 = vmul.f32 %v3829, %v3455
        %v3833 = vmul.f32 %v3831, %v3455
        %v3834 = vsub.f32 %v3824, %v3832
        %v3835 = vsub.f32 %v3825, %v3833
        %v3836 = vmul.f32 %v3834, %v3834
        %v3837 = vmul.f32 %v3835, %v3835
        %3838 = vadd.xlane.f32.xlu0 %v3836
        %v3839 = vpop.xlane.xlu0 %3838
        %3840 = vadd.xlane.f32.xlu0 %v3837
        %v3841 = vpop.xlane.xlu0 %3840
        %v3842 = vmul.f32 %v3839, %v3455
        %v3843 = vmul.f32 %v3841, %v3455
        %v3844 = vadd.f32 %v3842, 1e-05
        %v3845 = vadd.f32 %v3843, 1e-05
        %v3846 = vrsqrt.pop %v3844
        %v3847 = vrsqrt.pop %v3845
        %v3848 = vmul.f32 %v3834, %v3846
        %v3849 = vmul.f32 %v3835, %v3847
        %v3851 = vlaneseq
        %v3852 = vshrl.u32 %v3851, 7
        %v3853 = vsub.s32 0, %v3852
        %v3854 = vrot.slane %v3826, %v3853
        %v3856 = vmul.f32 %v3848, %v3854
        %v3857 = vmul.f32 %v3849, %v3854
        %v3859 = vlaneseq
        %v3860 = vshrl.u32 %v3859, 7
        %v3861 = vsub.s32 0, %v3860
        %v3862 = vrot.slane %v3827, %v3861
        %v3864 = vadd.f32 %v3856, %v3862
        %v3865 = vadd.f32 %v3857, %v3862
        %3866 = vst [vmem:[#allocation2] sm:$0xff] %v3864
        %3867 = vst [vmem:[#allocation2 + $0x8] sm:$0xff] %v3865
        %p3868 = scmp.eq.s32.totalorder %s42, 1
        // Predicated region
        $region149: #{tpu_custom_call.1} parent=111 // pred_check
          %p3869 = pneg %p3868
        $region150: #{tpu_custom_call.1} parent=111 // pred_check_branch
          %3871 = sbr.rel (%p3869) target = $region152
        $region151: #{tpu_custom_call.1} parent=111 // pred_region
          %3872 = vst [vmem:[#allocation14] sm:$0xff] %v3864
          %3873 = vst [vmem:[#allocation14 + $0x8] sm:$0xff] %v3865
        $region152: #{tpu_custom_call.1} parent=111 // pred_fallthru
          _
        // Predicated region
        $region153: #{tpu_custom_call.1} parent=111 // pred_check
          %p3874 = pneg %p655
        $region154: #{tpu_custom_call.1} parent=111 // pred_check_branch
          %3876 = sbr.rel (%p3874) target = $region156
        $region155: #{tpu_custom_call.1} parent=111 // pred_region
          %s3877 = smul.u32 2, %s41
          %s3879 = ssub.s32 256, 256
          %3880 = vsyncadd [#allocation5], %s3879
          %s3881 = smul.addr %s3877, 128
          %s3882 = scalar_lea.hbm %s23, %s3881
          %s3883 = sshll.u32 [#allocation14], 4
          %s3884 = int_to_ptr.vmem [resolvable:$true] %s3883
          %3889 = dma.vmem_to_hbm [thread:$0]  %s3884, 256, %s3882, [#allocation5], 128, 128, 8
        $region156: #{tpu_custom_call.1} parent=111 // pred_fallthru
          _
        // Predicated region
        $region157: #{tpu_custom_call.1} parent=111 // pred_check
          %p3890 = pneg %p655
        $region158: #{tpu_custom_call.1} parent=111 // pred_check_branch
          %3892 = sbr.rel (%p3890) target = $region160
        $region159: #{tpu_custom_call.1} parent=111 // pred_region
          %3893 = dma.done [#allocation5], 256
        $region160: #{tpu_custom_call.1} parent=111 // pred_fallthru
          _
      $region112: #{tpu_custom_call.1} parent=5 // pred_fallthru
        _
      %p3894 = scmp.le.s32.totalorder 2, %s32
      // Predicated region
      $region161: #{tpu_custom_call.1} parent=5 // pred_check
        %p3895 = pneg %p3894
      $region162: #{tpu_custom_call.1} parent=5 // pred_check_branch
        %3897 = sbr.rel (%p3895) target = $region164
      $region163: #{tpu_custom_call.1} parent=5 // pred_region
        %s3898 = ssub.s32 %s32, 2
      $region164: #{tpu_custom_call.1} parent=5 // pred_fallthru
        _
    $region6: #{tpu_custom_call.1} parent=1 // loop_footer
      %s36 = sadd.s32 1, %s32
    $region7: #{tpu_custom_call.1} parent=1 // loop_footer_branch
      %31 = sbr.rel target = $region3
    $region8: #{tpu_custom_call.1} parent=1 // loop_exit
      _
    %3899 = vsyncpa [#allocation4], 1
    %s3900 = scalar_lea.sflag [#allocation4], 1
    %3901 = vsyncpa %s3900, 1
    %3902 = vsyncpa [#allocation7], 1
    %3903 = vsyncpa [#allocation5], 1
    %s3904 = scalar_lea.sflag [#allocation5], 1
    %3905 = vsyncpa %s3904, 1

</llo_original>
